<compile_context>
chip_gen: v7x
topology: tpu7x:2x2x1
jax: 0.10.0
libtpu: 0.0.40
codegen_flags: <defaults>
</compile_context>

<pallas_src>
import functools

import jax
import jax.numpy as jnp
from jax.experimental import pallas as pl
from jax.experimental.pallas import tpu as pltpu


# ----------------------------------------------------------------------------
# The fused FCB kernel (one grid step == one batch element)
# ----------------------------------------------------------------------------
def _fcb_kernel(x_ref, fq_ref,
                ln1_ref, wkv_ref, bkv_ref, wq_ref, bq_ref, wo1_ref, bo1_ref,
                ln2_ref, wqkv_ref, bqkv_ref, t_ref, wo2_ref, bo2_ref,
                ln3_ref, w1_ref, b1_ref, w2_ref, b2_ref,
                o_ref, *, pp, eps):
    qs = o_ref.shape[-1]

    def biasfree_ln(x, w_row):
        # BiasFree LayerNorm (Restormer): variance about the mean, no mean
        # subtraction in the output, per-channel scale, no bias.
        mu = jnp.mean(x, axis=-1, keepdims=True)
        var = jnp.mean(jnp.square(x - mu), axis=-1, keepdims=True)
        return x * jax.lax.rsqrt(var + eps) * w_row

    def softmax(s):
        s = s - jnp.max(s, axis=-1, keepdims=True)
        p = jnp.exp(s)
        return p * pl.reciprocal(jnp.sum(p, axis=-1, keepdims=True), approx=True)

    # ---- CTCA key/value path: BiasFree-LN1 (per pixel) -> avg pool -> 1x1 ---
    # x_ref[0] is (pp, N, Cin): axis 0 enumerates the pooling-window offsets,
    # so pooling is just an accumulation over pp slices (LN applied per pixel
    # first; the 1x1 conv commutes with the pooling so it runs on the pooled
    # tensor — a pp-times smaller matmul).
    ln1_w = ln1_ref[...].astype(jnp.float32)
    x_pool = biasfree_ln(x_ref[0, 0].astype(jnp.float32), ln1_w)
    for p in range(1, pp):
        x_pool = x_pool + biasfree_ln(x_ref[0, p].astype(jnp.float32), ln1_w)
    x_pool = x_pool * (1.0 / pp)

    kv = jnp.dot(x_pool.astype(jnp.bfloat16), wkv_ref[...],
                 preferred_element_type=jnp.float32)
    kv = kv + bkv_ref[...].astype(jnp.float32)
    k = kv[:, :qs].astype(jnp.bfloat16)                       # (Nk, QS)
    v = kv[:, qs:].astype(jnp.bfloat16)                       # (Nk, QS)

    # ---- CTCA query path (1/sqrt(d) folded into wq/bq) + cross attention ----
    fq = fq_ref[0]                                            # (N, QS) f32
    q = jnp.dot(fq.astype(jnp.bfloat16), wq_ref[...],
                preferred_element_type=jnp.float32)
    q = q + bq_ref[...].astype(jnp.float32)

    # s[n, m] = sum_d q[n, d] * k[m, d]   (trans-B matmul)
    s = jax.lax.dot_general(q.astype(jnp.bfloat16), k, (((1,), (1,)), ((), ())),
                            preferred_element_type=jnp.float32)
    att = jnp.dot(softmax(s).astype(jnp.bfloat16), v,
                  preferred_element_type=jnp.float32)

    # fq1 = att @ wo1 + bo1 + feat_q   (residual fused)
    fq1 = jnp.dot(att.astype(jnp.bfloat16), wo1_ref[...],
                  preferred_element_type=jnp.float32)
    fq1 = fq1 + bo1_ref[...].astype(jnp.float32) + fq

    # ---- Attention1x1: Restormer-style single-head channel attention --------
    # TODO(synk): Attention1x1 source unavailable; L2-normalized q/k over
    # tokens, learnable temperature.
    qkv = jnp.dot(biasfree_ln(fq1, ln2_ref[...].astype(jnp.float32)
                              ).astype(jnp.bfloat16),
                  wqkv_ref[...], preferred_element_type=jnp.float32)
    qkv = qkv + bqkv_ref[...].astype(jnp.float32)
    q2 = qkv[:, :qs]
    k2 = qkv[:, qs:2 * qs]
    v2 = qkv[:, 2 * qs:]

    # L2-normalize over tokens (== F.normalize(dim=-1) on (B, C, N) layout).
    q2 = q2 * jax.lax.rsqrt(jnp.sum(q2 * q2, axis=0, keepdims=True) + 1e-12)
    k2 = k2 * jax.lax.rsqrt(jnp.sum(k2 * k2, axis=0, keepdims=True) + 1e-12)

    # attn[c, d] = sum_n q2[n, c] * k2[n, d]
    s2 = jax.lax.dot_general(q2.astype(jnp.bfloat16), k2.astype(jnp.bfloat16),
                             (((0,), (0,)), ((), ())),
                             preferred_element_type=jnp.float32)
    p2 = softmax(s2 * t_ref[0])
    # out[n, c] = sum_d attn[c, d] * v2[n, d]
    co = jax.lax.dot_general(v2.astype(jnp.bfloat16), p2.astype(jnp.bfloat16),
                             (((1,), (1,)), ((), ())),
                             preferred_element_type=jnp.float32)

    # fq2 = co @ wo2 + bo2 + fq1
    fq2 = jnp.dot(co.astype(jnp.bfloat16), wo2_ref[...],
                  preferred_element_type=jnp.float32)
    fq2 = fq2 + bo2_ref[...].astype(jnp.float32) + fq1

    # ---- FFN: LN3 -> 1x1 -> ReLU -> 1x1, residual fused ----------------------
    h = jnp.dot(biasfree_ln(fq2, ln3_ref[...].astype(jnp.float32)
                            ).astype(jnp.bfloat16),
                w1_ref[...], preferred_element_type=jnp.float32)
    h = jnp.maximum(h + b1_ref[...].astype(jnp.float32), 0.0)
    fq3 = jnp.dot(h.astype(jnp.bfloat16), w2_ref[...],
                  preferred_element_type=jnp.float32)
    fq3 = fq3 + b2_ref[...].astype(jnp.float32) + fq2

    o_ref[0] = fq3.astype(o_ref.dtype)


# ----------------------------------------------------------------------------
# FCB forward (NCHW in/out at the boundary, token-major inside the kernel)
# ----------------------------------------------------------------------------
def fcb_forward(params, x_nchw, feat_q_nchw, hw):
    B, Cin, H, W = x_nchw.shape
    _, QS, qh, qw = feat_q_nchw.shape
    assert qh == hw and qw == hw
    assert H % hw == 0 and W % hw == 0
    ph, pw = H // hw, W // hw
    PP = ph * pw
    N = hw * hw
    p = params

    # Boundary rearrangements only.
    #   x: NCHW -> (B, ph*pw, hw*hw, Cin); axis 1 enumerates pooling offsets so
    #   the 2x2 average pooling is a simple in-kernel accumulation.
    x_nhwc = jnp.transpose(x_nchw, (0, 2, 3, 1))
    x_r = (x_nhwc.reshape(B, hw, ph, hw, pw, Cin)
           .transpose(0, 2, 4, 1, 3, 5)
           .reshape(B, PP, N, Cin))
    fq = jnp.transpose(feat_q_nchw, (0, 2, 3, 1)).reshape(B, N, QS)

    def full(shape):
        return pl.BlockSpec(shape, lambda b: (0,) * len(shape))

    in_specs = [
        pl.BlockSpec((1, PP, N, Cin), lambda b: (b, 0, 0, 0)),     # x
        pl.BlockSpec((1, N, QS), lambda b: (b, 0, 0)),             # feat_q
        full((1, Cin)),                                            # ln1_w
        full((Cin, 2 * QS)), full((1, 2 * QS)),                    # wkv, bkv
        full((QS, QS)), full((1, QS)),                             # wq, bq
        full((QS, QS)), full((1, QS)),                             # wo1, bo1
        full((1, QS)),                                             # ln2_w
        full((QS, 3 * QS)), full((1, 3 * QS)),                     # wqkv, bqkv
        pl.BlockSpec(memory_space=pltpu.MemorySpace.SMEM),         # temperature
        full((QS, QS)), full((1, QS)),                             # wo2, bo2
        full((1, QS)),                                             # ln3_w
        full((QS, QS)), full((1, QS)),                             # w1, b1
        full((QS, QS)), full((1, QS)),                             # w2, b2
    ]

    kern = functools.partial(_fcb_kernel, pp=PP, eps=1e-5)
    out = pl.pallas_call(
        kern,
        out_shape=jax.ShapeDtypeStruct((B, N, QS), jnp.float32),
        grid=(B,),
        in_specs=in_specs,
        out_specs=pl.BlockSpec((1, N, QS), lambda b: (b, 0, 0)),
        compiler_params=pltpu.CompilerParams(
            dimension_semantics=("parallel",)),
    )(
        x_r, fq,
        p["ln1_w"].reshape(1, Cin),
        p["ctca"]["wkv"], p["ctca"]["bkv"].reshape(1, 2 * QS),
        p["ctca"]["wq"], p["ctca"]["bq"].reshape(1, QS),
        p["ctca"]["wo"], p["ctca"]["bo"].reshape(1, QS),
        p["ln2_w"].reshape(1, QS),
        p["att"]["wqkv"], p["att"]["bqkv"].reshape(1, 3 * QS),
        p["att"]["t"],
        p["att"]["wo"], p["att"]["bo"].reshape(1, QS),
        p["ln3_w"].reshape(1, QS),
        p["ffn"]["w1"], p["ffn"]["b1"].reshape(1, QS),
        p["ffn"]["w2"], p["ffn"]["b2"].reshape(1, QS),
    )

    return jnp.transpose(out.reshape(B, hw, hw, QS), (0, 3, 1, 2))


# ----------------------------------------------------------------------------
# Parameters (synthetic, deterministic)
# ----------------------------------------------------------------------------
class ParamGen:
    def __init__(self, key):
        self.key = key

    def normal(self, shape, scale=0.05, dtype=jnp.float32):
        self.key, sub = jax.random.split(self.key)
        return (scale * jax.random.normal(sub, shape)).astype(dtype)


def init_fcb(pg, in_channels, query_size):
    qs = query_size
    scale = 1.0 / (qs ** 0.5)          # attention scale, folded into q-proj
    wq = pg.normal((qs, qs))
    return {
        "ln1_w": jnp.ones((in_channels,), jnp.float32),
        "ln2_w": jnp.ones((qs,), jnp.float32),
        "ln3_w": jnp.ones((qs,), jnp.float32),
        "ctca": {  # TODO(synk): CTCA source unavailable; standard cross-attn.
            "wq": (wq * scale).astype(jnp.bfloat16),
            "bq": jnp.zeros((qs,), jnp.float32),
            "wkv": pg.normal((in_channels, 2 * qs), dtype=jnp.bfloat16),
            "bkv": jnp.zeros((2 * qs,), jnp.float32),
            "wo": pg.normal((qs, qs), dtype=jnp.bfloat16),
            "bo": jnp.zeros((qs,), jnp.float32),
        },
        "att": {
            "wqkv": pg.normal((qs, 3 * qs), dtype=jnp.bfloat16),
            "bqkv": jnp.zeros((3 * qs,), jnp.float32),
            "t": jnp.ones((1,), jnp.float32),
            "wo": pg.normal((qs, qs), dtype=jnp.bfloat16),
            "bo": jnp.zeros((qs,), jnp.float32),
        },
        "ffn": {
            "w1": pg.normal((qs, qs), dtype=jnp.bfloat16),
            "b1": jnp.zeros((qs,), jnp.float32),
            "w2": pg.normal((qs, qs), dtype=jnp.bfloat16),
            "b2": jnp.zeros((qs,), jnp.float32),
        },
    }


# ----------------------------------------------------------------------------
# Main
# ----------------------------------------------------------------------------
if __name__ == "__main__":
    B = 2
    IN_CH = 64       # in_channels
    QS = 128         # query_size (multiple of 128 -> lane-dense everywhere)
    HW = 8           # hw (query spatial size)
    H = W = 16       # x spatial (K/V avg-pooled to HW x HW inside CTCA)

    root = jax.random.PRNGKey(0)
    kparam, kx, kq = jax.random.split(root, 3)
    params = init_fcb(ParamGen(kparam), IN_CH, QS)

    x = jax.random.normal(kx, (B, IN_CH, H, W), jnp.float32)
    feat_q = jax.random.normal(kq, (B, QS, HW, HW), jnp.float32)

    fwd = jax.jit(functools.partial(fcb_forward, hw=HW))
    out = fwd(params, x, feat_q)
    jax.block_until_ready(out)

    assert out.shape == (B, QS, HW, HW)
    assert bool(jnp.all(jnp.isfinite(out)))
    print("KERNEL_OK")
</pallas_src>

<mosaic_0001>
module attributes {stable_mosaic.version = 11 : i64} {
  func.func @_fcb_kernel(%arg0: i32, %arg1: memref<1x4x64x64xf32, #tpu.memory_space<vmem>>, %arg2: memref<1x64x128xf32, #tpu.memory_space<vmem>>, %arg3: memref<1x64xf32, #tpu.memory_space<vmem>>, %arg4: memref<64x256xbf16, #tpu.memory_space<vmem>>, %arg5: memref<1x256xf32, #tpu.memory_space<vmem>>, %arg6: memref<128x128xbf16, #tpu.memory_space<vmem>>, %arg7: memref<1x128xf32, #tpu.memory_space<vmem>>, %arg8: memref<128x128xbf16, #tpu.memory_space<vmem>>, %arg9: memref<1x128xf32, #tpu.memory_space<vmem>>, %arg10: memref<1x128xf32, #tpu.memory_space<vmem>>, %arg11: memref<128x384xbf16, #tpu.memory_space<vmem>>, %arg12: memref<1x384xf32, #tpu.memory_space<vmem>>, %arg13: memref<1xf32, #tpu.memory_space<smem>>, %arg14: memref<128x128xbf16, #tpu.memory_space<vmem>>, %arg15: memref<1x128xf32, #tpu.memory_space<vmem>>, %arg16: memref<1x128xf32, #tpu.memory_space<vmem>>, %arg17: memref<128x128xbf16, #tpu.memory_space<vmem>>, %arg18: memref<1x128xf32, #tpu.memory_space<vmem>>, %arg19: memref<128x128xbf16, #tpu.memory_space<vmem>>, %arg20: memref<1x128xf32, #tpu.memory_space<vmem>>, %arg21: memref<1x64x128xf32, #tpu.memory_space<vmem>>) attributes {dimension_semantics = [#tpu.dimension_semantics<parallel>], iteration_bounds = array<i64: 2>, scalar_prefetch = 0 : i64, scratch_operands = 0 : i64, tpu.core_type = #tpu.core_type<tc>, window_params = [{transform_indices = @transform_0, window_bounds = array<i64: 1, 4, 64, 64>}, {transform_indices = @transform_1, window_bounds = array<i64: 1, 64, 128>}, {pipeline_mode = #tpu.pipeline_mode<synchronous>, transform_indices = @transform_2, window_bounds = array<i64: 1, 64>}, {pipeline_mode = #tpu.pipeline_mode<synchronous>, transform_indices = @transform_3, window_bounds = array<i64: 64, 256>}, {pipeline_mode = #tpu.pipeline_mode<synchronous>, transform_indices = @transform_4, window_bounds = array<i64: 1, 256>}, {pipeline_mode = #tpu.pipeline_mode<synchronous>, transform_indices = @transform_5, window_bounds = array<i64: 128, 128>}, {pipeline_mode = #tpu.pipeline_mode<synchronous>, transform_indices = @transform_6, window_bounds = array<i64: 1, 128>}, {pipeline_mode = #tpu.pipeline_mode<synchronous>, transform_indices = @transform_7, window_bounds = array<i64: 128, 128>}, {pipeline_mode = #tpu.pipeline_mode<synchronous>, transform_indices = @transform_8, window_bounds = array<i64: 1, 128>}, {pipeline_mode = #tpu.pipeline_mode<synchronous>, transform_indices = @transform_9, window_bounds = array<i64: 1, 128>}, {pipeline_mode = #tpu.pipeline_mode<synchronous>, transform_indices = @transform_10, window_bounds = array<i64: 128, 384>}, {pipeline_mode = #tpu.pipeline_mode<synchronous>, transform_indices = @transform_11, window_bounds = array<i64: 1, 384>}, {transform_indices = @transform_12, window_bounds = array<i64: 1>}, {pipeline_mode = #tpu.pipeline_mode<synchronous>, transform_indices = @transform_13, window_bounds = array<i64: 128, 128>}, {pipeline_mode = #tpu.pipeline_mode<synchronous>, transform_indices = @transform_14, window_bounds = array<i64: 1, 128>}, {pipeline_mode = #tpu.pipeline_mode<synchronous>, transform_indices = @transform_15, window_bounds = array<i64: 1, 128>}, {pipeline_mode = #tpu.pipeline_mode<synchronous>, transform_indices = @transform_16, window_bounds = array<i64: 128, 128>}, {pipeline_mode = #tpu.pipeline_mode<synchronous>, transform_indices = @transform_17, window_bounds = array<i64: 1, 128>}, {pipeline_mode = #tpu.pipeline_mode<synchronous>, transform_indices = @transform_18, window_bounds = array<i64: 128, 128>}, {pipeline_mode = #tpu.pipeline_mode<synchronous>, transform_indices = @transform_19, window_bounds = array<i64: 1, 128>}, {transform_indices = @transform_20, window_bounds = array<i64: 1, 64, 128>}]} {
    %c0 = arith.constant 0 : index
    %c0_0 = arith.constant 0 : index
    %0 = vector.load %arg3[%c0, %c0_0] : memref<1x64xf32, #tpu.memory_space<vmem>>, vector<1x64xf32>
    %c0_1 = arith.constant 0 : index
    %c0_2 = arith.constant 0 : index
    %c0_3 = arith.constant 0 : index
    %c0_4 = arith.constant 0 : index
    %1 = vector.load %arg1[%c0_1, %c0_2, %c0_3, %c0_4] : memref<1x4x64x64xf32, #tpu.memory_space<vmem>>, vector<1x1x64x64xf32>
    %2 = vector.shape_cast %1 : vector<1x1x64x64xf32> to vector<64x64xf32>
    %cst = arith.constant dense<0.000000e+00> : vector<64xf32>
    %3 = vector.multi_reduction <add>, %2, %cst [1] : vector<64x64xf32> to vector<64xf32>
    %4 = vector.shape_cast %3 : vector<64xf32> to vector<64x1xf32>
    %cst_5 = arith.constant 6.400000e+01 : f32
    %5 = vector.broadcast %cst_5 : f32 to vector<64x1xf32>
    %6 = arith.divf %4, %5 : vector<64x1xf32>
    %7 = vector.broadcast %6 : vector<64x1xf32> to vector<64x64xf32>
    %8 = arith.subf %2, %7 : vector<64x64xf32>
    %9 = arith.mulf %8, %8 : vector<64x64xf32>
    %cst_6 = arith.constant dense<0.000000e+00> : vector<64xf32>
    %10 = vector.multi_reduction <add>, %9, %cst_6 [1] : vector<64x64xf32> to vector<64xf32>
    %11 = vector.shape_cast %10 : vector<64xf32> to vector<64x1xf32>
    %cst_7 = arith.constant 6.400000e+01 : f32
    %12 = vector.broadcast %cst_7 : f32 to vector<64x1xf32>
    %13 = arith.divf %11, %12 : vector<64x1xf32>
    %cst_8 = arith.constant 9.99999974E-6 : f32
    %14 = vector.broadcast %cst_8 : f32 to vector<64x1xf32>
    %15 = arith.addf %13, %14 : vector<64x1xf32>
    %16 = math.rsqrt %15 : vector<64x1xf32>
    %17 = vector.broadcast %16 : vector<64x1xf32> to vector<64x64xf32>
    %18 = arith.mulf %2, %17 : vector<64x64xf32>
    %19 = vector.broadcast %0 : vector<1x64xf32> to vector<64x64xf32>
    %20 = arith.mulf %18, %19 : vector<64x64xf32>
    %c0_9 = arith.constant 0 : index
    %c1 = arith.constant 1 : index
    %c0_10 = arith.constant 0 : index
    %c0_11 = arith.constant 0 : index
    %21 = vector.load %arg1[%c0_9, %c1, %c0_10, %c0_11] : memref<1x4x64x64xf32, #tpu.memory_space<vmem>>, vector<1x1x64x64xf32>
    %22 = vector.shape_cast %21 : vector<1x1x64x64xf32> to vector<64x64xf32>
    %cst_12 = arith.constant dense<0.000000e+00> : vector<64xf32>
    %23 = vector.multi_reduction <add>, %22, %cst_12 [1] : vector<64x64xf32> to vector<64xf32>
    %24 = vector.shape_cast %23 : vector<64xf32> to vector<64x1xf32>
    %cst_13 = arith.constant 6.400000e+01 : f32
    %25 = vector.broadcast %cst_13 : f32 to vector<64x1xf32>
    %26 = arith.divf %24, %25 : vector<64x1xf32>
    %27 = vector.broadcast %26 : vector<64x1xf32> to vector<64x64xf32>
    %28 = arith.subf %22, %27 : vector<64x64xf32>
    %29 = arith.mulf %28, %28 : vector<64x64xf32>
    %cst_14 = arith.constant dense<0.000000e+00> : vector<64xf32>
    %30 = vector.multi_reduction <add>, %29, %cst_14 [1] : vector<64x64xf32> to vector<64xf32>
    %31 = vector.shape_cast %30 : vector<64xf32> to vector<64x1xf32>
    %cst_15 = arith.constant 6.400000e+01 : f32
    %32 = vector.broadcast %cst_15 : f32 to vector<64x1xf32>
    %33 = arith.divf %31, %32 : vector<64x1xf32>
    %cst_16 = arith.constant 9.99999974E-6 : f32
    %34 = vector.broadcast %cst_16 : f32 to vector<64x1xf32>
    %35 = arith.addf %33, %34 : vector<64x1xf32>
    %36 = math.rsqrt %35 : vector<64x1xf32>
    %37 = vector.broadcast %36 : vector<64x1xf32> to vector<64x64xf32>
    %38 = arith.mulf %22, %37 : vector<64x64xf32>
    %39 = vector.broadcast %0 : vector<1x64xf32> to vector<64x64xf32>
    %40 = arith.mulf %38, %39 : vector<64x64xf32>
    %41 = arith.addf %20, %40 : vector<64x64xf32>
    %c0_17 = arith.constant 0 : index
    %c2 = arith.constant 2 : index
    %c0_18 = arith.constant 0 : index
    %c0_19 = arith.constant 0 : index
    %42 = vector.load %arg1[%c0_17, %c2, %c0_18, %c0_19] : memref<1x4x64x64xf32, #tpu.memory_space<vmem>>, vector<1x1x64x64xf32>
    %43 = vector.shape_cast %42 : vector<1x1x64x64xf32> to vector<64x64xf32>
    %cst_20 = arith.constant dense<0.000000e+00> : vector<64xf32>
    %44 = vector.multi_reduction <add>, %43, %cst_20 [1] : vector<64x64xf32> to vector<64xf32>
    %45 = vector.shape_cast %44 : vector<64xf32> to vector<64x1xf32>
    %cst_21 = arith.constant 6.400000e+01 : f32
    %46 = vector.broadcast %cst_21 : f32 to vector<64x1xf32>
    %47 = arith.divf %45, %46 : vector<64x1xf32>
    %48 = vector.broadcast %47 : vector<64x1xf32> to vector<64x64xf32>
    %49 = arith.subf %43, %48 : vector<64x64xf32>
    %50 = arith.mulf %49, %49 : vector<64x64xf32>
    %cst_22 = arith.constant dense<0.000000e+00> : vector<64xf32>
    %51 = vector.multi_reduction <add>, %50, %cst_22 [1] : vector<64x64xf32> to vector<64xf32>
    %52 = vector.shape_cast %51 : vector<64xf32> to vector<64x1xf32>
    %cst_23 = arith.constant 6.400000e+01 : f32
    %53 = vector.broadcast %cst_23 : f32 to vector<64x1xf32>
    %54 = arith.divf %52, %53 : vector<64x1xf32>
    %cst_24 = arith.constant 9.99999974E-6 : f32
    %55 = vector.broadcast %cst_24 : f32 to vector<64x1xf32>
    %56 = arith.addf %54, %55 : vector<64x1xf32>
    %57 = math.rsqrt %56 : vector<64x1xf32>
    %58 = vector.broadcast %57 : vector<64x1xf32> to vector<64x64xf32>
    %59 = arith.mulf %43, %58 : vector<64x64xf32>
    %60 = vector.broadcast %0 : vector<1x64xf32> to vector<64x64xf32>
    %61 = arith.mulf %59, %60 : vector<64x64xf32>
    %62 = arith.addf %41, %61 : vector<64x64xf32>
    %c0_25 = arith.constant 0 : index
    %c3 = arith.constant 3 : index
    %c0_26 = arith.constant 0 : index
    %c0_27 = arith.constant 0 : index
    %63 = vector.load %arg1[%c0_25, %c3, %c0_26, %c0_27] : memref<1x4x64x64xf32, #tpu.memory_space<vmem>>, vector<1x1x64x64xf32>
    %64 = vector.shape_cast %63 : vector<1x1x64x64xf32> to vector<64x64xf32>
    %cst_28 = arith.constant dense<0.000000e+00> : vector<64xf32>
    %65 = vector.multi_reduction <add>, %64, %cst_28 [1] : vector<64x64xf32> to vector<64xf32>
    %66 = vector.shape_cast %65 : vector<64xf32> to vector<64x1xf32>
    %cst_29 = arith.constant 6.400000e+01 : f32
    %67 = vector.broadcast %cst_29 : f32 to vector<64x1xf32>
    %68 = arith.divf %66, %67 : vector<64x1xf32>
    %69 = vector.broadcast %68 : vector<64x1xf32> to vector<64x64xf32>
    %70 = arith.subf %64, %69 : vector<64x64xf32>
    %71 = arith.mulf %70, %70 : vector<64x64xf32>
    %cst_30 = arith.constant dense<0.000000e+00> : vector<64xf32>
    %72 = vector.multi_reduction <add>, %71, %cst_30 [1] : vector<64x64xf32> to vector<64xf32>
    %73 = vector.shape_cast %72 : vector<64xf32> to vector<64x1xf32>
    %cst_31 = arith.constant 6.400000e+01 : f32
    %74 = vector.broadcast %cst_31 : f32 to vector<64x1xf32>
    %75 = arith.divf %73, %74 : vector<64x1xf32>
    %cst_32 = arith.constant 9.99999974E-6 : f32
    %76 = vector.broadcast %cst_32 : f32 to vector<64x1xf32>
    %77 = arith.addf %75, %76 : vector<64x1xf32>
    %78 = math.rsqrt %77 : vector<64x1xf32>
    %79 = vector.broadcast %78 : vector<64x1xf32> to vector<64x64xf32>
    %80 = arith.mulf %64, %79 : vector<64x64xf32>
    %81 = vector.broadcast %0 : vector<1x64xf32> to vector<64x64xf32>
    %82 = arith.mulf %80, %81 : vector<64x64xf32>
    %83 = arith.addf %62, %82 : vector<64x64xf32>
    %cst_33 = arith.constant 2.500000e-01 : f32
    %84 = vector.broadcast %cst_33 : f32 to vector<64x64xf32>
    %85 = arith.mulf %83, %84 : vector<64x64xf32>
    %86 = arith.truncf %85 : vector<64x64xf32> to vector<64x64xbf16>
    %c0_34 = arith.constant 0 : index
    %c0_35 = arith.constant 0 : index
    %87 = vector.load %arg4[%c0_34, %c0_35] : memref<64x256xbf16, #tpu.memory_space<vmem>>, vector<64x256xbf16>
    %cst_36 = arith.constant dense<0.000000e+00> : vector<64x256xf32>
    %88 = tpu.matmul %86, %87, %cst_36 {dimension_numbers = #tpu.dot_dimension_numbers<[1], [0], [0], [1], [0, 0, 1, 1], [], []>} : vector<64x64xbf16>, vector<64x256xbf16>, vector<64x256xf32> -> vector<64x256xf32>
    %c0_37 = arith.constant 0 : index
    %c0_38 = arith.constant 0 : index
    %89 = vector.load %arg5[%c0_37, %c0_38] : memref<1x256xf32, #tpu.memory_space<vmem>>, vector<1x256xf32>
    %90 = vector.broadcast %89 : vector<1x256xf32> to vector<64x256xf32>
    %91 = arith.addf %88, %90 : vector<64x256xf32>
    %92 = vector.extract_strided_slice %91 {offsets = [0, 0], sizes = [64, 128], strides = [1, 1]} : vector<64x256xf32> to vector<64x128xf32>
    %93 = arith.truncf %92 : vector<64x128xf32> to vector<64x128xbf16>
    %94 = vector.extract_strided_slice %91 {offsets = [0, 128], sizes = [64, 128], strides = [1, 1]} : vector<64x256xf32> to vector<64x128xf32>
    %95 = arith.truncf %94 : vector<64x128xf32> to vector<64x128xbf16>
    %c0_39 = arith.constant 0 : index
    %c0_40 = arith.constant 0 : index
    %c0_41 = arith.constant 0 : index
    %96 = vector.load %arg2[%c0_39, %c0_40, %c0_41] : memref<1x64x128xf32, #tpu.memory_space<vmem>>, vector<1x64x128xf32>
    %97 = vector.shape_cast %96 : vector<1x64x128xf32> to vector<64x128xf32>
    %98 = arith.truncf %97 : vector<64x128xf32> to vector<64x128xbf16>
    %c0_42 = arith.constant 0 : index
    %c0_43 = arith.constant 0 : index
    %99 = vector.load %arg6[%c0_42, %c0_43] : memref<128x128xbf16, #tpu.memory_space<vmem>>, vector<128x128xbf16>
    %cst_44 = arith.constant dense<0.000000e+00> : vector<64x128xf32>
    %100 = tpu.matmul %98, %99, %cst_44 {dimension_numbers = #tpu.dot_dimension_numbers<[1], [0], [0], [1], [0, 0, 1, 1], [], []>} : vector<64x128xbf16>, vector<128x128xbf16>, vector<64x128xf32> -> vector<64x128xf32>
    %c0_45 = arith.constant 0 : index
    %c0_46 = arith.constant 0 : index
    %101 = vector.load %arg7[%c0_45, %c0_46] : memref<1x128xf32, #tpu.memory_space<vmem>>, vector<1x128xf32>
    %102 = vector.broadcast %101 : vector<1x128xf32> to vector<64x128xf32>
    %103 = arith.addf %100, %102 : vector<64x128xf32>
    %104 = arith.truncf %103 : vector<64x128xf32> to vector<64x128xbf16>
    %cst_47 = arith.constant dense<0.000000e+00> : vector<64x64xf32>
    %105 = tpu.matmul %104, %93, %cst_47 {dimension_numbers = #tpu.dot_dimension_numbers<[1], [1], [0], [0], [0, 0, 1, 0], [], []>} : vector<64x128xbf16>, vector<64x128xbf16>, vector<64x64xf32> -> vector<64x64xf32>
    %cst_48 = arith.constant dense<0xFF800000> : vector<64xf32>
    %106 = vector.multi_reduction <maximumf>, %105, %cst_48 [1] : vector<64x64xf32> to vector<64xf32>
    %107 = vector.shape_cast %106 : vector<64xf32> to vector<64x1xf32>
    %108 = vector.broadcast %107 : vector<64x1xf32> to vector<64x64xf32>
    %109 = arith.subf %105, %108 : vector<64x64xf32>
    %110 = math.exp %109 : vector<64x64xf32>
    %cst_49 = arith.constant dense<0.000000e+00> : vector<64xf32>
    %111 = vector.multi_reduction <add>, %110, %cst_49 [1] : vector<64x64xf32> to vector<64xf32>
    %112 = vector.shape_cast %111 : vector<64xf32> to vector<64x1xf32>
    %113 = tpu.reciprocal %112 {approx = true} : vector<64x1xf32> -> vector<64x1xf32>
    %114 = vector.broadcast %113 : vector<64x1xf32> to vector<64x64xf32>
    %115 = arith.mulf %110, %114 : vector<64x64xf32>
    %116 = arith.truncf %115 : vector<64x64xf32> to vector<64x64xbf16>
    %cst_50 = arith.constant dense<0.000000e+00> : vector<64x128xf32>
    %117 = tpu.matmul %116, %95, %cst_50 {dimension_numbers = #tpu.dot_dimension_numbers<[1], [0], [0], [1], [0, 0, 1, 1], [], []>} : vector<64x64xbf16>, vector<64x128xbf16>, vector<64x128xf32> -> vector<64x128xf32>
    %118 = arith.truncf %117 : vector<64x128xf32> to vector<64x128xbf16>
    %c0_51 = arith.constant 0 : index
    %c0_52 = arith.constant 0 : index
    %119 = vector.load %arg8[%c0_51, %c0_52] : memref<128x128xbf16, #tpu.memory_space<vmem>>, vector<128x128xbf16>
    %cst_53 = arith.constant dense<0.000000e+00> : vector<64x128xf32>
    %120 = tpu.matmul %118, %119, %cst_53 {dimension_numbers = #tpu.dot_dimension_numbers<[1], [0], [0], [1], [0, 0, 1, 1], [], []>} : vector<64x128xbf16>, vector<128x128xbf16>, vector<64x128xf32> -> vector<64x128xf32>
    %c0_54 = arith.constant 0 : index
    %c0_55 = arith.constant 0 : index
    %121 = vector.load %arg9[%c0_54, %c0_55] : memref<1x128xf32, #tpu.memory_space<vmem>>, vector<1x128xf32>
    %122 = vector.broadcast %121 : vector<1x128xf32> to vector<64x128xf32>
    %123 = arith.addf %120, %122 : vector<64x128xf32>
    %124 = arith.addf %123, %97 : vector<64x128xf32>
    %c0_56 = arith.constant 0 : index
    %c0_57 = arith.constant 0 : index
    %125 = vector.load %arg10[%c0_56, %c0_57] : memref<1x128xf32, #tpu.memory_space<vmem>>, vector<1x128xf32>
    %cst_58 = arith.constant dense<0.000000e+00> : vector<64xf32>
    %126 = vector.multi_reduction <add>, %124, %cst_58 [1] : vector<64x128xf32> to vector<64xf32>
    %127 = vector.shape_cast %126 : vector<64xf32> to vector<64x1xf32>
    %cst_59 = arith.constant 1.280000e+02 : f32
    %128 = vector.broadcast %cst_59 : f32 to vector<64x1xf32>
    %129 = arith.divf %127, %128 : vector<64x1xf32>
    %130 = vector.broadcast %129 : vector<64x1xf32> to vector<64x128xf32>
    %131 = arith.subf %124, %130 : vector<64x128xf32>
    %132 = arith.mulf %131, %131 : vector<64x128xf32>
    %cst_60 = arith.constant dense<0.000000e+00> : vector<64xf32>
    %133 = vector.multi_reduction <add>, %132, %cst_60 [1] : vector<64x128xf32> to vector<64xf32>
    %134 = vector.shape_cast %133 : vector<64xf32> to vector<64x1xf32>
    %cst_61 = arith.constant 1.280000e+02 : f32
    %135 = vector.broadcast %cst_61 : f32 to vector<64x1xf32>
    %136 = arith.divf %134, %135 : vector<64x1xf32>
    %cst_62 = arith.constant 9.99999974E-6 : f32
    %137 = vector.broadcast %cst_62 : f32 to vector<64x1xf32>
    %138 = arith.addf %136, %137 : vector<64x1xf32>
    %139 = math.rsqrt %138 : vector<64x1xf32>
    %140 = vector.broadcast %139 : vector<64x1xf32> to vector<64x128xf32>
    %141 = arith.mulf %124, %140 : vector<64x128xf32>
    %142 = vector.broadcast %125 : vector<1x128xf32> to vector<64x128xf32>
    %143 = arith.mulf %141, %142 : vector<64x128xf32>
    %144 = arith.truncf %143 : vector<64x128xf32> to vector<64x128xbf16>
    %c0_63 = arith.constant 0 : index
    %c0_64 = arith.constant 0 : index
    %145 = vector.load %arg11[%c0_63, %c0_64] : memref<128x384xbf16, #tpu.memory_space<vmem>>, vector<128x384xbf16>
    %cst_65 = arith.constant dense<0.000000e+00> : vector<64x384xf32>
    %146 = tpu.matmul %144, %145, %cst_65 {dimension_numbers = #tpu.dot_dimension_numbers<[1], [0], [0], [1], [0, 0, 1, 1], [], []>} : vector<64x128xbf16>, vector<128x384xbf16>, vector<64x384xf32> -> vector<64x384xf32>
    %c0_66 = arith.constant 0 : index
    %c0_67 = arith.constant 0 : index
    %147 = vector.load %arg12[%c0_66, %c0_67] : memref<1x384xf32, #tpu.memory_space<vmem>>, vector<1x384xf32>
    %148 = vector.broadcast %147 : vector<1x384xf32> to vector<64x384xf32>
    %149 = arith.addf %146, %148 : vector<64x384xf32>
    %150 = vector.extract_strided_slice %149 {offsets = [0, 0], sizes = [64, 128], strides = [1, 1]} : vector<64x384xf32> to vector<64x128xf32>
    %151 = vector.extract_strided_slice %149 {offsets = [0, 128], sizes = [64, 128], strides = [1, 1]} : vector<64x384xf32> to vector<64x128xf32>
    %152 = vector.extract_strided_slice %149 {offsets = [0, 256], sizes = [64, 128], strides = [1, 1]} : vector<64x384xf32> to vector<64x128xf32>
    %153 = arith.mulf %150, %150 : vector<64x128xf32>
    %cst_68 = arith.constant dense<0.000000e+00> : vector<128xf32>
    %154 = vector.multi_reduction <add>, %153, %cst_68 [0] : vector<64x128xf32> to vector<128xf32>
    %155 = vector.shape_cast %154 : vector<128xf32> to vector<1x128xf32>
    %cst_69 = arith.constant 9.99999996E-13 : f32
    %156 = vector.broadcast %cst_69 : f32 to vector<1x128xf32>
    %157 = arith.addf %155, %156 : vector<1x128xf32>
    %158 = math.rsqrt %157 : vector<1x128xf32>
    %159 = vector.broadcast %158 : vector<1x128xf32> to vector<64x128xf32>
    %160 = arith.mulf %150, %159 : vector<64x128xf32>
    %161 = arith.mulf %151, %151 : vector<64x128xf32>
    %cst_70 = arith.constant dense<0.000000e+00> : vector<128xf32>
    %162 = vector.multi_reduction <add>, %161, %cst_70 [0] : vector<64x128xf32> to vector<128xf32>
    %163 = vector.shape_cast %162 : vector<128xf32> to vector<1x128xf32>
    %cst_71 = arith.constant 9.99999996E-13 : f32
    %164 = vector.broadcast %cst_71 : f32 to vector<1x128xf32>
    %165 = arith.addf %163, %164 : vector<1x128xf32>
    %166 = math.rsqrt %165 : vector<1x128xf32>
    %167 = vector.broadcast %166 : vector<1x128xf32> to vector<64x128xf32>
    %168 = arith.mulf %151, %167 : vector<64x128xf32>
    %169 = arith.truncf %160 : vector<64x128xf32> to vector<64x128xbf16>
    %170 = arith.truncf %168 : vector<64x128xf32> to vector<64x128xbf16>
    %cst_72 = arith.constant dense<0.000000e+00> : vector<128x128xf32>
    %171 = tpu.matmul %169, %170, %cst_72 {dimension_numbers = #tpu.dot_dimension_numbers<[0], [0], [1], [1], [0, 1, 1, 1], [], []>} : vector<64x128xbf16>, vector<64x128xbf16>, vector<128x128xf32> -> vector<128x128xf32>
    %c0_73 = arith.constant 0 : index
    %172 = memref.load %arg13[%c0_73] : memref<1xf32, #tpu.memory_space<smem>>
    %173 = vector.broadcast %172 : f32 to vector<128x128xf32>
    %174 = arith.mulf %171, %173 : vector<128x128xf32>
    %cst_74 = arith.constant dense<0xFF800000> : vector<128xf32>
    %175 = vector.multi_reduction <maximumf>, %174, %cst_74 [1] : vector<128x128xf32> to vector<128xf32>
    %176 = vector.shape_cast %175 : vector<128xf32> to vector<128x1xf32>
    %177 = vector.broadcast %176 : vector<128x1xf32> to vector<128x128xf32>
    %178 = arith.subf %174, %177 : vector<128x128xf32>
    %179 = math.exp %178 : vector<128x128xf32>
    %cst_75 = arith.constant dense<0.000000e+00> : vector<128xf32>
    %180 = vector.multi_reduction <add>, %179, %cst_75 [1] : vector<128x128xf32> to vector<128xf32>
    %181 = vector.shape_cast %180 : vector<128xf32> to vector<128x1xf32>
    %182 = tpu.reciprocal %181 {approx = true} : vector<128x1xf32> -> vector<128x1xf32>
    %183 = vector.broadcast %182 : vector<128x1xf32> to vector<128x128xf32>
    %184 = arith.mulf %179, %183 : vector<128x128xf32>
    %185 = arith.truncf %152 : vector<64x128xf32> to vector<64x128xbf16>
    %186 = arith.truncf %184 : vector<128x128xf32> to vector<128x128xbf16>
    %cst_76 = arith.constant dense<0.000000e+00> : vector<64x128xf32>
    %187 = tpu.matmul %185, %186, %cst_76 {dimension_numbers = #tpu.dot_dimension_numbers<[1], [1], [0], [0], [0, 0, 1, 0], [], []>} : vector<64x128xbf16>, vector<128x128xbf16>, vector<64x128xf32> -> vector<64x128xf32>
    %188 = arith.truncf %187 : vector<64x128xf32> to vector<64x128xbf16>
    %c0_77 = arith.constant 0 : index
    %c0_78 = arith.constant 0 : index
    %189 = vector.load %arg14[%c0_77, %c0_78] : memref<128x128xbf16, #tpu.memory_space<vmem>>, vector<128x128xbf16>
    %cst_79 = arith.constant dense<0.000000e+00> : vector<64x128xf32>
    %190 = tpu.matmul %188, %189, %cst_79 {dimension_numbers = #tpu.dot_dimension_numbers<[1], [0], [0], [1], [0, 0, 1, 1], [], []>} : vector<64x128xbf16>, vector<128x128xbf16>, vector<64x128xf32> -> vector<64x128xf32>
    %c0_80 = arith.constant 0 : index
    %c0_81 = arith.constant 0 : index
    %191 = vector.load %arg15[%c0_80, %c0_81] : memref<1x128xf32, #tpu.memory_space<vmem>>, vector<1x128xf32>
    %192 = vector.broadcast %191 : vector<1x128xf32> to vector<64x128xf32>
    %193 = arith.addf %190, %192 : vector<64x128xf32>
    %194 = arith.addf %193, %124 : vector<64x128xf32>
    %c0_82 = arith.constant 0 : index
    %c0_83 = arith.constant 0 : index
    %195 = vector.load %arg16[%c0_82, %c0_83] : memref<1x128xf32, #tpu.memory_space<vmem>>, vector<1x128xf32>
    %cst_84 = arith.constant dense<0.000000e+00> : vector<64xf32>
    %196 = vector.multi_reduction <add>, %194, %cst_84 [1] : vector<64x128xf32> to vector<64xf32>
    %197 = vector.shape_cast %196 : vector<64xf32> to vector<64x1xf32>
    %cst_85 = arith.constant 1.280000e+02 : f32
    %198 = vector.broadcast %cst_85 : f32 to vector<64x1xf32>
    %199 = arith.divf %197, %198 : vector<64x1xf32>
    %200 = vector.broadcast %199 : vector<64x1xf32> to vector<64x128xf32>
    %201 = arith.subf %194, %200 : vector<64x128xf32>
    %202 = arith.mulf %201, %201 : vector<64x128xf32>
    %cst_86 = arith.constant dense<0.000000e+00> : vector<64xf32>
    %203 = vector.multi_reduction <add>, %202, %cst_86 [1] : vector<64x128xf32> to vector<64xf32>
    %204 = vector.shape_cast %203 : vector<64xf32> to vector<64x1xf32>
    %cst_87 = arith.constant 1.280000e+02 : f32
    %205 = vector.broadcast %cst_87 : f32 to vector<64x1xf32>
    %206 = arith.divf %204, %205 : vector<64x1xf32>
    %cst_88 = arith.constant 9.99999974E-6 : f32
    %207 = vector.broadcast %cst_88 : f32 to vector<64x1xf32>
    %208 = arith.addf %206, %207 : vector<64x1xf32>
    %209 = math.rsqrt %208 : vector<64x1xf32>
    %210 = vector.broadcast %209 : vector<64x1xf32> to vector<64x128xf32>
    %211 = arith.mulf %194, %210 : vector<64x128xf32>
    %212 = vector.broadcast %195 : vector<1x128xf32> to vector<64x128xf32>
    %213 = arith.mulf %211, %212 : vector<64x128xf32>
    %214 = arith.truncf %213 : vector<64x128xf32> to vector<64x128xbf16>
    %c0_89 = arith.constant 0 : index
    %c0_90 = arith.constant 0 : index
    %215 = vector.load %arg17[%c0_89, %c0_90] : memref<128x128xbf16, #tpu.memory_space<vmem>>, vector<128x128xbf16>
    %cst_91 = arith.constant dense<0.000000e+00> : vector<64x128xf32>
    %216 = tpu.matmul %214, %215, %cst_91 {dimension_numbers = #tpu.dot_dimension_numbers<[1], [0], [0], [1], [0, 0, 1, 1], [], []>} : vector<64x128xbf16>, vector<128x128xbf16>, vector<64x128xf32> -> vector<64x128xf32>
    %c0_92 = arith.constant 0 : index
    %c0_93 = arith.constant 0 : index
    %217 = vector.load %arg18[%c0_92, %c0_93] : memref<1x128xf32, #tpu.memory_space<vmem>>, vector<1x128xf32>
    %218 = vector.broadcast %217 : vector<1x128xf32> to vector<64x128xf32>
    %219 = arith.addf %216, %218 : vector<64x128xf32>
    %cst_94 = arith.constant 0.000000e+00 : f32
    %220 = vector.broadcast %cst_94 : f32 to vector<64x128xf32>
    %221 = arith.maximumf %219, %220 : vector<64x128xf32>
    %222 = arith.truncf %221 : vector<64x128xf32> to vector<64x128xbf16>
    %c0_95 = arith.constant 0 : index
    %c0_96 = arith.constant 0 : index
    %223 = vector.load %arg19[%c0_95, %c0_96] : memref<128x128xbf16, #tpu.memory_space<vmem>>, vector<128x128xbf16>
    %cst_97 = arith.constant dense<0.000000e+00> : vector<64x128xf32>
    %224 = tpu.matmul %222, %223, %cst_97 {dimension_numbers = #tpu.dot_dimension_numbers<[1], [0], [0], [1], [0, 0, 1, 1], [], []>} : vector<64x128xbf16>, vector<128x128xbf16>, vector<64x128xf32> -> vector<64x128xf32>
    %c0_98 = arith.constant 0 : index
    %c0_99 = arith.constant 0 : index
    %225 = vector.load %arg20[%c0_98, %c0_99] : memref<1x128xf32, #tpu.memory_space<vmem>>, vector<1x128xf32>
    %226 = vector.broadcast %225 : vector<1x128xf32> to vector<64x128xf32>
    %227 = arith.addf %224, %226 : vector<64x128xf32>
    %228 = arith.addf %227, %194 : vector<64x128xf32>
    %c0_100 = arith.constant 0 : index
    %c0_101 = arith.constant 0 : index
    %c0_102 = arith.constant 0 : index
    %229 = vector.load %arg21[%c0_100, %c0_101, %c0_102] : memref<1x64x128xf32, #tpu.memory_space<vmem>>, vector<1x64x128xf32>
    %230 = vector.shape_cast %229 : vector<1x64x128xf32> to vector<64x128xf32>
    %231 = vector.shape_cast %228 : vector<64x128xf32> to vector<1x64x128xf32>
    tpu.vector_store %arg21[%c0_100, %c0_101, %c0_102], %231 {strides = array<i32>} : memref<1x64x128xf32, #tpu.memory_space<vmem>>, vector<1x64x128xf32>,
    return
  }
  func.func @transform_0(%arg0: i32) -> (i32, i32, i32, i32) {
    %c0_i32 = arith.constant 0 : i32
    %c0_i32_0 = arith.constant 0 : i32
    %c0_i32_1 = arith.constant 0 : i32
    %c0_i32_2 = arith.constant 0 : i32
    return %arg0, %c0_i32, %c0_i32_0, %c0_i32_1 : i32, i32, i32, i32
  }
  func.func @transform_1(%arg0: i32) -> (i32, i32, i32) {
    %c0_i32 = arith.constant 0 : i32
    %c0_i32_0 = arith.constant 0 : i32
    %c0_i32_1 = arith.constant 0 : i32
    return %arg0, %c0_i32, %c0_i32_0 : i32, i32, i32
  }
  func.func @transform_2(%arg0: i32) -> (i32, i32) {
    %c0_i32 = arith.constant 0 : i32
    %c0_i32_0 = arith.constant 0 : i32
    %c0_i32_1 = arith.constant 0 : i32
    return %c0_i32, %c0_i32_0 : i32, i32
  }
  func.func @transform_3(%arg0: i32) -> (i32, i32) {
    %c0_i32 = arith.constant 0 : i32
    %c0_i32_0 = arith.constant 0 : i32
    %c0_i32_1 = arith.constant 0 : i32
    return %c0_i32, %c0_i32_0 : i32, i32
  }
  func.func @transform_4(%arg0: i32) -> (i32, i32) {
    %c0_i32 = arith.constant 0 : i32
    %c0_i32_0 = arith.constant 0 : i32
    %c0_i32_1 = arith.constant 0 : i32
    return %c0_i32, %c0_i32_0 : i32, i32
  }
  func.func @transform_5(%arg0: i32) -> (i32, i32) {
    %c0_i32 = arith.constant 0 : i32
    %c0_i32_0 = arith.constant 0 : i32
    %c0_i32_1 = arith.constant 0 : i32
    return %c0_i32, %c0_i32_0 : i32, i32
  }
  func.func @transform_6(%arg0: i32) -> (i32, i32) {
    %c0_i32 = arith.constant 0 : i32
    %c0_i32_0 = arith.constant 0 : i32
    %c0_i32_1 = arith.constant 0 : i32
    return %c0_i32, %c0_i32_0 : i32, i32
  }
  func.func @transform_7(%arg0: i32) -> (i32, i32) {
    %c0_i32 = arith.constant 0 : i32
    %c0_i32_0 = arith.constant 0 : i32
    %c0_i32_1 = arith.constant 0 : i32
    return %c0_i32, %c0_i32_0 : i32, i32
  }
  func.func @transform_8(%arg0: i32) -> (i32, i32) {
    %c0_i32 = arith.constant 0 : i32
    %c0_i32_0 = arith.constant 0 : i32
    %c0_i32_1 = arith.constant 0 : i32
    return %c0_i32, %c0_i32_0 : i32, i32
  }
  func.func @transform_9(%arg0: i32) -> (i32, i32) {
    %c0_i32 = arith.constant 0 : i32
    %c0_i32_0 = arith.constant 0 : i32
    %c0_i32_1 = arith.constant 0 : i32
    return %c0_i32, %c0_i32_0 : i32, i32
  }
  func.func @transform_10(%arg0: i32) -> (i32, i32) {
    %c0_i32 = arith.constant 0 : i32
    %c0_i32_0 = arith.constant 0 : i32
    %c0_i32_1 = arith.constant 0 : i32
    return %c0_i32, %c0_i32_0 : i32, i32
  }
  func.func @transform_11(%arg0: i32) -> (i32, i32) {
    %c0_i32 = arith.constant 0 : i32
    %c0_i32_0 = arith.constant 0 : i32
    %c0_i32_1 = arith.constant 0 : i32
    return %c0_i32, %c0_i32_0 : i32, i32
  }
  func.func @transform_12(%arg0: i32) -> i32 {
    %c0_i32 = arith.constant 0 : i32
    %c0_i32_0 = arith.constant 0 : i32
    return %c0_i32 : i32
  }
  func.func @transform_13(%arg0: i32) -> (i32, i32) {
    %c0_i32 = arith.constant 0 : i32
    %c0_i32_0 = arith.constant 0 : i32
    %c0_i32_1 = arith.constant 0 : i32
    return %c0_i32, %c0_i32_0 : i32, i32
  }
  func.func @transform_14(%arg0: i32) -> (i32, i32) {
    %c0_i32 = arith.constant 0 : i32
    %c0_i32_0 = arith.constant 0 : i32
    %c0_i32_1 = arith.constant 0 : i32
    return %c0_i32, %c0_i32_0 : i32, i32
  }
  func.func @transform_15(%arg0: i32) -> (i32, i32) {
    %c0_i32 = arith.constant 0 : i32
    %c0_i32_0 = arith.constant 0 : i32
    %c0_i32_1 = arith.constant 0 : i32
    return %c0_i32, %c0_i32_0 : i32, i32
  }
  func.func @transform_16(%arg0: i32) -> (i32, i32) {
    %c0_i32 = arith.constant 0 : i32
    %c0_i32_0 = arith.constant 0 : i32
    %c0_i32_1 = arith.constant 0 : i32
    return %c0_i32, %c0_i32_0 : i32, i32
  }
  func.func @transform_17(%arg0: i32) -> (i32, i32) {
    %c0_i32 = arith.constant 0 : i32
    %c0_i32_0 = arith.constant 0 : i32
    %c0_i32_1 = arith.constant 0 : i32
    return %c0_i32, %c0_i32_0 : i32, i32
  }
  func.func @transform_18(%arg0: i32) -> (i32, i32) {
    %c0_i32 = arith.constant 0 : i32
    %c0_i32_0 = arith.constant 0 : i32
    %c0_i32_1 = arith.constant 0 : i32
    return %c0_i32, %c0_i32_0 : i32, i32
  }
  func.func @transform_19(%arg0: i32) -> (i32, i32) {
    %c0_i32 = arith.constant 0 : i32
    %c0_i32_0 = arith.constant 0 : i32
    %c0_i32_1 = arith.constant 0 : i32
    return %c0_i32, %c0_i32_0 : i32, i32
  }
  func.func @transform_20(%arg0: i32) -> (i32, i32, i32) {
    %c0_i32 = arith.constant 0 : i32
    %c0_i32_0 = arith.constant 0 : i32
    %c0_i32_1 = arith.constant 0 : i32
    return %arg0, %c0_i32, %c0_i32_0 : i32, i32, i32
  }
}

</mosaic_0001>

<llo_original>
// kernel: fcb_forward.1
$region0: #{fcb_forward.1}
  #allocation0 [shape = 'u32[]', space=smem, size = 0x4, offset = 0x4, fixed_abs, tag = 'smem constant byte address 0x4 - core index']
  #allocation1 [shape = 'u32[144,128]{1,0:T(1,128)}', space=vmem, size = 0x12000, scoped, tag = 'internal scratch']
  #allocation2 [shape = 'f32[1]{0:T(128)S(6)}', space=smem, size = 0x200, scoped, tag = 'scoped memory for fcb_forward.1']
  %s0 = inlined_call_operand.vmem [shape: f32[2,4,64,64], index: 0, kind: input, shape index: {}]
  %s1 = inlined_call_operand.vmem [shape: f32[2,64,128], index: 1, kind: input, shape index: {}]
  %s2 = inlined_call_operand.vmem [shape: f32[1,64], index: 2, kind: input, shape index: {}]
  %s3 = inlined_call_operand.vmem [shape: bf16[64,256], index: 3, kind: input, shape index: {}]
  %s4 = inlined_call_operand.vmem [shape: f32[1,256], index: 4, kind: input, shape index: {}]
  %s5 = inlined_call_operand.vmem [shape: bf16[128,128], index: 5, kind: input, shape index: {}]
  %s6 = inlined_call_operand.vmem [shape: f32[1,128], index: 6, kind: input, shape index: {}]
  %s7 = inlined_call_operand.vmem [shape: bf16[128,128], index: 7, kind: input, shape index: {}]
  %s8 = inlined_call_operand.vmem [shape: f32[1,128], index: 8, kind: input, shape index: {}]
  %s9 = inlined_call_operand.vmem [shape: f32[1,128], index: 9, kind: input, shape index: {}]
  %s10 = inlined_call_operand.vmem [shape: bf16[128,384], index: 10, kind: input, shape index: {}]
  %s11 = inlined_call_operand.vmem [shape: f32[1,384], index: 11, kind: input, shape index: {}]
  %s12 = inlined_call_operand.<no memory space> [shape: f32[1], index: 12, kind: input, shape index: {}]
  %s13 = inlined_call_operand.vmem [shape: bf16[128,128], index: 13, kind: input, shape index: {}]
  %s14 = inlined_call_operand.vmem [shape: f32[1,128], index: 14, kind: input, shape index: {}]
  %s15 = inlined_call_operand.vmem [shape: f32[1,128], index: 15, kind: input, shape index: {}]
  %s16 = inlined_call_operand.vmem [shape: bf16[128,128], index: 16, kind: input, shape index: {}]
  %s17 = inlined_call_operand.vmem [shape: f32[1,128], index: 17, kind: input, shape index: {}]
  %s18 = inlined_call_operand.vmem [shape: bf16[128,128], index: 18, kind: input, shape index: {}]
  %s19 = inlined_call_operand.vmem [shape: f32[1,128], index: 19, kind: input, shape index: {}]
  %s20 = inlined_call_operand.hbm [shape: f32[2,64,128], index: 20, kind: output, shape index: {}]
  %s21 = sld [smem:[#allocation0]]
  $region113: #{fcb_forward.1} parent=0
    _
  %s23 = ssub.s32 1, %s21
  %s24 = scalar_select 0, %s23, %s21
  %25 = sst [smem:[#allocation2]] %s12
  $region1: #{fcb_forward.1} parent=0
    #allocation3 [shape = 'u8[65536]{0}', space=vmem, size = 0x10000, scoped, tag = 'output window, operand 0']
    #allocation4 [shape = 's32[2]{0}', space=sflag, size = 0x8, scoped, tag = 'scoped memory for fcb_forward.1']
    %26 = vsyncpa [#allocation4], 0
    %s27 = scalar_lea.sflag [#allocation4], 1
    %28 = vsyncpa %s27, 0
    loop: start=0, step=1, limit=4
    $region2: #{fcb_forward.1} parent=1 // loop_pre_header
      _
    $region3: #{fcb_forward.1} parent=1 // loop_header
      %s30 = sphi 0, %s34
      %p31 = scmp.ge.s32.totalorder %s30, 4
      %s40 = sphi 0, %s42
      %s43 = sphi 0, %s40
      %s44 = sphi 0, %s43
      %s60 = sphi 0, %s44
      %s66 = sphi 0, %s68
      %s69 = sphi 0, %s66
      %s70 = sphi 0, %s69
      %s86 = sphi 0, %s70
      %s90 = sphi 0, %s90
      %s92 = sphi 0, %s90
      %s93 = sphi 0, %s92
      %s107 = sphi 0, %s93
      %s111 = sphi 0, %s111
      %s113 = sphi 0, %s111
      %s114 = sphi 0, %s113
      %s128 = sphi 0, %s114
      %s132 = sphi 0, %s132
      %s134 = sphi 0, %s132
      %s135 = sphi 0, %s134
      %s149 = sphi 0, %s135
      %s153 = sphi 0, %s153
      %s155 = sphi 0, %s153
      %s156 = sphi 0, %s155
      %s170 = sphi 0, %s156
      %s174 = sphi 0, %s174
      %s176 = sphi 0, %s174
      %s177 = sphi 0, %s176
      %s191 = sphi 0, %s177
      %s195 = sphi 0, %s195
      %s197 = sphi 0, %s195
      %s198 = sphi 0, %s197
      %s212 = sphi 0, %s198
      %s216 = sphi 0, %s216
      %s218 = sphi 0, %s216
      %s219 = sphi 0, %s218
      %s233 = sphi 0, %s219
      %s237 = sphi 0, %s237
      %s239 = sphi 0, %s237
      %s240 = sphi 0, %s239
      %s254 = sphi 0, %s240
      %s258 = sphi 0, %s258
      %s260 = sphi 0, %s258
      %s261 = sphi 0, %s260
      %s275 = sphi 0, %s261
      %s279 = sphi 0, %s279
      %s281 = sphi 0, %s279
      %s282 = sphi 0, %s281
      %s296 = sphi 0, %s282
      %s300 = sphi 0, %s300
      %s302 = sphi 0, %s300
      %s303 = sphi 0, %s302
      %s317 = sphi 0, %s303
      %s321 = sphi 0, %s321
      %s323 = sphi 0, %s321
      %s324 = sphi 0, %s323
      %s338 = sphi 0, %s324
      %s342 = sphi 0, %s342
      %s344 = sphi 0, %s342
      %s345 = sphi 0, %s344
      %s359 = sphi 0, %s345
      %s363 = sphi 0, %s363
      %s365 = sphi 0, %s363
      %s366 = sphi 0, %s365
      %s380 = sphi 0, %s366
      %s384 = sphi 0, %s384
      %s386 = sphi 0, %s384
      %s387 = sphi 0, %s386
      %s401 = sphi 0, %s387
      %s405 = sphi 0, %s405
      %s407 = sphi 0, %s405
      %s408 = sphi 0, %s407
      %s422 = sphi 0, %s408
      %s426 = sphi 0, %s426
      %s428 = sphi 0, %s426
      %s429 = sphi 0, %s428
      %s443 = sphi 0, %s429
      %s447 = sphi 0, %s447
      %s449 = sphi 0, %s447
      %s450 = sphi 0, %s449
      %s464 = sphi 0, %s450
      %s470 = sphi 0, %s472
      %s473 = sphi 0, %s470
      %s474 = sphi 0, %s473
      %s490 = sphi 0, %s474
    $region4: #{fcb_forward.1} parent=1 // loop_header_branch
      %33 = sbr.rel (%p31) target = $region8
    $region5: #{fcb_forward.1} parent=1 // loop_body
      %s35 = ssub.s32 %s30, 1
      %s36 = ssub.s32 %s30, 2
      %s37 = sadd.s32 %s30, 1
      %s38 = ssub.s32 %s30, %s37
      %p39 = scmp.eq.s32.totalorder %s38, 0
      %s41 = sadd.s32 %s40, 1
      %s42 = scalar_select %p39, %s40, %s41
      %p45 = pneg %p39
      %p46 = scmp.eq.s32.totalorder %s30, 1
      %p47 = por %p45, %p46
      %p48 = scmp.ne.s32.totalorder %s40, %s43
      %p49 = scmp.eq.s32.totalorder %s30, 0
      %p50 = por %p48, %p49
      %p51 = scmp.ne.s32.totalorder %s40, %s43
      %p52 = scmp.eq.s32.totalorder %s35, 1
      %p53 = por %p51, %p52
      %p54 = scmp.ne.s32.totalorder %s43, %s44
      %p55 = scmp.eq.s32.totalorder %s35, 0
      %p56 = por %p54, %p55
      %p57 = scmp.ne.s32.totalorder %s43, %s44
      %p58 = scmp.eq.s32.totalorder %s36, 1
      %p59 = por %p57, %p58
      %p61 = scmp.ne.s32.totalorder %s44, %s60
      %p62 = scmp.eq.s32.totalorder %s36, 0
      %p63 = por %p61, %p62
      %s64 = ssub.s32 %s30, %s37
      %p65 = scmp.eq.s32.totalorder %s64, 0
      %s67 = sadd.s32 %s66, 1
      %s68 = scalar_select %p65, %s66, %s67
      %p71 = pneg %p65
      %p72 = scmp.eq.s32.totalorder %s30, 1
      %p73 = por %p71, %p72
      %p74 = scmp.ne.s32.totalorder %s66, %s69
      %p75 = scmp.eq.s32.totalorder %s30, 0
      %p76 = por %p74, %p75
      %p77 = scmp.ne.s32.totalorder %s66, %s69
      %p78 = scmp.eq.s32.totalorder %s35, 1
      %p79 = por %p77, %p78
      %p80 = scmp.ne.s32.totalorder %s69, %s70
      %p81 = scmp.eq.s32.totalorder %s35, 0
      %p82 = por %p80, %p81
      %p83 = scmp.ne.s32.totalorder %s69, %s70
      %p84 = scmp.eq.s32.totalorder %s36, 1
      %p85 = por %p83, %p84
      %p87 = scmp.ne.s32.totalorder %s70, %s86
      %p88 = scmp.eq.s32.totalorder %s36, 0
      %p89 = por %p87, %p88
      %s91 = sadd.s32 %s90, 1
      %p94 = scmp.eq.s32.totalorder %s30, 1
      %p95 = scmp.ne.s32.totalorder %s90, %s92
      %p96 = scmp.eq.s32.totalorder %s30, 0
      %p97 = por %p95, %p96
      %p98 = scmp.ne.s32.totalorder %s90, %s92
      %p99 = scmp.eq.s32.totalorder %s35, 1
      %p100 = por %p98, %p99
      %p101 = scmp.ne.s32.totalorder %s92, %s93
      %p102 = scmp.eq.s32.totalorder %s35, 0
      %p103 = por %p101, %p102
      %p104 = scmp.ne.s32.totalorder %s92, %s93
      %p105 = scmp.eq.s32.totalorder %s36, 1
      %p106 = por %p104, %p105
      %p108 = scmp.ne.s32.totalorder %s93, %s107
      %p109 = scmp.eq.s32.totalorder %s36, 0
      %p110 = por %p108, %p109
      %s112 = sadd.s32 %s111, 1
      %p115 = scmp.eq.s32.totalorder %s30, 1
      %p116 = scmp.ne.s32.totalorder %s111, %s113
      %p117 = scmp.eq.s32.totalorder %s30, 0
      %p118 = por %p116, %p117
      %p119 = scmp.ne.s32.totalorder %s111, %s113
      %p120 = scmp.eq.s32.totalorder %s35, 1
      %p121 = por %p119, %p120
      %p122 = scmp.ne.s32.totalorder %s113, %s114
      %p123 = scmp.eq.s32.totalorder %s35, 0
      %p124 = por %p122, %p123
      %p125 = scmp.ne.s32.totalorder %s113, %s114
      %p126 = scmp.eq.s32.totalorder %s36, 1
      %p127 = por %p125, %p126
      %p129 = scmp.ne.s32.totalorder %s114, %s128
      %p130 = scmp.eq.s32.totalorder %s36, 0
      %p131 = por %p129, %p130
      %s133 = sadd.s32 %s132, 1
      %p136 = scmp.eq.s32.totalorder %s30, 1
      %p137 = scmp.ne.s32.totalorder %s132, %s134
      %p138 = scmp.eq.s32.totalorder %s30, 0
      %p139 = por %p137, %p138
      %p140 = scmp.ne.s32.totalorder %s132, %s134
      %p141 = scmp.eq.s32.totalorder %s35, 1
      %p142 = por %p140, %p141
      %p143 = scmp.ne.s32.totalorder %s134, %s135
      %p144 = scmp.eq.s32.totalorder %s35, 0
      %p145 = por %p143, %p144
      %p146 = scmp.ne.s32.totalorder %s134, %s135
      %p147 = scmp.eq.s32.totalorder %s36, 1
      %p148 = por %p146, %p147
      %p150 = scmp.ne.s32.totalorder %s135, %s149
      %p151 = scmp.eq.s32.totalorder %s36, 0
      %p152 = por %p150, %p151
      %s154 = sadd.s32 %s153, 1
      %p157 = scmp.eq.s32.totalorder %s30, 1
      %p158 = scmp.ne.s32.totalorder %s153, %s155
      %p159 = scmp.eq.s32.totalorder %s30, 0
      %p160 = por %p158, %p159
      %p161 = scmp.ne.s32.totalorder %s153, %s155
      %p162 = scmp.eq.s32.totalorder %s35, 1
      %p163 = por %p161, %p162
      %p164 = scmp.ne.s32.totalorder %s155, %s156
      %p165 = scmp.eq.s32.totalorder %s35, 0
      %p166 = por %p164, %p165
      %p167 = scmp.ne.s32.totalorder %s155, %s156
      %p168 = scmp.eq.s32.totalorder %s36, 1
      %p169 = por %p167, %p168
      %p171 = scmp.ne.s32.totalorder %s156, %s170
      %p172 = scmp.eq.s32.totalorder %s36, 0
      %p173 = por %p171, %p172
      %s175 = sadd.s32 %s174, 1
      %p178 = scmp.eq.s32.totalorder %s30, 1
      %p179 = scmp.ne.s32.totalorder %s174, %s176
      %p180 = scmp.eq.s32.totalorder %s30, 0
      %p181 = por %p179, %p180
      %p182 = scmp.ne.s32.totalorder %s174, %s176
      %p183 = scmp.eq.s32.totalorder %s35, 1
      %p184 = por %p182, %p183
      %p185 = scmp.ne.s32.totalorder %s176, %s177
      %p186 = scmp.eq.s32.totalorder %s35, 0
      %p187 = por %p185, %p186
      %p188 = scmp.ne.s32.totalorder %s176, %s177
      %p189 = scmp.eq.s32.totalorder %s36, 1
      %p190 = por %p188, %p189
      %p192 = scmp.ne.s32.totalorder %s177, %s191
      %p193 = scmp.eq.s32.totalorder %s36, 0
      %p194 = por %p192, %p193
      %s196 = sadd.s32 %s195, 1
      %p199 = scmp.eq.s32.totalorder %s30, 1
      %p200 = scmp.ne.s32.totalorder %s195, %s197
      %p201 = scmp.eq.s32.totalorder %s30, 0
      %p202 = por %p200, %p201
      %p203 = scmp.ne.s32.totalorder %s195, %s197
      %p204 = scmp.eq.s32.totalorder %s35, 1
      %p205 = por %p203, %p204
      %p206 = scmp.ne.s32.totalorder %s197, %s198
      %p207 = scmp.eq.s32.totalorder %s35, 0
      %p208 = por %p206, %p207
      %p209 = scmp.ne.s32.totalorder %s197, %s198
      %p210 = scmp.eq.s32.totalorder %s36, 1
      %p211 = por %p209, %p210
      %p213 = scmp.ne.s32.totalorder %s198, %s212
      %p214 = scmp.eq.s32.totalorder %s36, 0
      %p215 = por %p213, %p214
      %s217 = sadd.s32 %s216, 1
      %p220 = scmp.eq.s32.totalorder %s30, 1
      %p221 = scmp.ne.s32.totalorder %s216, %s218
      %p222 = scmp.eq.s32.totalorder %s30, 0
      %p223 = por %p221, %p222
      %p224 = scmp.ne.s32.totalorder %s216, %s218
      %p225 = scmp.eq.s32.totalorder %s35, 1
      %p226 = por %p224, %p225
      %p227 = scmp.ne.s32.totalorder %s218, %s219
      %p228 = scmp.eq.s32.totalorder %s35, 0
      %p229 = por %p227, %p228
      %p230 = scmp.ne.s32.totalorder %s218, %s219
      %p231 = scmp.eq.s32.totalorder %s36, 1
      %p232 = por %p230, %p231
      %p234 = scmp.ne.s32.totalorder %s219, %s233
      %p235 = scmp.eq.s32.totalorder %s36, 0
      %p236 = por %p234, %p235
      %s238 = sadd.s32 %s237, 1
      %p241 = scmp.eq.s32.totalorder %s30, 1
      %p242 = scmp.ne.s32.totalorder %s237, %s239
      %p243 = scmp.eq.s32.totalorder %s30, 0
      %p244 = por %p242, %p243
      %p245 = scmp.ne.s32.totalorder %s237, %s239
      %p246 = scmp.eq.s32.totalorder %s35, 1
      %p247 = por %p245, %p246
      %p248 = scmp.ne.s32.totalorder %s239, %s240
      %p249 = scmp.eq.s32.totalorder %s35, 0
      %p250 = por %p248, %p249
      %p251 = scmp.ne.s32.totalorder %s239, %s240
      %p252 = scmp.eq.s32.totalorder %s36, 1
      %p253 = por %p251, %p252
      %p255 = scmp.ne.s32.totalorder %s240, %s254
      %p256 = scmp.eq.s32.totalorder %s36, 0
      %p257 = por %p255, %p256
      %s259 = sadd.s32 %s258, 1
      %p262 = scmp.eq.s32.totalorder %s30, 1
      %p263 = scmp.ne.s32.totalorder %s258, %s260
      %p264 = scmp.eq.s32.totalorder %s30, 0
      %p265 = por %p263, %p264
      %p266 = scmp.ne.s32.totalorder %s258, %s260
      %p267 = scmp.eq.s32.totalorder %s35, 1
      %p268 = por %p266, %p267
      %p269 = scmp.ne.s32.totalorder %s260, %s261
      %p270 = scmp.eq.s32.totalorder %s35, 0
      %p271 = por %p269, %p270
      %p272 = scmp.ne.s32.totalorder %s260, %s261
      %p273 = scmp.eq.s32.totalorder %s36, 1
      %p274 = por %p272, %p273
      %p276 = scmp.ne.s32.totalorder %s261, %s275
      %p277 = scmp.eq.s32.totalorder %s36, 0
      %p278 = por %p276, %p277
      %s280 = sadd.s32 %s279, 1
      %p283 = scmp.eq.s32.totalorder %s30, 1
      %p284 = scmp.ne.s32.totalorder %s279, %s281
      %p285 = scmp.eq.s32.totalorder %s30, 0
      %p286 = por %p284, %p285
      %p287 = scmp.ne.s32.totalorder %s279, %s281
      %p288 = scmp.eq.s32.totalorder %s35, 1
      %p289 = por %p287, %p288
      %p290 = scmp.ne.s32.totalorder %s281, %s282
      %p291 = scmp.eq.s32.totalorder %s35, 0
      %p292 = por %p290, %p291
      %p293 = scmp.ne.s32.totalorder %s281, %s282
      %p294 = scmp.eq.s32.totalorder %s36, 1
      %p295 = por %p293, %p294
      %p297 = scmp.ne.s32.totalorder %s282, %s296
      %p298 = scmp.eq.s32.totalorder %s36, 0
      %p299 = por %p297, %p298
      %s301 = sadd.s32 %s300, 1
      %p304 = scmp.eq.s32.totalorder %s30, 1
      %p305 = scmp.ne.s32.totalorder %s300, %s302
      %p306 = scmp.eq.s32.totalorder %s30, 0
      %p307 = por %p305, %p306
      %p308 = scmp.ne.s32.totalorder %s300, %s302
      %p309 = scmp.eq.s32.totalorder %s35, 1
      %p310 = por %p308, %p309
      %p311 = scmp.ne.s32.totalorder %s302, %s303
      %p312 = scmp.eq.s32.totalorder %s35, 0
      %p313 = por %p311, %p312
      %p314 = scmp.ne.s32.totalorder %s302, %s303
      %p315 = scmp.eq.s32.totalorder %s36, 1
      %p316 = por %p314, %p315
      %p318 = scmp.ne.s32.totalorder %s303, %s317
      %p319 = scmp.eq.s32.totalorder %s36, 0
      %p320 = por %p318, %p319
      %s322 = sadd.s32 %s321, 1
      %p325 = scmp.eq.s32.totalorder %s30, 1
      %p326 = scmp.ne.s32.totalorder %s321, %s323
      %p327 = scmp.eq.s32.totalorder %s30, 0
      %p328 = por %p326, %p327
      %p329 = scmp.ne.s32.totalorder %s321, %s323
      %p330 = scmp.eq.s32.totalorder %s35, 1
      %p331 = por %p329, %p330
      %p332 = scmp.ne.s32.totalorder %s323, %s324
      %p333 = scmp.eq.s32.totalorder %s35, 0
      %p334 = por %p332, %p333
      %p335 = scmp.ne.s32.totalorder %s323, %s324
      %p336 = scmp.eq.s32.totalorder %s36, 1
      %p337 = por %p335, %p336
      %p339 = scmp.ne.s32.totalorder %s324, %s338
      %p340 = scmp.eq.s32.totalorder %s36, 0
      %p341 = por %p339, %p340
      %s343 = sadd.s32 %s342, 1
      %p346 = scmp.eq.s32.totalorder %s30, 1
      %p347 = scmp.ne.s32.totalorder %s342, %s344
      %p348 = scmp.eq.s32.totalorder %s30, 0
      %p349 = por %p347, %p348
      %p350 = scmp.ne.s32.totalorder %s342, %s344
      %p351 = scmp.eq.s32.totalorder %s35, 1
      %p352 = por %p350, %p351
      %p353 = scmp.ne.s32.totalorder %s344, %s345
      %p354 = scmp.eq.s32.totalorder %s35, 0
      %p355 = por %p353, %p354
      %p356 = scmp.ne.s32.totalorder %s344, %s345
      %p357 = scmp.eq.s32.totalorder %s36, 1
      %p358 = por %p356, %p357
      %p360 = scmp.ne.s32.totalorder %s345, %s359
      %p361 = scmp.eq.s32.totalorder %s36, 0
      %p362 = por %p360, %p361
      %s364 = sadd.s32 %s363, 1
      %p367 = scmp.eq.s32.totalorder %s30, 1
      %p368 = scmp.ne.s32.totalorder %s363, %s365
      %p369 = scmp.eq.s32.totalorder %s30, 0
      %p370 = por %p368, %p369
      %p371 = scmp.ne.s32.totalorder %s363, %s365
      %p372 = scmp.eq.s32.totalorder %s35, 1
      %p373 = por %p371, %p372
      %p374 = scmp.ne.s32.totalorder %s365, %s366
      %p375 = scmp.eq.s32.totalorder %s35, 0
      %p376 = por %p374, %p375
      %p377 = scmp.ne.s32.totalorder %s365, %s366
      %p378 = scmp.eq.s32.totalorder %s36, 1
      %p379 = por %p377, %p378
      %p381 = scmp.ne.s32.totalorder %s366, %s380
      %p382 = scmp.eq.s32.totalorder %s36, 0
      %p383 = por %p381, %p382
      %s385 = sadd.s32 %s384, 1
      %p388 = scmp.eq.s32.totalorder %s30, 1
      %p389 = scmp.ne.s32.totalorder %s384, %s386
      %p390 = scmp.eq.s32.totalorder %s30, 0
      %p391 = por %p389, %p390
      %p392 = scmp.ne.s32.totalorder %s384, %s386
      %p393 = scmp.eq.s32.totalorder %s35, 1
      %p394 = por %p392, %p393
      %p395 = scmp.ne.s32.totalorder %s386, %s387
      %p396 = scmp.eq.s32.totalorder %s35, 0
      %p397 = por %p395, %p396
      %p398 = scmp.ne.s32.totalorder %s386, %s387
      %p399 = scmp.eq.s32.totalorder %s36, 1
      %p400 = por %p398, %p399
      %p402 = scmp.ne.s32.totalorder %s387, %s401
      %p403 = scmp.eq.s32.totalorder %s36, 0
      %p404 = por %p402, %p403
      %s406 = sadd.s32 %s405, 1
      %p409 = scmp.eq.s32.totalorder %s30, 1
      %p410 = scmp.ne.s32.totalorder %s405, %s407
      %p411 = scmp.eq.s32.totalorder %s30, 0
      %p412 = por %p410, %p411
      %p413 = scmp.ne.s32.totalorder %s405, %s407
      %p414 = scmp.eq.s32.totalorder %s35, 1
      %p415 = por %p413, %p414
      %p416 = scmp.ne.s32.totalorder %s407, %s408
      %p417 = scmp.eq.s32.totalorder %s35, 0
      %p418 = por %p416, %p417
      %p419 = scmp.ne.s32.totalorder %s407, %s408
      %p420 = scmp.eq.s32.totalorder %s36, 1
      %p421 = por %p419, %p420
      %p423 = scmp.ne.s32.totalorder %s408, %s422
      %p424 = scmp.eq.s32.totalorder %s36, 0
      %p425 = por %p423, %p424
      %s427 = sadd.s32 %s426, 1
      %p430 = scmp.eq.s32.totalorder %s30, 1
      %p431 = scmp.ne.s32.totalorder %s426, %s428
      %p432 = scmp.eq.s32.totalorder %s30, 0
      %p433 = por %p431, %p432
      %p434 = scmp.ne.s32.totalorder %s426, %s428
      %p435 = scmp.eq.s32.totalorder %s35, 1
      %p436 = por %p434, %p435
      %p437 = scmp.ne.s32.totalorder %s428, %s429
      %p438 = scmp.eq.s32.totalorder %s35, 0
      %p439 = por %p437, %p438
      %p440 = scmp.ne.s32.totalorder %s428, %s429
      %p441 = scmp.eq.s32.totalorder %s36, 1
      %p442 = por %p440, %p441
      %p444 = scmp.ne.s32.totalorder %s429, %s443
      %p445 = scmp.eq.s32.totalorder %s36, 0
      %p446 = por %p444, %p445
      %s448 = sadd.s32 %s447, 1
      %p451 = scmp.eq.s32.totalorder %s30, 1
      %p452 = scmp.ne.s32.totalorder %s447, %s449
      %p453 = scmp.eq.s32.totalorder %s30, 0
      %p454 = por %p452, %p453
      %p455 = scmp.ne.s32.totalorder %s447, %s449
      %p456 = scmp.eq.s32.totalorder %s35, 1
      %p457 = por %p455, %p456
      %p458 = scmp.ne.s32.totalorder %s449, %s450
      %p459 = scmp.eq.s32.totalorder %s35, 0
      %p460 = por %p458, %p459
      %p461 = scmp.ne.s32.totalorder %s449, %s450
      %p462 = scmp.eq.s32.totalorder %s36, 1
      %p463 = por %p461, %p462
      %p465 = scmp.ne.s32.totalorder %s450, %s464
      %p466 = scmp.eq.s32.totalorder %s36, 0
      %p467 = por %p465, %p466
      %s468 = ssub.s32 %s30, %s37
      %p469 = scmp.eq.s32.totalorder %s468, 0
      %s471 = sadd.s32 %s470, 1
      %s472 = scalar_select %p469, %s470, %s471
      %p475 = pneg %p469
      %p476 = scmp.eq.s32.totalorder %s30, 1
      %p477 = por %p475, %p476
      %p478 = scmp.ne.s32.totalorder %s470, %s473
      %p479 = scmp.eq.s32.totalorder %s30, 0
      %p480 = por %p478, %p479
      %p481 = scmp.ne.s32.totalorder %s470, %s473
      %p482 = scmp.eq.s32.totalorder %s35, 1
      %p483 = por %p481, %p482
      %p484 = scmp.ne.s32.totalorder %s473, %s474
      %p485 = scmp.eq.s32.totalorder %s35, 0
      %p486 = por %p484, %p485
      %p487 = scmp.ne.s32.totalorder %s473, %s474
      %p488 = scmp.eq.s32.totalorder %s36, 1
      %p489 = por %p487, %p488
      %p491 = scmp.ne.s32.totalorder %s474, %s490
      %p492 = scmp.eq.s32.totalorder %s36, 0
      %p493 = por %p491, %p492
      %p494 = scmp.le.s32.totalorder 1, %s30
      %p495 = scmp.lt.s32.totalorder %s30, 3
      %p496 = pnand %p494, %p495
      %p497 = pneg %p496
      // Predicated region
      $region9: #{fcb_forward.1} parent=5 // pred_check
        _
      $region10: #{fcb_forward.1} parent=5 // pred_check_branch
        %499 = sbr.rel (%p496) target = $region12
      $region11: #{fcb_forward.1} parent=5 // pred_region
        %s500 = ssub.s32 %s30, 1
        // Predicated region
        $region13: #{fcb_forward.1} parent=11 // pred_check
          %p501 = pneg %p103
        $region14: #{fcb_forward.1} parent=11 // pred_check_branch
          %503 = sbr.rel (%p501) target = $region16
        $region15: #{fcb_forward.1} parent=11 // pred_region
          _
        $region16: #{fcb_forward.1} parent=11 // pred_fallthru
          _
        // Predicated region
        $region17: #{fcb_forward.1} parent=11 // pred_check
          %p504 = pneg %p124
        $region18: #{fcb_forward.1} parent=11 // pred_check_branch
          %506 = sbr.rel (%p504) target = $region20
        $region19: #{fcb_forward.1} parent=11 // pred_region
          _
        $region20: #{fcb_forward.1} parent=11 // pred_fallthru
          _
        // Predicated region
        $region21: #{fcb_forward.1} parent=11 // pred_check
          %p507 = pneg %p145
        $region22: #{fcb_forward.1} parent=11 // pred_check_branch
          %509 = sbr.rel (%p507) target = $region24
        $region23: #{fcb_forward.1} parent=11 // pred_region
          _
        $region24: #{fcb_forward.1} parent=11 // pred_fallthru
          _
        // Predicated region
        $region25: #{fcb_forward.1} parent=11 // pred_check
          %p510 = pneg %p166
        $region26: #{fcb_forward.1} parent=11 // pred_check_branch
          %512 = sbr.rel (%p510) target = $region28
        $region27: #{fcb_forward.1} parent=11 // pred_region
          _
        $region28: #{fcb_forward.1} parent=11 // pred_fallthru
          _
        // Predicated region
        $region29: #{fcb_forward.1} parent=11 // pred_check
          %p513 = pneg %p187
        $region30: #{fcb_forward.1} parent=11 // pred_check_branch
          %515 = sbr.rel (%p513) target = $region32
        $region31: #{fcb_forward.1} parent=11 // pred_region
          _
        $region32: #{fcb_forward.1} parent=11 // pred_fallthru
          _
        // Predicated region
        $region33: #{fcb_forward.1} parent=11 // pred_check
          %p516 = pneg %p208
        $region34: #{fcb_forward.1} parent=11 // pred_check_branch
          %518 = sbr.rel (%p516) target = $region36
        $region35: #{fcb_forward.1} parent=11 // pred_region
          _
        $region36: #{fcb_forward.1} parent=11 // pred_fallthru
          _
        // Predicated region
        $region37: #{fcb_forward.1} parent=11 // pred_check
          %p519 = pneg %p229
        $region38: #{fcb_forward.1} parent=11 // pred_check_branch
          %521 = sbr.rel (%p519) target = $region40
        $region39: #{fcb_forward.1} parent=11 // pred_region
          _
        $region40: #{fcb_forward.1} parent=11 // pred_fallthru
          _
        // Predicated region
        $region41: #{fcb_forward.1} parent=11 // pred_check
          %p522 = pneg %p250
        $region42: #{fcb_forward.1} parent=11 // pred_check_branch
          %524 = sbr.rel (%p522) target = $region44
        $region43: #{fcb_forward.1} parent=11 // pred_region
          _
        $region44: #{fcb_forward.1} parent=11 // pred_fallthru
          _
        // Predicated region
        $region45: #{fcb_forward.1} parent=11 // pred_check
          %p525 = pneg %p271
        $region46: #{fcb_forward.1} parent=11 // pred_check_branch
          %527 = sbr.rel (%p525) target = $region48
        $region47: #{fcb_forward.1} parent=11 // pred_region
          _
        $region48: #{fcb_forward.1} parent=11 // pred_fallthru
          _
        // Predicated region
        $region49: #{fcb_forward.1} parent=11 // pred_check
          %p528 = pneg %p292
        $region50: #{fcb_forward.1} parent=11 // pred_check_branch
          %530 = sbr.rel (%p528) target = $region52
        $region51: #{fcb_forward.1} parent=11 // pred_region
          _
        $region52: #{fcb_forward.1} parent=11 // pred_fallthru
          _
        // Predicated region
        $region53: #{fcb_forward.1} parent=11 // pred_check
          %p531 = pneg %p313
        $region54: #{fcb_forward.1} parent=11 // pred_check_branch
          %533 = sbr.rel (%p531) target = $region56
        $region55: #{fcb_forward.1} parent=11 // pred_region
          _
        $region56: #{fcb_forward.1} parent=11 // pred_fallthru
          _
        // Predicated region
        $region57: #{fcb_forward.1} parent=11 // pred_check
          %p534 = pneg %p334
        $region58: #{fcb_forward.1} parent=11 // pred_check_branch
          %536 = sbr.rel (%p534) target = $region60
        $region59: #{fcb_forward.1} parent=11 // pred_region
          _
        $region60: #{fcb_forward.1} parent=11 // pred_fallthru
          _
        // Predicated region
        $region61: #{fcb_forward.1} parent=11 // pred_check
          %p537 = pneg %p355
        $region62: #{fcb_forward.1} parent=11 // pred_check_branch
          %539 = sbr.rel (%p537) target = $region64
        $region63: #{fcb_forward.1} parent=11 // pred_region
          _
        $region64: #{fcb_forward.1} parent=11 // pred_fallthru
          _
        // Predicated region
        $region65: #{fcb_forward.1} parent=11 // pred_check
          %p540 = pneg %p376
        $region66: #{fcb_forward.1} parent=11 // pred_check_branch
          %542 = sbr.rel (%p540) target = $region68
        $region67: #{fcb_forward.1} parent=11 // pred_region
          _
        $region68: #{fcb_forward.1} parent=11 // pred_fallthru
          _
        // Predicated region
        $region69: #{fcb_forward.1} parent=11 // pred_check
          %p543 = pneg %p397
        $region70: #{fcb_forward.1} parent=11 // pred_check_branch
          %545 = sbr.rel (%p543) target = $region72
        $region71: #{fcb_forward.1} parent=11 // pred_region
          _
        $region72: #{fcb_forward.1} parent=11 // pred_fallthru
          _
        // Predicated region
        $region73: #{fcb_forward.1} parent=11 // pred_check
          %p546 = pneg %p418
        $region74: #{fcb_forward.1} parent=11 // pred_check_branch
          %548 = sbr.rel (%p546) target = $region76
        $region75: #{fcb_forward.1} parent=11 // pred_region
          _
        $region76: #{fcb_forward.1} parent=11 // pred_fallthru
          _
        // Predicated region
        $region77: #{fcb_forward.1} parent=11 // pred_check
          %p549 = pneg %p439
        $region78: #{fcb_forward.1} parent=11 // pred_check_branch
          %551 = sbr.rel (%p549) target = $region80
        $region79: #{fcb_forward.1} parent=11 // pred_region
          _
        $region80: #{fcb_forward.1} parent=11 // pred_fallthru
          _
        // Predicated region
        $region81: #{fcb_forward.1} parent=11 // pred_check
          %p552 = pneg %p460
        $region82: #{fcb_forward.1} parent=11 // pred_check_branch
          %554 = sbr.rel (%p552) target = $region84
        $region83: #{fcb_forward.1} parent=11 // pred_region
          _
        $region84: #{fcb_forward.1} parent=11 // pred_fallthru
          _
      $region12: #{fcb_forward.1} parent=5 // pred_fallthru
        _
      %p555 = scmp.lt.s32.totalorder %s30, 2
      // Predicated region
      $region85: #{fcb_forward.1} parent=5 // pred_check
        %p556 = pneg %p555
      $region86: #{fcb_forward.1} parent=5 // pred_check_branch
        %558 = sbr.rel (%p556) target = $region88
      $region87: #{fcb_forward.1} parent=5 // pred_region
        // Predicated region
        $region89: #{fcb_forward.1} parent=87 // pred_check
          %p559 = pneg %p50
        $region90: #{fcb_forward.1} parent=87 // pred_check_branch
          %561 = sbr.rel (%p559) target = $region92
        $region91: #{fcb_forward.1} parent=87 // pred_region
          %p562 = scmp.lt.s32.totalorder %s30, 1
          %s563 = scalar_select %p562, %s30, 1
          %s564 = smul.addr %s563, 32
          %s565 = smul.addr %s564, 8
          %s566 = scalar_lea.vmem %s0, %s565
        $region92: #{fcb_forward.1} parent=87 // pred_fallthru
          _
        // Predicated region
        $region93: #{fcb_forward.1} parent=87 // pred_check
          %p567 = pneg %p76
        $region94: #{fcb_forward.1} parent=87 // pred_check_branch
          %569 = sbr.rel (%p567) target = $region96
        $region95: #{fcb_forward.1} parent=87 // pred_region
          %p570 = scmp.lt.s32.totalorder %s30, 1
          %s571 = scalar_select %p570, %s30, 1
          %s572 = smul.addr %s571, 8
          %s573 = smul.addr %s572, 8
          %s574 = scalar_lea.vmem %s1, %s573
        $region96: #{fcb_forward.1} parent=87 // pred_fallthru
          _
      $region88: #{fcb_forward.1} parent=5 // pred_fallthru
        _
      %p575 = scmp.le.s32.totalorder 1, %s30
      %p576 = scmp.lt.s32.totalorder %s30, 3
      %p577 = pnand %p575, %p576
      %p578 = pneg %p577
      // Predicated region
      $region97: #{fcb_forward.1} parent=5 // pred_check
        _
      $region98: #{fcb_forward.1} parent=5 // pred_check_branch
        %580 = sbr.rel (%p577) target = $region100
      $region99: #{fcb_forward.1} parent=5 // pred_region
        %s581 = ssub.s32 %s30, 1
        %p582 = scmp.lt.s32.totalorder %s35, 1
        %s583 = scalar_select %p582, %s35, 1
        %s584 = smul.addr %s583, 32
        %s585 = smul.addr %s584, 8
        %s586 = scalar_lea.vmem %s0, %s585
        %p587 = pneg %p56
        %p588 = pneg %p53
        %p589 = scmp.lt.s32.totalorder %s35, 1
        %s590 = scalar_select %p589, %s35, 1
        %s591 = smul.addr %s590, 8
        %s592 = smul.addr %s591, 8
        %s593 = scalar_lea.vmem %s1, %s592
        %p594 = pneg %p82
        %p595 = pneg %p79
        %p596 = pneg %p103
        %p597 = pneg %p100
        %p598 = pneg %p124
        %p599 = pneg %p121
        %p600 = pneg %p145
        %p601 = pneg %p142
        %p602 = pneg %p166
        %p603 = pneg %p163
        %p604 = pneg %p187
        %p605 = pneg %p184
        %p606 = pneg %p208
        %p607 = pneg %p205
        %p608 = pneg %p229
        %p609 = pneg %p226
        %p610 = pneg %p250
        %p611 = pneg %p247
        %p612 = pneg %p271
        %p613 = pneg %p268
        %p614 = pneg %p292
        %p615 = pneg %p289
        %p616 = pneg %p313
        %p617 = pneg %p310
        %p618 = pneg %p334
        %p619 = pneg %p331
        %p620 = pneg %p355
        %p621 = pneg %p352
        %p622 = pneg %p376
        %p623 = pneg %p373
        %p624 = pneg %p397
        %p625 = pneg %p394
        %p626 = pneg %p418
        %p627 = pneg %p415
        %p628 = pneg %p439
        %p629 = pneg %p436
        %p630 = pneg %p460
        %p631 = pneg %p457
        %p632 = pneg %p486
        %p633 = pneg %p483
        %s634 = sand.u32 %s473, 1
        %s635 = scalar_lea.sflag [#allocation4], %s634
        %s636 = sand.u32 %s473, 1
        %s637 = smul.addr %s636, 64
        %s638 = scalar_lea.vmem [#allocation3], %s637
        %p639 = scmp.lt.s32.totalorder %s35, 1
        %s640 = scalar_select %p639, %s35, 1
        %s641 = smul.addr %s640, 32
        %s642 = smul.addr %s641, 8
        %s643 = scalar_lea.vmem %s0, %s642
        %p644 = scmp.lt.s32.totalorder %s35, 1
        %s645 = scalar_select %p644, %s35, 1
        %s646 = smul.addr %s645, 8
        %s647 = smul.addr %s646, 8
        %s648 = scalar_lea.vmem %s1, %s647
        %v650 = vld [vmem:[%s2] sm:$0x1]
        %v651 = vld [vmem:[%s643] sm:$0xff]
        %v652 = vld [vmem:[%s643 + $0x8] sm:$0xff]
        %v653 = vld [vmem:[%s643 + $0x10] sm:$0xff]
        %v654 = vld [vmem:[%s643 + $0x18] sm:$0xff]
        %v655 = vld [vmem:[%s643 + $0x20] sm:$0xff]
        %v656 = vld [vmem:[%s643 + $0x28] sm:$0xff]
        %v657 = vld [vmem:[%s643 + $0x30] sm:$0xff]
        %v658 = vld [vmem:[%s643 + $0x38] sm:$0xff]
        %vm659 = vcmask 523264
        %v660 = vsel %vm659, %v651, 0.0
        %661 = vadd.xlane.f32.xlu0 %v660
        %v662 = vpop.xlane.xlu0 %661
        %v663 = vsel %vm659, %v652, 0.0
        %664 = vadd.xlane.f32.xlu0 %v663
        %v665 = vpop.xlane.xlu0 %664
        %v666 = vsel %vm659, %v653, 0.0
        %667 = vadd.xlane.f32.xlu0 %v666
        %v668 = vpop.xlane.xlu0 %667
        %v669 = vsel %vm659, %v654, 0.0
        %670 = vadd.xlane.f32.xlu0 %v669
        %v671 = vpop.xlane.xlu0 %670
        %v672 = vsel %vm659, %v655, 0.0
        %673 = vadd.xlane.f32.xlu0 %v672
        %v674 = vpop.xlane.xlu0 %673
        %v675 = vsel %vm659, %v656, 0.0
        %676 = vadd.xlane.f32.xlu0 %v675
        %v677 = vpop.xlane.xlu0 %676
        %v678 = vsel %vm659, %v657, 0.0
        %679 = vadd.xlane.f32.xlu0 %v678
        %v680 = vpop.xlane.xlu0 %679
        %v681 = vsel %vm659, %v658, 0.0
        %682 = vadd.xlane.f32.xlu0 %v681
        %v683 = vpop.xlane.xlu0 %682
        %v684 = vrcp.pop 64.0
        %v685 = vmul.f32 %v662, %v684
        %v686 = vmul.f32 %v665, %v684
        %v687 = vmul.f32 %v668, %v684
        %v688 = vmul.f32 %v671, %v684
        %v689 = vmul.f32 %v674, %v684
        %v690 = vmul.f32 %v677, %v684
        %v691 = vmul.f32 %v680, %v684
        %v692 = vmul.f32 %v683, %v684
        %v693 = vsub.f32 %v651, %v685
        %v694 = vsub.f32 %v652, %v686
        %v695 = vsub.f32 %v653, %v687
        %v696 = vsub.f32 %v654, %v688
        %v697 = vsub.f32 %v655, %v689
        %v698 = vsub.f32 %v656, %v690
        %v699 = vsub.f32 %v657, %v691
        %v700 = vsub.f32 %v658, %v692
        %v701 = vmul.f32 %v693, %v693
        %v702 = vmul.f32 %v694, %v694
        %v703 = vmul.f32 %v695, %v695
        %v704 = vmul.f32 %v696, %v696
        %v705 = vmul.f32 %v697, %v697
        %v706 = vmul.f32 %v698, %v698
        %v707 = vmul.f32 %v699, %v699
        %v708 = vmul.f32 %v700, %v700
        %v709 = vsel %vm659, %v701, 0.0
        %710 = vadd.xlane.f32.xlu0 %v709
        %v711 = vpop.xlane.xlu0 %710
        %v712 = vsel %vm659, %v702, 0.0
        %713 = vadd.xlane.f32.xlu0 %v712
        %v714 = vpop.xlane.xlu0 %713
        %v715 = vsel %vm659, %v703, 0.0
        %716 = vadd.xlane.f32.xlu0 %v715
        %v717 = vpop.xlane.xlu0 %716
        %v718 = vsel %vm659, %v704, 0.0
        %719 = vadd.xlane.f32.xlu0 %v718
        %v720 = vpop.xlane.xlu0 %719
        %v721 = vsel %vm659, %v705, 0.0
        %722 = vadd.xlane.f32.xlu0 %v721
        %v723 = vpop.xlane.xlu0 %722
        %v724 = vsel %vm659, %v706, 0.0
        %725 = vadd.xlane.f32.xlu0 %v724
        %v726 = vpop.xlane.xlu0 %725
        %v727 = vsel %vm659, %v707, 0.0
        %728 = vadd.xlane.f32.xlu0 %v727
        %v729 = vpop.xlane.xlu0 %728
        %v730 = vsel %vm659, %v708, 0.0
        %731 = vadd.xlane.f32.xlu0 %v730
        %v732 = vpop.xlane.xlu0 %731
        %v733 = vmul.f32 %v711, %v684
        %v734 = vmul.f32 %v714, %v684
        %v735 = vmul.f32 %v717, %v684
        %v736 = vmul.f32 %v720, %v684
        %v737 = vmul.f32 %v723, %v684
        %v738 = vmul.f32 %v726, %v684
        %v739 = vmul.f32 %v729, %v684
        %v740 = vmul.f32 %v732, %v684
        %v741 = vadd.f32 %v733, 1e-05
        %v742 = vadd.f32 %v734, 1e-05
        %v743 = vadd.f32 %v735, 1e-05
        %v744 = vadd.f32 %v736, 1e-05
        %v745 = vadd.f32 %v737, 1e-05
        %v746 = vadd.f32 %v738, 1e-05
        %v747 = vadd.f32 %v739, 1e-05
        %v748 = vadd.f32 %v740, 1e-05
        %v749 = vrsqrt.pop %v741
        %v750 = vrsqrt.pop %v742
        %v751 = vrsqrt.pop %v743
        %v752 = vrsqrt.pop %v744
        %v753 = vrsqrt.pop %v745
        %v754 = vrsqrt.pop %v746
        %v755 = vrsqrt.pop %v747
        %v756 = vrsqrt.pop %v748
        %v757 = vmul.f32 %v651, %v749
        %v758 = vmul.f32 %v652, %v750
        %v759 = vmul.f32 %v653, %v751
        %v760 = vmul.f32 %v654, %v752
        %v761 = vmul.f32 %v655, %v753
        %v762 = vmul.f32 %v656, %v754
        %v763 = vmul.f32 %v657, %v755
        %v764 = vmul.f32 %v658, %v756
        %v766 = vlaneseq
        %v767 = vshrl.u32 %v766, 7
        %v768 = vsub.s32 0, %v767
        %v769 = vrot.slane %v650, %v768
        %v771 = vmul.f32 %v757, %v769
        %v772 = vmul.f32 %v758, %v769
        %v773 = vmul.f32 %v759, %v769
        %v774 = vmul.f32 %v760, %v769
        %v775 = vmul.f32 %v761, %v769
        %v776 = vmul.f32 %v762, %v769
        %v777 = vmul.f32 %v763, %v769
        %v778 = vmul.f32 %v764, %v769
        %s779 = scalar_lea.vmem %s643, 64
        %v780 = vld [vmem:[%s779] sm:$0xff]
        %v781 = vld [vmem:[%s779 + $0x8] sm:$0xff]
        %v782 = vld [vmem:[%s779 + $0x10] sm:$0xff]
        %v783 = vld [vmem:[%s779 + $0x18] sm:$0xff]
        %v784 = vld [vmem:[%s779 + $0x20] sm:$0xff]
        %v785 = vld [vmem:[%s779 + $0x28] sm:$0xff]
        %v786 = vld [vmem:[%s779 + $0x30] sm:$0xff]
        %v787 = vld [vmem:[%s779 + $0x38] sm:$0xff]
        %v788 = vsel %vm659, %v780, 0.0
        %789 = vadd.xlane.f32.xlu0 %v788
        %v790 = vpop.xlane.xlu0 %789
        %v791 = vsel %vm659, %v781, 0.0
        %792 = vadd.xlane.f32.xlu0 %v791
        %v793 = vpop.xlane.xlu0 %792
        %v794 = vsel %vm659, %v782, 0.0
        %795 = vadd.xlane.f32.xlu0 %v794
        %v796 = vpop.xlane.xlu0 %795
        %v797 = vsel %vm659, %v783, 0.0
        %798 = vadd.xlane.f32.xlu0 %v797
        %v799 = vpop.xlane.xlu0 %798
        %v800 = vsel %vm659, %v784, 0.0
        %801 = vadd.xlane.f32.xlu0 %v800
        %v802 = vpop.xlane.xlu0 %801
        %v803 = vsel %vm659, %v785, 0.0
        %804 = vadd.xlane.f32.xlu0 %v803
        %v805 = vpop.xlane.xlu0 %804
        %v806 = vsel %vm659, %v786, 0.0
        %807 = vadd.xlane.f32.xlu0 %v806
        %v808 = vpop.xlane.xlu0 %807
        %v809 = vsel %vm659, %v787, 0.0
        %810 = vadd.xlane.f32.xlu0 %v809
        %v811 = vpop.xlane.xlu0 %810
        %v812 = vmul.f32 %v790, %v684
        %v813 = vmul.f32 %v793, %v684
        %v814 = vmul.f32 %v796, %v684
        %v815 = vmul.f32 %v799, %v684
        %v816 = vmul.f32 %v802, %v684
        %v817 = vmul.f32 %v805, %v684
        %v818 = vmul.f32 %v808, %v684
        %v819 = vmul.f32 %v811, %v684
        %v820 = vsub.f32 %v780, %v812
        %v821 = vsub.f32 %v781, %v813
        %v822 = vsub.f32 %v782, %v814
        %v823 = vsub.f32 %v783, %v815
        %v824 = vsub.f32 %v784, %v816
        %v825 = vsub.f32 %v785, %v817
        %v826 = vsub.f32 %v786, %v818
        %v827 = vsub.f32 %v787, %v819
        %v828 = vmul.f32 %v820, %v820
        %v829 = vmul.f32 %v821, %v821
        %v830 = vmul.f32 %v822, %v822
        %v831 = vmul.f32 %v823, %v823
        %v832 = vmul.f32 %v824, %v824
        %v833 = vmul.f32 %v825, %v825
        %v834 = vmul.f32 %v826, %v826
        %v835 = vmul.f32 %v827, %v827
        %v836 = vsel %vm659, %v828, 0.0
        %837 = vadd.xlane.f32.xlu0 %v836
        %v838 = vpop.xlane.xlu0 %837
        %v839 = vsel %vm659, %v829, 0.0
        %840 = vadd.xlane.f32.xlu0 %v839
        %v841 = vpop.xlane.xlu0 %840
        %v842 = vsel %vm659, %v830, 0.0
        %843 = vadd.xlane.f32.xlu0 %v842
        %v844 = vpop.xlane.xlu0 %843
        %v845 = vsel %vm659, %v831, 0.0
        %846 = vadd.xlane.f32.xlu0 %v845
        %v847 = vpop.xlane.xlu0 %846
        %v848 = vsel %vm659, %v832, 0.0
        %849 = vadd.xlane.f32.xlu0 %v848
        %v850 = vpop.xlane.xlu0 %849
        %v851 = vsel %vm659, %v833, 0.0
        %852 = vadd.xlane.f32.xlu0 %v851
        %v853 = vpop.xlane.xlu0 %852
        %v854 = vsel %vm659, %v834, 0.0
        %855 = vadd.xlane.f32.xlu0 %v854
        %v856 = vpop.xlane.xlu0 %855
        %v857 = vsel %vm659, %v835, 0.0
        %858 = vadd.xlane.f32.xlu0 %v857
        %v859 = vpop.xlane.xlu0 %858
        %v860 = vmul.f32 %v838, %v684
        %v861 = vmul.f32 %v841, %v684
        %v862 = vmul.f32 %v844, %v684
        %v863 = vmul.f32 %v847, %v684
        %v864 = vmul.f32 %v850, %v684
        %v865 = vmul.f32 %v853, %v684
        %v866 = vmul.f32 %v856, %v684
        %v867 = vmul.f32 %v859, %v684
        %v868 = vadd.f32 %v860, 1e-05
        %v869 = vadd.f32 %v861, 1e-05
        %v870 = vadd.f32 %v862, 1e-05
        %v871 = vadd.f32 %v863, 1e-05
        %v872 = vadd.f32 %v864, 1e-05
        %v873 = vadd.f32 %v865, 1e-05
        %v874 = vadd.f32 %v866, 1e-05
        %v875 = vadd.f32 %v867, 1e-05
        %v876 = vrsqrt.pop %v868
        %v877 = vrsqrt.pop %v869
        %v878 = vrsqrt.pop %v870
        %v879 = vrsqrt.pop %v871
        %v880 = vrsqrt.pop %v872
        %v881 = vrsqrt.pop %v873
        %v882 = vrsqrt.pop %v874
        %v883 = vrsqrt.pop %v875
        %v884 = vmul.f32 %v780, %v876
        %v885 = vmul.f32 %v781, %v877
        %v886 = vmul.f32 %v782, %v878
        %v887 = vmul.f32 %v783, %v879
        %v888 = vmul.f32 %v784, %v880
        %v889 = vmul.f32 %v785, %v881
        %v890 = vmul.f32 %v786, %v882
        %v891 = vmul.f32 %v787, %v883
        %v892 = vmul.f32 %v884, %v769
        %v893 = vmul.f32 %v885, %v769
        %v894 = vmul.f32 %v886, %v769
        %v895 = vmul.f32 %v887, %v769
        %v896 = vmul.f32 %v888, %v769
        %v897 = vmul.f32 %v889, %v769
        %v898 = vmul.f32 %v890, %v769
        %v899 = vmul.f32 %v891, %v769
        %v900 = vadd.f32 %v771, %v892
        %v901 = vadd.f32 %v772, %v893
        %v902 = vadd.f32 %v773, %v894
        %v903 = vadd.f32 %v774, %v895
        %v904 = vadd.f32 %v775, %v896
        %v905 = vadd.f32 %v776, %v897
        %v906 = vadd.f32 %v777, %v898
        %v907 = vadd.f32 %v778, %v899
        %s908 = scalar_lea.vmem %s643, 128
        %v909 = vld [vmem:[%s908] sm:$0xff]
        %v910 = vld [vmem:[%s908 + $0x8] sm:$0xff]
        %v911 = vld [vmem:[%s908 + $0x10] sm:$0xff]
        %v912 = vld [vmem:[%s908 + $0x18] sm:$0xff]
        %v913 = vld [vmem:[%s908 + $0x20] sm:$0xff]
        %v914 = vld [vmem:[%s908 + $0x28] sm:$0xff]
        %v915 = vld [vmem:[%s908 + $0x30] sm:$0xff]
        %v916 = vld [vmem:[%s908 + $0x38] sm:$0xff]
        %v917 = vsel %vm659, %v909, 0.0
        %918 = vadd.xlane.f32.xlu0 %v917
        %v919 = vpop.xlane.xlu0 %918
        %v920 = vsel %vm659, %v910, 0.0
        %921 = vadd.xlane.f32.xlu0 %v920
        %v922 = vpop.xlane.xlu0 %921
        %v923 = vsel %vm659, %v911, 0.0
        %924 = vadd.xlane.f32.xlu0 %v923
        %v925 = vpop.xlane.xlu0 %924
        %v926 = vsel %vm659, %v912, 0.0
        %927 = vadd.xlane.f32.xlu0 %v926
        %v928 = vpop.xlane.xlu0 %927
        %v929 = vsel %vm659, %v913, 0.0
        %930 = vadd.xlane.f32.xlu0 %v929
        %v931 = vpop.xlane.xlu0 %930
        %v932 = vsel %vm659, %v914, 0.0
        %933 = vadd.xlane.f32.xlu0 %v932
        %v934 = vpop.xlane.xlu0 %933
        %v935 = vsel %vm659, %v915, 0.0
        %936 = vadd.xlane.f32.xlu0 %v935
        %v937 = vpop.xlane.xlu0 %936
        %v938 = vsel %vm659, %v916, 0.0
        %939 = vadd.xlane.f32.xlu0 %v938
        %v940 = vpop.xlane.xlu0 %939
        %v941 = vmul.f32 %v919, %v684
        %v942 = vmul.f32 %v922, %v684
        %v943 = vmul.f32 %v925, %v684
        %v944 = vmul.f32 %v928, %v684
        %v945 = vmul.f32 %v931, %v684
        %v946 = vmul.f32 %v934, %v684
        %v947 = vmul.f32 %v937, %v684
        %v948 = vmul.f32 %v940, %v684
        %v949 = vsub.f32 %v909, %v941
        %v950 = vsub.f32 %v910, %v942
        %v951 = vsub.f32 %v911, %v943
        %v952 = vsub.f32 %v912, %v944
        %v953 = vsub.f32 %v913, %v945
        %v954 = vsub.f32 %v914, %v946
        %v955 = vsub.f32 %v915, %v947
        %v956 = vsub.f32 %v916, %v948
        %v957 = vmul.f32 %v949, %v949
        %v958 = vmul.f32 %v950, %v950
        %v959 = vmul.f32 %v951, %v951
        %v960 = vmul.f32 %v952, %v952
        %v961 = vmul.f32 %v953, %v953
        %v962 = vmul.f32 %v954, %v954
        %v963 = vmul.f32 %v955, %v955
        %v964 = vmul.f32 %v956, %v956
        %v965 = vsel %vm659, %v957, 0.0
        %966 = vadd.xlane.f32.xlu0 %v965
        %v967 = vpop.xlane.xlu0 %966
        %v968 = vsel %vm659, %v958, 0.0
        %969 = vadd.xlane.f32.xlu0 %v968
        %v970 = vpop.xlane.xlu0 %969
        %v971 = vsel %vm659, %v959, 0.0
        %972 = vadd.xlane.f32.xlu0 %v971
        %v973 = vpop.xlane.xlu0 %972
        %v974 = vsel %vm659, %v960, 0.0
        %975 = vadd.xlane.f32.xlu0 %v974
        %v976 = vpop.xlane.xlu0 %975
        %v977 = vsel %vm659, %v961, 0.0
        %978 = vadd.xlane.f32.xlu0 %v977
        %v979 = vpop.xlane.xlu0 %978
        %v980 = vsel %vm659, %v962, 0.0
        %981 = vadd.xlane.f32.xlu0 %v980
        %v982 = vpop.xlane.xlu0 %981
        %v983 = vsel %vm659, %v963, 0.0
        %984 = vadd.xlane.f32.xlu0 %v983
        %v985 = vpop.xlane.xlu0 %984
        %v986 = vsel %vm659, %v964, 0.0
        %987 = vadd.xlane.f32.xlu0 %v986
        %v988 = vpop.xlane.xlu0 %987
        %v989 = vmul.f32 %v967, %v684
        %v990 = vmul.f32 %v970, %v684
        %v991 = vmul.f32 %v973, %v684
        %v992 = vmul.f32 %v976, %v684
        %v993 = vmul.f32 %v979, %v684
        %v994 = vmul.f32 %v982, %v684
        %v995 = vmul.f32 %v985, %v684
        %v996 = vmul.f32 %v988, %v684
        %v997 = vadd.f32 %v989, 1e-05
        %v998 = vadd.f32 %v990, 1e-05
        %v999 = vadd.f32 %v991, 1e-05
        %v1000 = vadd.f32 %v992, 1e-05
        %v1001 = vadd.f32 %v993, 1e-05
        %v1002 = vadd.f32 %v994, 1e-05
        %v1003 = vadd.f32 %v995, 1e-05
        %v1004 = vadd.f32 %v996, 1e-05
        %v1005 = vrsqrt.pop %v997
        %v1006 = vrsqrt.pop %v998
        %v1007 = vrsqrt.pop %v999
        %v1008 = vrsqrt.pop %v1000
        %v1009 = vrsqrt.pop %v1001
        %v1010 = vrsqrt.pop %v1002
        %v1011 = vrsqrt.pop %v1003
        %v1012 = vrsqrt.pop %v1004
        %v1013 = vmul.f32 %v909, %v1005
        %v1014 = vmul.f32 %v910, %v1006
        %v1015 = vmul.f32 %v911, %v1007
        %v1016 = vmul.f32 %v912, %v1008
        %v1017 = vmul.f32 %v913, %v1009
        %v1018 = vmul.f32 %v914, %v1010
        %v1019 = vmul.f32 %v915, %v1011
        %v1020 = vmul.f32 %v916, %v1012
        %v1021 = vmul.f32 %v1013, %v769
        %v1022 = vmul.f32 %v1014, %v769
        %v1023 = vmul.f32 %v1015, %v769
        %v1024 = vmul.f32 %v1016, %v769
        %v1025 = vmul.f32 %v1017, %v769
        %v1026 = vmul.f32 %v1018, %v769
        %v1027 = vmul.f32 %v1019, %v769
        %v1028 = vmul.f32 %v1020, %v769
        %v1029 = vadd.f32 %v900, %v1021
        %v1030 = vadd.f32 %v901, %v1022
        %v1031 = vadd.f32 %v902, %v1023
        %v1032 = vadd.f32 %v903, %v1024
        %v1033 = vadd.f32 %v904, %v1025
        %v1034 = vadd.f32 %v905, %v1026
        %v1035 = vadd.f32 %v906, %v1027
        %v1036 = vadd.f32 %v907, %v1028
        %s1037 = scalar_lea.vmem %s643, 192
        %v1038 = vld [vmem:[%s1037] sm:$0xff]
        %v1039 = vld [vmem:[%s1037 + $0x8] sm:$0xff]
        %v1040 = vld [vmem:[%s1037 + $0x10] sm:$0xff]
        %v1041 = vld [vmem:[%s1037 + $0x18] sm:$0xff]
        %v1042 = vld [vmem:[%s1037 + $0x20] sm:$0xff]
        %v1043 = vld [vmem:[%s1037 + $0x28] sm:$0xff]
        %v1044 = vld [vmem:[%s1037 + $0x30] sm:$0xff]
        %v1045 = vld [vmem:[%s1037 + $0x38] sm:$0xff]
        %v1046 = vsel %vm659, %v1038, 0.0
        %1047 = vadd.xlane.f32.xlu0 %v1046
        %v1048 = vpop.xlane.xlu0 %1047
        %v1049 = vsel %vm659, %v1039, 0.0
        %1050 = vadd.xlane.f32.xlu0 %v1049
        %v1051 = vpop.xlane.xlu0 %1050
        %v1052 = vsel %vm659, %v1040, 0.0
        %1053 = vadd.xlane.f32.xlu0 %v1052
        %v1054 = vpop.xlane.xlu0 %1053
        %v1055 = vsel %vm659, %v1041, 0.0
        %1056 = vadd.xlane.f32.xlu0 %v1055
        %v1057 = vpop.xlane.xlu0 %1056
        %v1058 = vsel %vm659, %v1042, 0.0
        %1059 = vadd.xlane.f32.xlu0 %v1058
        %v1060 = vpop.xlane.xlu0 %1059
        %v1061 = vsel %vm659, %v1043, 0.0
        %1062 = vadd.xlane.f32.xlu0 %v1061
        %v1063 = vpop.xlane.xlu0 %1062
        %v1064 = vsel %vm659, %v1044, 0.0
        %1065 = vadd.xlane.f32.xlu0 %v1064
        %v1066 = vpop.xlane.xlu0 %1065
        %v1067 = vsel %vm659, %v1045, 0.0
        %1068 = vadd.xlane.f32.xlu0 %v1067
        %v1069 = vpop.xlane.xlu0 %1068
        %v1070 = vmul.f32 %v1048, %v684
        %v1071 = vmul.f32 %v1051, %v684
        %v1072 = vmul.f32 %v1054, %v684
        %v1073 = vmul.f32 %v1057, %v684
        %v1074 = vmul.f32 %v1060, %v684
        %v1075 = vmul.f32 %v1063, %v684
        %v1076 = vmul.f32 %v1066, %v684
        %v1077 = vmul.f32 %v1069, %v684
        %v1078 = vsub.f32 %v1038, %v1070
        %v1079 = vsub.f32 %v1039, %v1071
        %v1080 = vsub.f32 %v1040, %v1072
        %v1081 = vsub.f32 %v1041, %v1073
        %v1082 = vsub.f32 %v1042, %v1074
        %v1083 = vsub.f32 %v1043, %v1075
        %v1084 = vsub.f32 %v1044, %v1076
        %v1085 = vsub.f32 %v1045, %v1077
        %v1086 = vmul.f32 %v1078, %v1078
        %v1087 = vmul.f32 %v1079, %v1079
        %v1088 = vmul.f32 %v1080, %v1080
        %v1089 = vmul.f32 %v1081, %v1081
        %v1090 = vmul.f32 %v1082, %v1082
        %v1091 = vmul.f32 %v1083, %v1083
        %v1092 = vmul.f32 %v1084, %v1084
        %v1093 = vmul.f32 %v1085, %v1085
        %v1094 = vsel %vm659, %v1086, 0.0
        %1095 = vadd.xlane.f32.xlu0 %v1094
        %v1096 = vpop.xlane.xlu0 %1095
        %v1097 = vsel %vm659, %v1087, 0.0
        %1098 = vadd.xlane.f32.xlu0 %v1097
        %v1099 = vpop.xlane.xlu0 %1098
        %v1100 = vsel %vm659, %v1088, 0.0
        %1101 = vadd.xlane.f32.xlu0 %v1100
        %v1102 = vpop.xlane.xlu0 %1101
        %v1103 = vsel %vm659, %v1089, 0.0
        %1104 = vadd.xlane.f32.xlu0 %v1103
        %v1105 = vpop.xlane.xlu0 %1104
        %v1106 = vsel %vm659, %v1090, 0.0
        %1107 = vadd.xlane.f32.xlu0 %v1106
        %v1108 = vpop.xlane.xlu0 %1107
        %v1109 = vsel %vm659, %v1091, 0.0
        %1110 = vadd.xlane.f32.xlu0 %v1109
        %v1111 = vpop.xlane.xlu0 %1110
        %v1112 = vsel %vm659, %v1092, 0.0
        %1113 = vadd.xlane.f32.xlu0 %v1112
        %v1114 = vpop.xlane.xlu0 %1113
        %v1115 = vsel %vm659, %v1093, 0.0
        %1116 = vadd.xlane.f32.xlu0 %v1115
        %v1117 = vpop.xlane.xlu0 %1116
        %v1118 = vmul.f32 %v1096, %v684
        %v1119 = vmul.f32 %v1099, %v684
        %v1120 = vmul.f32 %v1102, %v684
        %v1121 = vmul.f32 %v1105, %v684
        %v1122 = vmul.f32 %v1108, %v684
        %v1123 = vmul.f32 %v1111, %v684
        %v1124 = vmul.f32 %v1114, %v684
        %v1125 = vmul.f32 %v1117, %v684
        %v1126 = vadd.f32 %v1118, 1e-05
        %v1127 = vadd.f32 %v1119, 1e-05
        %v1128 = vadd.f32 %v1120, 1e-05
        %v1129 = vadd.f32 %v1121, 1e-05
        %v1130 = vadd.f32 %v1122, 1e-05
        %v1131 = vadd.f32 %v1123, 1e-05
        %v1132 = vadd.f32 %v1124, 1e-05
        %v1133 = vadd.f32 %v1125, 1e-05
        %v1134 = vrsqrt.pop %v1126
        %v1135 = vrsqrt.pop %v1127
        %v1136 = vrsqrt.pop %v1128
        %v1137 = vrsqrt.pop %v1129
        %v1138 = vrsqrt.pop %v1130
        %v1139 = vrsqrt.pop %v1131
        %v1140 = vrsqrt.pop %v1132
        %v1141 = vrsqrt.pop %v1133
        %v1142 = vmul.f32 %v1038, %v1134
        %v1143 = vmul.f32 %v1039, %v1135
        %v1144 = vmul.f32 %v1040, %v1136
        %v1145 = vmul.f32 %v1041, %v1137
        %v1146 = vmul.f32 %v1042, %v1138
        %v1147 = vmul.f32 %v1043, %v1139
        %v1148 = vmul.f32 %v1044, %v1140
        %v1149 = vmul.f32 %v1045, %v1141
        %v1150 = vmul.f32 %v1142, %v769
        %v1151 = vmul.f32 %v1143, %v769
        %v1152 = vmul.f32 %v1144, %v769
        %v1153 = vmul.f32 %v1145, %v769
        %v1154 = vmul.f32 %v1146, %v769
        %v1155 = vmul.f32 %v1147, %v769
        %v1156 = vmul.f32 %v1148, %v769
        %v1157 = vmul.f32 %v1149, %v769
        %v1158 = vadd.f32 %v1029, %v1150
        %v1159 = vadd.f32 %v1030, %v1151
        %v1160 = vadd.f32 %v1031, %v1152
        %v1161 = vadd.f32 %v1032, %v1153
        %v1162 = vadd.f32 %v1033, %v1154
        %v1163 = vadd.f32 %v1034, %v1155
        %v1164 = vadd.f32 %v1035, %v1156
        %v1165 = vadd.f32 %v1036, %v1157
        %v1166 = vmul.f32 %v1158, 0.25
        %v1167 = vmul.f32 %v1159, 0.25
        %v1168 = vmul.f32 %v1160, 0.25
        %v1169 = vmul.f32 %v1161, 0.25
        %v1170 = vmul.f32 %v1162, 0.25
        %v1171 = vmul.f32 %v1163, 0.25
        %v1172 = vmul.f32 %v1164, 0.25
        %v1173 = vmul.f32 %v1165, 0.25
        %v1174 = vpack.c.bf16 %v1167, %v1166
        %v1175 = vpack.c.bf16 %v1169, %v1168
        %v1176 = vpack.c.bf16 %v1171, %v1170
        %v1177 = vpack.c.bf16 %v1173, %v1172
        %v1178 = vld [vmem:[%s3] sm:$0xff]
        %v1179 = vld [vmem:[%s3 + $0x8] sm:$0xff]
        %v1180 = vld [vmem:[%s3 + $0x10] sm:$0xff]
        %v1181 = vld [vmem:[%s3 + $0x18] sm:$0xff]
        %v1182 = vld [vmem:[%s3 + $0x20] sm:$0xff]
        %v1183 = vld [vmem:[%s3 + $0x28] sm:$0xff]
        %v1184 = vld [vmem:[%s3 + $0x30] sm:$0xff]
        %v1185 = vld [vmem:[%s3 + $0x38] sm:$0xff]
        %v1186 = vld [vmem:[%s4] sm:$0x3]
        %v1188 = vlaneseq
        %v1189 = vshrl.u32 %v1188, 7
        %v1190 = vsub.s32 0, %v1189
        %v1191 = vrot.slane %v1186, %v1190
        %v1192 = vlaneseq
        %v1193 = vshrl.u32 %v1192, 7
        %v1194 = vsub.s32 1, %v1193
        %v1195 = vrot.slane %v1186, %v1194
        %v1206 = vunpack.c.l.b16 %v1178
        %v1207 = vunpack.c.h.b16 %v1178
        %v1208 = vunpack.c.l.b16 %v1179
        %v1209 = vunpack.c.h.b16 %v1179
        %v1210 = vunpack.c.l.b16 %v1180
        %v1211 = vunpack.c.h.b16 %v1180
        %v1212 = vunpack.c.l.b16 %v1181
        %v1213 = vunpack.c.h.b16 %v1181
        %v1214 = vunpack.c.l.b16 %v1182
        %v1215 = vunpack.c.h.b16 %v1182
        %v1216 = vunpack.c.l.b16 %v1183
        %v1217 = vunpack.c.h.b16 %v1183
        %v1218 = vunpack.c.l.b16 %v1184
        %v1219 = vunpack.c.h.b16 %v1184
        %v1220 = vunpack.c.l.b16 %v1185
        %v1221 = vunpack.c.h.b16 %v1185
        %v1222 = vpack.c.b16 %v1208, %v1206
        %v1223 = vpack.c.b16 %v1209, %v1207
        %v1224 = vpack.c.b16 %v1212, %v1210
        %v1225 = vpack.c.b16 %v1213, %v1211
        %v1226 = vpack.c.b16 %v1216, %v1214
        %v1227 = vpack.c.b16 %v1217, %v1215
        %v1228 = vpack.c.b16 %v1220, %v1218
        %v1229 = vpack.c.b16 %v1221, %v1219
        %v1239 = vsel %vm659, %v1174, 0
        %v1242 = vsel %vm659, %v1175, 0
        %v1245 = vsel %vm659, %v1176, 0
        %v1248 = vsel %vm659, %v1177, 0
        %1250 = vmatprep.subr.bf16.mxu0 %v1223
        %1251 = vmatpush1.bf16.msra.mxu0 %v1222
        %1252 = vmatprep.subr.bf16.mxu0 %v1225
        %1253 = vmatpush1.bf16.msra.mxu0 %v1224
        %1254 = vmatprep.subr.bf16.mxu0 %v1227
        %1255 = vmatpush1.bf16.msra.mxu0 %v1226
        %1256 = vmatprep.subr.bf16.mxu0 %v1229
        %1257 = vmatpush1.bf16.msra.mxu0 %v1228
        %1258 = vmatprep.subr.bf16.mxu0 0
        %1259 = vmatpush1.bf16.msra.mxu0 0
        %1260 = vmatprep.subr.bf16.mxu0 0
        %1261 = vmatpush1.bf16.msra.mxu0 0
        %1262 = vmatprep.subr.bf16.mxu0 0
        %1263 = vmatpush1.bf16.msra.mxu0 0
        %1264 = vmatprep.subr.bf16.mxu0 0
        %1265 = vmatpush1.bf16.msra.mxu0 0
        %1266 = vmatprep.subr.bf16.mxu0 0
        %1267 = vmatpush1.bf16.msra.mxu0 0
        %1268 = vmatprep.subr.bf16.mxu0 0
        %1269 = vmatpush1.bf16.msra.mxu0 0
        %1270 = vmatprep.subr.bf16.mxu0 0
        %1271 = vmatpush1.bf16.msra.mxu0 0
        %1272 = vmatprep.subr.bf16.mxu0 0
        %1273 = vmatpush1.bf16.msra.mxu0 0
        %1274 = vmatprep.subr.bf16.mxu0 0
        %1275 = vmatpush1.bf16.msra.mxu0 0
        %1276 = vmatprep.subr.bf16.mxu0 0
        %1277 = vmatpush1.bf16.msra.mxu0 0
        %1278 = vmatprep.subr.bf16.mxu0 0
        %1279 = vmatpush1.bf16.msra.mxu0 0
        %1280 = vmatprep.subr.bf16.mxu0 0
        %1281 = vmatpush1.bf16.msra.mxu0 0
        %1282 = vmatprep.mubr.bf16.mxu0 0
        %1283 = vmatmul.mubr.bf16.gmra.mrb[0].mxu0 %v1239
        %v1284 = vpop.f32.mrb[0].mxu0
        %v1285 = vadd.f32 %v1191, %v1284
        %v1286 = vpop.f32.mrb[0].mxu0
        %v1287 = vadd.f32 %v1195, %v1286
        %v1288 = vpop.f32.mrb[0].mxu0
        %v1289 = vadd.f32 %v1191, %v1288
        %v1290 = vpop.f32.mrb[0].mxu0
        %v1291 = vadd.f32 %v1195, %v1290
        %1292 = vmatprep.mubr.bf16.mxu0 0
        %1293 = vmatmul.mubr.bf16.gmra.mrb[0].mxu0 %v1242
        %v1294 = vpop.f32.mrb[0].mxu0
        %v1295 = vadd.f32 %v1191, %v1294
        %v1296 = vpop.f32.mrb[0].mxu0
        %v1297 = vadd.f32 %v1195, %v1296
        %v1298 = vpop.f32.mrb[0].mxu0
        %v1299 = vadd.f32 %v1191, %v1298
        %v1300 = vpop.f32.mrb[0].mxu0
        %v1301 = vadd.f32 %v1195, %v1300
        %1302 = vmatprep.mubr.bf16.mxu0 0
        %1303 = vmatmul.mubr.bf16.gmra.mrb[0].mxu0 %v1245
        %v1304 = vpop.f32.mrb[0].mxu0
        %v1305 = vadd.f32 %v1191, %v1304
        %v1306 = vpop.f32.mrb[0].mxu0
        %v1307 = vadd.f32 %v1195, %v1306
        %v1308 = vpop.f32.mrb[0].mxu0
        %v1309 = vadd.f32 %v1191, %v1308
        %v1310 = vpop.f32.mrb[0].mxu0
        %v1311 = vadd.f32 %v1195, %v1310
        %1312 = vmatprep.mubr.bf16.mxu0 0
        %1313 = vmatmul.mubr.bf16.gmra.mrb[0].mxu0 %v1248
        %v1314 = vpop.f32.mrb[0].mxu0
        %v1315 = vadd.f32 %v1191, %v1314
        %v1316 = vpop.f32.mrb[0].mxu0
        %v1317 = vadd.f32 %v1195, %v1316
        %v1318 = vpop.f32.mrb[0].mxu0
        %v1319 = vadd.f32 %v1191, %v1318
        %v1320 = vpop.f32.mrb[0].mxu0
        %v1321 = vadd.f32 %v1195, %v1320
        %1322 = vdwg.mxu0
        %v1323 = vpack.c.bf16 %v1289, %v1285
        %v1324 = vpack.c.bf16 %v1299, %v1295
        %v1325 = vpack.c.bf16 %v1309, %v1305
        %v1326 = vpack.c.bf16 %v1319, %v1315
        %v1327 = vpack.c.bf16 %v1291, %v1287
        %v1328 = vpack.c.bf16 %v1301, %v1297
        %v1329 = vpack.c.bf16 %v1311, %v1307
        %v1330 = vpack.c.bf16 %v1321, %v1317
        %v1331 = vld [vmem:[%s648] sm:$0xff]
        %v1332 = vld [vmem:[%s648 + $0x8] sm:$0xff]
        %v1333 = vld [vmem:[%s648 + $0x10] sm:$0xff]
        %v1334 = vld [vmem:[%s648 + $0x18] sm:$0xff]
        %v1335 = vld [vmem:[%s648 + $0x20] sm:$0xff]
        %v1336 = vld [vmem:[%s648 + $0x28] sm:$0xff]
        %v1337 = vld [vmem:[%s648 + $0x30] sm:$0xff]
        %v1338 = vld [vmem:[%s648 + $0x38] sm:$0xff]
        %v1339 = vpack.c.bf16 %v1332, %v1331
        %v1340 = vpack.c.bf16 %v1334, %v1333
        %v1341 = vpack.c.bf16 %v1336, %v1335
        %v1342 = vpack.c.bf16 %v1338, %v1337
        %v1343 = vld [vmem:[%s5] sm:$0xf]
        %v1344 = vld [vmem:[%s5 + $0x4] sm:$0xf]
        %v1345 = vld [vmem:[%s5 + $0x8] sm:$0xf]
        %v1346 = vld [vmem:[%s5 + $0xc] sm:$0xf]
        %v1347 = vld [vmem:[%s5 + $0x10] sm:$0xf]
        %v1348 = vld [vmem:[%s5 + $0x14] sm:$0xf]
        %v1349 = vld [vmem:[%s5 + $0x18] sm:$0xf]
        %v1350 = vld [vmem:[%s5 + $0x1c] sm:$0xf]
        %v1351 = vld [vmem:[%s5 + $0x20] sm:$0xf]
        %v1352 = vld [vmem:[%s5 + $0x24] sm:$0xf]
        %v1353 = vld [vmem:[%s5 + $0x28] sm:$0xf]
        %v1354 = vld [vmem:[%s5 + $0x2c] sm:$0xf]
        %v1355 = vld [vmem:[%s5 + $0x30] sm:$0xf]
        %v1356 = vld [vmem:[%s5 + $0x34] sm:$0xf]
        %v1357 = vld [vmem:[%s5 + $0x38] sm:$0xf]
        %v1358 = vld [vmem:[%s5 + $0x3c] sm:$0xf]
        %v1359 = vld [vmem:[%s6] sm:$0x1]
        %v1361 = vlaneseq
        %v1362 = vshrl.u32 %v1361, 7
        %v1363 = vsub.s32 0, %v1362
        %v1364 = vrot.slane %v1359, %v1363
        %v1382 = vunpack.c.l.b16 %v1343
        %v1383 = vunpack.c.l.b16 %v1344
        %v1384 = vunpack.c.l.b16 %v1345
        %v1385 = vunpack.c.l.b16 %v1346
        %v1386 = vunpack.c.l.b16 %v1347
        %v1387 = vunpack.c.l.b16 %v1348
        %v1388 = vunpack.c.l.b16 %v1349
        %v1389 = vunpack.c.l.b16 %v1350
        %v1390 = vunpack.c.l.b16 %v1351
        %v1391 = vunpack.c.l.b16 %v1352
        %v1392 = vunpack.c.l.b16 %v1353
        %v1393 = vunpack.c.l.b16 %v1354
        %v1394 = vunpack.c.l.b16 %v1355
        %v1395 = vunpack.c.l.b16 %v1356
        %v1396 = vunpack.c.l.b16 %v1357
        %v1397 = vunpack.c.l.b16 %v1358
        %v1398 = vpack.c.b16 %v1383, %v1382
        %v1399 = vpack.c.b16 %v1385, %v1384
        %v1400 = vpack.c.b16 %v1387, %v1386
        %v1401 = vpack.c.b16 %v1389, %v1388
        %v1402 = vpack.c.b16 %v1391, %v1390
        %v1403 = vpack.c.b16 %v1393, %v1392
        %v1404 = vpack.c.b16 %v1395, %v1394
        %v1405 = vpack.c.b16 %v1397, %v1396
        %1414 = vmatprep.subr.bf16.mxu0 0
        %1415 = vmatpush1.bf16.msra.mxu0 %v1398
        %1416 = vmatprep.subr.bf16.mxu0 0
        %1417 = vmatpush1.bf16.msra.mxu0 %v1399
        %1418 = vmatprep.subr.bf16.mxu0 0
        %1419 = vmatpush1.bf16.msra.mxu0 %v1400
        %1420 = vmatprep.subr.bf16.mxu0 0
        %1421 = vmatpush1.bf16.msra.mxu0 %v1401
        %1422 = vmatprep.subr.bf16.mxu0 0
        %1423 = vmatpush1.bf16.msra.mxu0 %v1402
        %1424 = vmatprep.subr.bf16.mxu0 0
        %1425 = vmatpush1.bf16.msra.mxu0 %v1403
        %1426 = vmatprep.subr.bf16.mxu0 0
        %1427 = vmatpush1.bf16.msra.mxu0 %v1404
        %1428 = vmatprep.subr.bf16.mxu0 0
        %1429 = vmatpush1.bf16.msra.mxu0 %v1405
        %1430 = vmatprep.subr.bf16.mxu0 0
        %1431 = vmatpush1.bf16.msra.mxu0 0
        %1432 = vmatprep.subr.bf16.mxu0 0
        %1433 = vmatpush1.bf16.msra.mxu0 0
        %1434 = vmatprep.subr.bf16.mxu0 0
        %1435 = vmatpush1.bf16.msra.mxu0 0
        %1436 = vmatprep.subr.bf16.mxu0 0
        %1437 = vmatpush1.bf16.msra.mxu0 0
        %1438 = vmatprep.subr.bf16.mxu0 0
        %1439 = vmatpush1.bf16.msra.mxu0 0
        %1440 = vmatprep.subr.bf16.mxu0 0
        %1441 = vmatpush1.bf16.msra.mxu0 0
        %1442 = vmatprep.subr.bf16.mxu0 0
        %1443 = vmatpush1.bf16.msra.mxu0 0
        %1444 = vmatprep.subr.bf16.mxu0 0
        %1445 = vmatpush1.bf16.msra.mxu0 0
        %1446 = vmatprep.mubr.bf16.mxu0 0
        %1447 = vmatmul.mubr.bf16.gmra.mrb[0].mxu0 %v1339
        %v1448 = vpop.f32.mrb[0].mxu0
        %v1449 = vadd.f32 %v1364, %v1448
        %v1450 = vpop.f32.mrb[0].mxu0
        %v1451 = vpop.f32.mrb[0].mxu0
        %v1452 = vadd.f32 %v1364, %v1451
        %v1453 = vpop.f32.mrb[0].mxu0
        %1454 = vmatprep.mubr.bf16.mxu0 0
        %1455 = vmatmul.mubr.bf16.gmra.mrb[0].mxu0 %v1340
        %v1456 = vpop.f32.mrb[0].mxu0
        %v1457 = vadd.f32 %v1364, %v1456
        %v1458 = vpop.f32.mrb[0].mxu0
        %v1459 = vpop.f32.mrb[0].mxu0
        %v1460 = vadd.f32 %v1364, %v1459
        %v1461 = vpop.f32.mrb[0].mxu0
        %1462 = vmatprep.mubr.bf16.mxu0 0
        %1463 = vmatmul.mubr.bf16.gmra.mrb[0].mxu0 %v1341
        %v1464 = vpop.f32.mrb[0].mxu0
        %v1465 = vadd.f32 %v1364, %v1464
        %v1466 = vpop.f32.mrb[0].mxu0
        %v1467 = vpop.f32.mrb[0].mxu0
        %v1468 = vadd.f32 %v1364, %v1467
        %v1469 = vpop.f32.mrb[0].mxu0
        %1470 = vmatprep.mubr.bf16.mxu0 0
        %1471 = vmatmul.mubr.bf16.gmra.mrb[0].mxu0 %v1342
        %v1472 = vpop.f32.mrb[0].mxu0
        %v1473 = vadd.f32 %v1364, %v1472
        %v1474 = vpop.f32.mrb[0].mxu0
        %v1475 = vpop.f32.mrb[0].mxu0
        %v1476 = vadd.f32 %v1364, %v1475
        %v1477 = vpop.f32.mrb[0].mxu0
        %1478 = vdwg.mxu0
        %v1479 = vpack.c.bf16 %v1452, %v1449
        %v1480 = vpack.c.bf16 %v1460, %v1457
        %v1481 = vpack.c.bf16 %v1468, %v1465
        %v1482 = vpack.c.bf16 %v1476, %v1473
        %1483 = vmatprep.subr.bf16.mxu0 0
        %1484 = vmatpush1.bf16.xpose.msra.mxu0 %v1323
        %1485 = vmatprep.subr.bf16.mxu0 0
        %1486 = vmatpush1.bf16.xpose.msra.mxu0 %v1324
        %1487 = vmatprep.subr.bf16.mxu0 0
        %1488 = vmatpush1.bf16.xpose.msra.mxu0 %v1325
        %1489 = vmatprep.subr.bf16.mxu0 0
        %1490 = vmatpush1.bf16.xpose.msra.mxu0 %v1326
        %1491 = vmatprep.subr.bf16.mxu0 0
        %1492 = vmatpush1.bf16.xpose.msra.mxu0 0
        %1493 = vmatprep.subr.bf16.mxu0 0
        %1494 = vmatpush1.bf16.xpose.msra.mxu0 0
        %1495 = vmatprep.subr.bf16.mxu0 0
        %1496 = vmatpush1.bf16.xpose.msra.mxu0 0
        %1497 = vmatprep.subr.bf16.mxu0 0
        %1498 = vmatpush1.bf16.xpose.msra.mxu0 0
        %1499 = vmatprep.subr.bf16.mxu0 0
        %1500 = vmatpush1.bf16.xpose.msra.mxu0 0
        %1501 = vmatprep.subr.bf16.mxu0 0
        %1502 = vmatpush1.bf16.xpose.msra.mxu0 0
        %1503 = vmatprep.subr.bf16.mxu0 0
        %1504 = vmatpush1.bf16.xpose.msra.mxu0 0
        %1505 = vmatprep.subr.bf16.mxu0 0
        %1506 = vmatpush1.bf16.xpose.msra.mxu0 0
        %1507 = vmatprep.subr.bf16.mxu0 0
        %1508 = vmatpush1.bf16.xpose.msra.mxu0 0
        %1509 = vmatprep.subr.bf16.mxu0 0
        %1510 = vmatpush1.bf16.xpose.msra.mxu0 0
        %1511 = vmatprep.subr.bf16.mxu0 0
        %1512 = vmatpush1.bf16.xpose.msra.mxu0 0
        %1513 = vmatprep.subr.bf16.mxu0 0
        %1514 = vmatpush1.bf16.xpose.msra.mxu0 0
        %1515 = vmatprep.mubr.bf16.mxu0 0
        %1516 = vmatmul.mubr.bf16.gmra.mrb[0].mxu0 %v1479
        %v1517 = vpop.f32.mrb[0].mxu0
        %v1518 = vadd.f32 0.0, %v1517
        %v1519 = vpop.f32.mrb[0].mxu0
        %v1520 = vpop.f32.mrb[0].mxu0
        %v1521 = vadd.f32 0.0, %v1520
        %v1522 = vpop.f32.mrb[0].mxu0
        %1523 = vmatprep.mubr.bf16.mxu0 0
        %1524 = vmatmul.mubr.bf16.gmra.mrb[0].mxu0 %v1480
        %v1525 = vpop.f32.mrb[0].mxu0
        %v1526 = vadd.f32 0.0, %v1525
        %v1527 = vpop.f32.mrb[0].mxu0
        %v1528 = vpop.f32.mrb[0].mxu0
        %v1529 = vadd.f32 0.0, %v1528
        %v1530 = vpop.f32.mrb[0].mxu0
        %1531 = vmatprep.mubr.bf16.mxu0 0
        %1532 = vmatmul.mubr.bf16.gmra.mrb[0].mxu0 %v1481
        %v1533 = vpop.f32.mrb[0].mxu0
        %v1534 = vadd.f32 0.0, %v1533
        %v1535 = vpop.f32.mrb[0].mxu0
        %v1536 = vpop.f32.mrb[0].mxu0
        %v1537 = vadd.f32 0.0, %v1536
        %v1538 = vpop.f32.mrb[0].mxu0
        %1539 = vmatprep.mubr.bf16.mxu0 0
        %1540 = vmatmul.mubr.bf16.gmra.mrb[0].mxu0 %v1482
        %v1541 = vpop.f32.mrb[0].mxu0
        %v1542 = vadd.f32 0.0, %v1541
        %v1543 = vpop.f32.mrb[0].mxu0
        %v1544 = vpop.f32.mrb[0].mxu0
        %v1545 = vadd.f32 0.0, %v1544
        %v1546 = vpop.f32.mrb[0].mxu0
        %1547 = vdwg.mxu0
        %v1548 = vsel %vm659, %v1518, -inf
        %1549 = vmax.xlane.f32.xlu0 %v1548
        %v1550 = vpop.xlane.xlu0 %1549
        %v1551 = vsel %vm659, %v1521, -inf
        %1552 = vmax.xlane.f32.xlu0 %v1551
        %v1553 = vpop.xlane.xlu0 %1552
        %v1554 = vsel %vm659, %v1526, -inf
        %1555 = vmax.xlane.f32.xlu0 %v1554
        %v1556 = vpop.xlane.xlu0 %1555
        %v1557 = vsel %vm659, %v1529, -inf
        %1558 = vmax.xlane.f32.xlu0 %v1557
        %v1559 = vpop.xlane.xlu0 %1558
        %v1560 = vsel %vm659, %v1534, -inf
        %1561 = vmax.xlane.f32.xlu0 %v1560
        %v1562 = vpop.xlane.xlu0 %1561
        %v1563 = vsel %vm659, %v1537, -inf
        %1564 = vmax.xlane.f32.xlu0 %v1563
        %v1565 = vpop.xlane.xlu0 %1564
        %v1566 = vsel %vm659, %v1542, -inf
        %1567 = vmax.xlane.f32.xlu0 %v1566
        %v1568 = vpop.xlane.xlu0 %1567
        %v1569 = vsel %vm659, %v1545, -inf
        %1570 = vmax.xlane.f32.xlu0 %v1569
        %v1571 = vpop.xlane.xlu0 %1570
        %v1572 = vsub.f32 %v1518, %v1550
        %v1573 = vsub.f32 %v1521, %v1553
        %v1574 = vsub.f32 %v1526, %v1556
        %v1575 = vsub.f32 %v1529, %v1559
        %v1576 = vsub.f32 %v1534, %v1562
        %v1577 = vsub.f32 %v1537, %v1565
        %v1578 = vsub.f32 %v1542, %v1568
        %v1579 = vsub.f32 %v1545, %v1571
        %v1580 = vmul.f32 %v1572, 1.442695
        %v1581 = vpow.pop %v1580
        %v1582 = vmul.f32 %v1573, 1.442695
        %v1583 = vpow.pop %v1582
        %v1584 = vmul.f32 %v1574, 1.442695
        %v1585 = vpow.pop %v1584
        %v1586 = vmul.f32 %v1575, 1.442695
        %v1587 = vpow.pop %v1586
        %v1588 = vmul.f32 %v1576, 1.442695
        %v1589 = vpow.pop %v1588
        %v1590 = vmul.f32 %v1577, 1.442695
        %v1591 = vpow.pop %v1590
        %v1592 = vmul.f32 %v1578, 1.442695
        %v1593 = vpow.pop %v1592
        %v1594 = vmul.f32 %v1579, 1.442695
        %v1595 = vpow.pop %v1594
        %v1596 = vsel %vm659, %v1581, 0.0
        %1597 = vadd.xlane.f32.xlu0 %v1596
        %v1598 = vpop.xlane.xlu0 %1597
        %v1599 = vsel %vm659, %v1583, 0.0
        %1600 = vadd.xlane.f32.xlu0 %v1599
        %v1601 = vpop.xlane.xlu0 %1600
        %v1602 = vsel %vm659, %v1585, 0.0
        %1603 = vadd.xlane.f32.xlu0 %v1602
        %v1604 = vpop.xlane.xlu0 %1603
        %v1605 = vsel %vm659, %v1587, 0.0
        %1606 = vadd.xlane.f32.xlu0 %v1605
        %v1607 = vpop.xlane.xlu0 %1606
        %v1608 = vsel %vm659, %v1589, 0.0
        %1609 = vadd.xlane.f32.xlu0 %v1608
        %v1610 = vpop.xlane.xlu0 %1609
        %v1611 = vsel %vm659, %v1591, 0.0
        %1612 = vadd.xlane.f32.xlu0 %v1611
        %v1613 = vpop.xlane.xlu0 %1612
        %v1614 = vsel %vm659, %v1593, 0.0
        %1615 = vadd.xlane.f32.xlu0 %v1614
        %v1616 = vpop.xlane.xlu0 %1615
        %v1617 = vsel %vm659, %v1595, 0.0
        %1618 = vadd.xlane.f32.xlu0 %v1617
        %v1619 = vpop.xlane.xlu0 %1618
        %v1620 = vrcp.pop %v1598
        %v1621 = vrcp.pop %v1601
        %v1622 = vrcp.pop %v1604
        %v1623 = vrcp.pop %v1607
        %v1624 = vrcp.pop %v1610
        %v1625 = vrcp.pop %v1613
        %v1626 = vrcp.pop %v1616
        %v1627 = vrcp.pop %v1619
        %v1628 = vmul.f32 %v1581, %v1620
        %v1629 = vmul.f32 %v1583, %v1621
        %v1630 = vmul.f32 %v1585, %v1622
        %v1631 = vmul.f32 %v1587, %v1623
        %v1632 = vmul.f32 %v1589, %v1624
        %v1633 = vmul.f32 %v1591, %v1625
        %v1634 = vmul.f32 %v1593, %v1626
        %v1635 = vmul.f32 %v1595, %v1627
        %v1636 = vpack.c.bf16 %v1629, %v1628
        %v1637 = vpack.c.bf16 %v1631, %v1630
        %v1638 = vpack.c.bf16 %v1633, %v1632
        %v1639 = vpack.c.bf16 %v1635, %v1634
        %v1641 = vsel %vm659, %v1636, 0
        %v1644 = vsel %vm659, %v1637, 0
        %v1647 = vsel %vm659, %v1638, 0
        %v1650 = vsel %vm659, %v1639, 0
        %1652 = vmatprep.subr.bf16.mxu0 0
        %1653 = vmatpush1.bf16.msra.mxu0 %v1327
        %1654 = vmatprep.subr.bf16.mxu0 0
        %1655 = vmatpush1.bf16.msra.mxu0 %v1328
        %1656 = vmatprep.subr.bf16.mxu0 0
        %1657 = vmatpush1.bf16.msra.mxu0 %v1329
        %1658 = vmatprep.subr.bf16.mxu0 0
        %1659 = vmatpush1.bf16.msra.mxu0 %v1330
        %1660 = vmatprep.subr.bf16.mxu0 0
        %1661 = vmatpush1.bf16.msra.mxu0 0
        %1662 = vmatprep.subr.bf16.mxu0 0
        %1663 = vmatpush1.bf16.msra.mxu0 0
        %1664 = vmatprep.subr.bf16.mxu0 0
        %1665 = vmatpush1.bf16.msra.mxu0 0
        %1666 = vmatprep.subr.bf16.mxu0 0
        %1667 = vmatpush1.bf16.msra.mxu0 0
        %1668 = vmatprep.subr.bf16.mxu0 0
        %1669 = vmatpush1.bf16.msra.mxu0 0
        %1670 = vmatprep.subr.bf16.mxu0 0
        %1671 = vmatpush1.bf16.msra.mxu0 0
        %1672 = vmatprep.subr.bf16.mxu0 0
        %1673 = vmatpush1.bf16.msra.mxu0 0
        %1674 = vmatprep.subr.bf16.mxu0 0
        %1675 = vmatpush1.bf16.msra.mxu0 0
        %1676 = vmatprep.subr.bf16.mxu0 0
        %1677 = vmatpush1.bf16.msra.mxu0 0
        %1678 = vmatprep.subr.bf16.mxu0 0
        %1679 = vmatpush1.bf16.msra.mxu0 0
        %1680 = vmatprep.subr.bf16.mxu0 0
        %1681 = vmatpush1.bf16.msra.mxu0 0
        %1682 = vmatprep.subr.bf16.mxu0 0
        %1683 = vmatpush1.bf16.msra.mxu0 0
        %1684 = vmatprep.mubr.bf16.mxu0 0
        %1685 = vmatmul.mubr.bf16.gmra.mrb[0].mxu0 %v1641
        %v1686 = vpop.f32.mrb[0].mxu0
        %v1687 = vadd.f32 0.0, %v1686
        %v1688 = vpop.f32.mrb[0].mxu0
        %v1689 = vpop.f32.mrb[0].mxu0
        %v1690 = vadd.f32 0.0, %v1689
        %v1691 = vpop.f32.mrb[0].mxu0
        %1692 = vmatprep.mubr.bf16.mxu0 0
        %1693 = vmatmul.mubr.bf16.gmra.mrb[0].mxu0 %v1644
        %v1694 = vpop.f32.mrb[0].mxu0
        %v1695 = vadd.f32 0.0, %v1694
        %v1696 = vpop.f32.mrb[0].mxu0
        %v1697 = vpop.f32.mrb[0].mxu0
        %v1698 = vadd.f32 0.0, %v1697
        %v1699 = vpop.f32.mrb[0].mxu0
        %1700 = vmatprep.mubr.bf16.mxu0 0
        %1701 = vmatmul.mubr.bf16.gmra.mrb[0].mxu0 %v1647
        %v1702 = vpop.f32.mrb[0].mxu0
        %v1703 = vadd.f32 0.0, %v1702
        %v1704 = vpop.f32.mrb[0].mxu0
        %v1705 = vpop.f32.mrb[0].mxu0
        %v1706 = vadd.f32 0.0, %v1705
        %v1707 = vpop.f32.mrb[0].mxu0
        %1708 = vmatprep.mubr.bf16.mxu0 0
        %1709 = vmatmul.mubr.bf16.gmra.mrb[0].mxu0 %v1650
        %v1710 = vpop.f32.mrb[0].mxu0
        %v1711 = vadd.f32 0.0, %v1710
        %v1712 = vpop.f32.mrb[0].mxu0
        %v1713 = vpop.f32.mrb[0].mxu0
        %v1714 = vadd.f32 0.0, %v1713
        %v1715 = vpop.f32.mrb[0].mxu0
        %1716 = vdwg.mxu0
        %v1717 = vpack.c.bf16 %v1690, %v1687
        %v1718 = vpack.c.bf16 %v1698, %v1695
        %v1719 = vpack.c.bf16 %v1706, %v1703
        %v1720 = vpack.c.bf16 %v1714, %v1711
        %v1721 = vld [vmem:[%s7] sm:$0xf]
        %v1722 = vld [vmem:[%s7 + $0x4] sm:$0xf]
        %v1723 = vld [vmem:[%s7 + $0x8] sm:$0xf]
        %v1724 = vld [vmem:[%s7 + $0xc] sm:$0xf]
        %v1725 = vld [vmem:[%s7 + $0x10] sm:$0xf]
        %v1726 = vld [vmem:[%s7 + $0x14] sm:$0xf]
        %v1727 = vld [vmem:[%s7 + $0x18] sm:$0xf]
        %v1728 = vld [vmem:[%s7 + $0x1c] sm:$0xf]
        %v1729 = vld [vmem:[%s7 + $0x20] sm:$0xf]
        %v1730 = vld [vmem:[%s7 + $0x24] sm:$0xf]
        %v1731 = vld [vmem:[%s7 + $0x28] sm:$0xf]
        %v1732 = vld [vmem:[%s7 + $0x2c] sm:$0xf]
        %v1733 = vld [vmem:[%s7 + $0x30] sm:$0xf]
        %v1734 = vld [vmem:[%s7 + $0x34] sm:$0xf]
        %v1735 = vld [vmem:[%s7 + $0x38] sm:$0xf]
        %v1736 = vld [vmem:[%s7 + $0x3c] sm:$0xf]
        %v1737 = vld [vmem:[%s8] sm:$0x1]
        %v1739 = vlaneseq
        %v1740 = vshrl.u32 %v1739, 7
        %v1741 = vsub.s32 0, %v1740
        %v1742 = vrot.slane %v1737, %v1741
        %v1760 = vunpack.c.l.b16 %v1721
        %v1761 = vunpack.c.l.b16 %v1722
        %v1762 = vunpack.c.l.b16 %v1723
        %v1763 = vunpack.c.l.b16 %v1724
        %v1764 = vunpack.c.l.b16 %v1725
        %v1765 = vunpack.c.l.b16 %v1726
        %v1766 = vunpack.c.l.b16 %v1727
        %v1767 = vunpack.c.l.b16 %v1728
        %v1768 = vunpack.c.l.b16 %v1729
        %v1769 = vunpack.c.l.b16 %v1730
        %v1770 = vunpack.c.l.b16 %v1731
        %v1771 = vunpack.c.l.b16 %v1732
        %v1772 = vunpack.c.l.b16 %v1733
        %v1773 = vunpack.c.l.b16 %v1734
        %v1774 = vunpack.c.l.b16 %v1735
        %v1775 = vunpack.c.l.b16 %v1736
        %v1776 = vpack.c.b16 %v1761, %v1760
        %v1777 = vpack.c.b16 %v1763, %v1762
        %v1778 = vpack.c.b16 %v1765, %v1764
        %v1779 = vpack.c.b16 %v1767, %v1766
        %v1780 = vpack.c.b16 %v1769, %v1768
        %v1781 = vpack.c.b16 %v1771, %v1770
        %v1782 = vpack.c.b16 %v1773, %v1772
        %v1783 = vpack.c.b16 %v1775, %v1774
        %1792 = vmatprep.subr.bf16.mxu0 0
        %1793 = vmatpush1.bf16.msra.mxu0 %v1776
        %1794 = vmatprep.subr.bf16.mxu0 0
        %1795 = vmatpush1.bf16.msra.mxu0 %v1777
        %1796 = vmatprep.subr.bf16.mxu0 0
        %1797 = vmatpush1.bf16.msra.mxu0 %v1778
        %1798 = vmatprep.subr.bf16.mxu0 0
        %1799 = vmatpush1.bf16.msra.mxu0 %v1779
        %1800 = vmatprep.subr.bf16.mxu0 0
        %1801 = vmatpush1.bf16.msra.mxu0 %v1780
        %1802 = vmatprep.subr.bf16.mxu0 0
        %1803 = vmatpush1.bf16.msra.mxu0 %v1781
        %1804 = vmatprep.subr.bf16.mxu0 0
        %1805 = vmatpush1.bf16.msra.mxu0 %v1782
        %1806 = vmatprep.subr.bf16.mxu0 0
        %1807 = vmatpush1.bf16.msra.mxu0 %v1783
        %1808 = vmatprep.subr.bf16.mxu0 0
        %1809 = vmatpush1.bf16.msra.mxu0 0
        %1810 = vmatprep.subr.bf16.mxu0 0
        %1811 = vmatpush1.bf16.msra.mxu0 0
        %1812 = vmatprep.subr.bf16.mxu0 0
        %1813 = vmatpush1.bf16.msra.mxu0 0
        %1814 = vmatprep.subr.bf16.mxu0 0
        %1815 = vmatpush1.bf16.msra.mxu0 0
        %1816 = vmatprep.subr.bf16.mxu0 0
        %1817 = vmatpush1.bf16.msra.mxu0 0
        %1818 = vmatprep.subr.bf16.mxu0 0
        %1819 = vmatpush1.bf16.msra.mxu0 0
        %1820 = vmatprep.subr.bf16.mxu0 0
        %1821 = vmatpush1.bf16.msra.mxu0 0
        %1822 = vmatprep.subr.bf16.mxu0 0
        %1823 = vmatpush1.bf16.msra.mxu0 0
        %1824 = vmatprep.mubr.bf16.mxu0 0
        %1825 = vmatmul.mubr.bf16.gmra.mrb[0].mxu0 %v1717
        %v1826 = vpop.f32.mrb[0].mxu0
        %v1827 = vadd.f32 %v1742, %v1826
        %v1828 = vpop.f32.mrb[0].mxu0
        %v1829 = vpop.f32.mrb[0].mxu0
        %v1830 = vadd.f32 %v1742, %v1829
        %v1831 = vpop.f32.mrb[0].mxu0
        %1832 = vmatprep.mubr.bf16.mxu0 0
        %1833 = vmatmul.mubr.bf16.gmra.mrb[0].mxu0 %v1718
        %v1834 = vpop.f32.mrb[0].mxu0
        %v1835 = vadd.f32 %v1742, %v1834
        %v1836 = vpop.f32.mrb[0].mxu0
        %v1837 = vpop.f32.mrb[0].mxu0
        %v1838 = vadd.f32 %v1742, %v1837
        %v1839 = vpop.f32.mrb[0].mxu0
        %1840 = vmatprep.mubr.bf16.mxu0 0
        %1841 = vmatmul.mubr.bf16.gmra.mrb[0].mxu0 %v1719
        %v1842 = vpop.f32.mrb[0].mxu0
        %v1843 = vadd.f32 %v1742, %v1842
        %v1844 = vpop.f32.mrb[0].mxu0
        %v1845 = vpop.f32.mrb[0].mxu0
        %v1846 = vadd.f32 %v1742, %v1845
        %v1847 = vpop.f32.mrb[0].mxu0
        %1848 = vmatprep.mubr.bf16.mxu0 0
        %1849 = vmatmul.mubr.bf16.gmra.mrb[0].mxu0 %v1720
        %v1850 = vpop.f32.mrb[0].mxu0
        %v1851 = vadd.f32 %v1742, %v1850
        %v1852 = vpop.f32.mrb[0].mxu0
        %v1853 = vpop.f32.mrb[0].mxu0
        %v1854 = vadd.f32 %v1742, %v1853
        %v1855 = vpop.f32.mrb[0].mxu0
        %1856 = vdwg.mxu0
        %v1857 = vadd.f32 %v1827, %v1331
        %v1858 = vadd.f32 %v1830, %v1332
        %v1859 = vadd.f32 %v1835, %v1333
        %v1860 = vadd.f32 %v1838, %v1334
        %v1861 = vadd.f32 %v1843, %v1335
        %v1862 = vadd.f32 %v1846, %v1336
        %v1863 = vadd.f32 %v1851, %v1337
        %v1864 = vadd.f32 %v1854, %v1338
        %v1865 = vld [vmem:[%s9] sm:$0x1]
        %1866 = vadd.xlane.f32.xlu0 %v1857
        %v1867 = vpop.xlane.xlu0 %1866
        %1868 = vadd.xlane.f32.xlu0 %v1858
        %v1869 = vpop.xlane.xlu0 %1868
        %1870 = vadd.xlane.f32.xlu0 %v1859
        %v1871 = vpop.xlane.xlu0 %1870
        %1872 = vadd.xlane.f32.xlu0 %v1860
        %v1873 = vpop.xlane.xlu0 %1872
        %1874 = vadd.xlane.f32.xlu0 %v1861
        %v1875 = vpop.xlane.xlu0 %1874
        %1876 = vadd.xlane.f32.xlu0 %v1862
        %v1877 = vpop.xlane.xlu0 %1876
        %1878 = vadd.xlane.f32.xlu0 %v1863
        %v1879 = vpop.xlane.xlu0 %1878
        %1880 = vadd.xlane.f32.xlu0 %v1864
        %v1881 = vpop.xlane.xlu0 %1880
        %v1882 = vrcp.pop 128.0
        %v1883 = vmul.f32 %v1867, %v1882
        %v1884 = vmul.f32 %v1869, %v1882
        %v1885 = vmul.f32 %v1871, %v1882
        %v1886 = vmul.f32 %v1873, %v1882
        %v1887 = vmul.f32 %v1875, %v1882
        %v1888 = vmul.f32 %v1877, %v1882
        %v1889 = vmul.f32 %v1879, %v1882
        %v1890 = vmul.f32 %v1881, %v1882
        %v1891 = vsub.f32 %v1857, %v1883
        %v1892 = vsub.f32 %v1858, %v1884
        %v1893 = vsub.f32 %v1859, %v1885
        %v1894 = vsub.f32 %v1860, %v1886
        %v1895 = vsub.f32 %v1861, %v1887
        %v1896 = vsub.f32 %v1862, %v1888
        %v1897 = vsub.f32 %v1863, %v1889
        %v1898 = vsub.f32 %v1864, %v1890
        %v1899 = vmul.f32 %v1891, %v1891
        %v1900 = vmul.f32 %v1892, %v1892
        %v1901 = vmul.f32 %v1893, %v1893
        %v1902 = vmul.f32 %v1894, %v1894
        %v1903 = vmul.f32 %v1895, %v1895
        %v1904 = vmul.f32 %v1896, %v1896
        %v1905 = vmul.f32 %v1897, %v1897
        %v1906 = vmul.f32 %v1898, %v1898
        %1907 = vadd.xlane.f32.xlu0 %v1899
        %v1908 = vpop.xlane.xlu0 %1907
        %1909 = vadd.xlane.f32.xlu0 %v1900
        %v1910 = vpop.xlane.xlu0 %1909
        %1911 = vadd.xlane.f32.xlu0 %v1901
        %v1912 = vpop.xlane.xlu0 %1911
        %1913 = vadd.xlane.f32.xlu0 %v1902
        %v1914 = vpop.xlane.xlu0 %1913
        %1915 = vadd.xlane.f32.xlu0 %v1903
        %v1916 = vpop.xlane.xlu0 %1915
        %1917 = vadd.xlane.f32.xlu0 %v1904
        %v1918 = vpop.xlane.xlu0 %1917
        %1919 = vadd.xlane.f32.xlu0 %v1905
        %v1920 = vpop.xlane.xlu0 %1919
        %1921 = vadd.xlane.f32.xlu0 %v1906
        %v1922 = vpop.xlane.xlu0 %1921
        %v1923 = vmul.f32 %v1908, %v1882
        %v1924 = vmul.f32 %v1910, %v1882
        %v1925 = vmul.f32 %v1912, %v1882
        %v1926 = vmul.f32 %v1914, %v1882
        %v1927 = vmul.f32 %v1916, %v1882
        %v1928 = vmul.f32 %v1918, %v1882
        %v1929 = vmul.f32 %v1920, %v1882
        %v1930 = vmul.f32 %v1922, %v1882
        %v1931 = vadd.f32 %v1923, 1e-05
        %v1932 = vadd.f32 %v1924, 1e-05
        %v1933 = vadd.f32 %v1925, 1e-05
        %v1934 = vadd.f32 %v1926, 1e-05
        %v1935 = vadd.f32 %v1927, 1e-05
        %v1936 = vadd.f32 %v1928, 1e-05
        %v1937 = vadd.f32 %v1929, 1e-05
        %v1938 = vadd.f32 %v1930, 1e-05
        %v1939 = vrsqrt.pop %v1931
        %v1940 = vrsqrt.pop %v1932
        %v1941 = vrsqrt.pop %v1933
        %v1942 = vrsqrt.pop %v1934
        %v1943 = vrsqrt.pop %v1935
        %v1944 = vrsqrt.pop %v1936
        %v1945 = vrsqrt.pop %v1937
        %v1946 = vrsqrt.pop %v1938
        %v1947 = vmul.f32 %v1857, %v1939
        %v1948 = vmul.f32 %v1858, %v1940
        %v1949 = vmul.f32 %v1859, %v1941
        %v1950 = vmul.f32 %v1860, %v1942
        %v1951 = vmul.f32 %v1861, %v1943
        %v1952 = vmul.f32 %v1862, %v1944
        %v1953 = vmul.f32 %v1863, %v1945
        %v1954 = vmul.f32 %v1864, %v1946
        %v1956 = vlaneseq
        %v1957 = vshrl.u32 %v1956, 7
        %v1958 = vsub.s32 0, %v1957
        %v1959 = vrot.slane %v1865, %v1958
        %v1961 = vmul.f32 %v1947, %v1959
        %v1962 = vmul.f32 %v1948, %v1959
        %v1963 = vmul.f32 %v1949, %v1959
        %v1964 = vmul.f32 %v1950, %v1959
        %v1965 = vmul.f32 %v1951, %v1959
        %v1966 = vmul.f32 %v1952, %v1959
        %v1967 = vmul.f32 %v1953, %v1959
        %v1968 = vmul.f32 %v1954, %v1959
        %v1969 = vpack.c.bf16 %v1962, %v1961
        %v1970 = vpack.c.bf16 %v1964, %v1963
        %v1971 = vpack.c.bf16 %v1966, %v1965
        %v1972 = vpack.c.bf16 %v1968, %v1967
        %v1973 = vld [vmem:[%s10] sm:$0xff]
        %v1974 = vld [vmem:[%s10 + $0x8] sm:$0xf]
        %v1975 = vld [vmem:[%s10 + $0xc] sm:$0xff]
        %v1976 = vld [vmem:[%s10 + $0x14] sm:$0xf]
        %v1977 = vld [vmem:[%s10 + $0x18] sm:$0xff]
        %v1978 = vld [vmem:[%s10 + $0x20] sm:$0xf]
        %v1979 = vld [vmem:[%s10 + $0x24] sm:$0xff]
        %v1980 = vld [vmem:[%s10 + $0x2c] sm:$0xf]
        %v1981 = vld [vmem:[%s10 + $0x30] sm:$0xff]
        %v1982 = vld [vmem:[%s10 + $0x38] sm:$0xf]
        %v1983 = vld [vmem:[%s10 + $0x3c] sm:$0xff]
        %v1984 = vld [vmem:[%s10 + $0x44] sm:$0xf]
        %v1985 = vld [vmem:[%s10 + $0x48] sm:$0xff]
        %v1986 = vld [vmem:[%s10 + $0x50] sm:$0xf]
        %v1987 = vld [vmem:[%s10 + $0x54] sm:$0xff]
        %v1988 = vld [vmem:[%s10 + $0x5c] sm:$0xf]
        %v1989 = vld [vmem:[%s10 + $0x60] sm:$0xff]
        %v1990 = vld [vmem:[%s10 + $0x68] sm:$0xf]
        %v1991 = vld [vmem:[%s10 + $0x6c] sm:$0xff]
        %v1992 = vld [vmem:[%s10 + $0x74] sm:$0xf]
        %v1993 = vld [vmem:[%s10 + $0x78] sm:$0xff]
        %v1994 = vld [vmem:[%s10 + $0x80] sm:$0xf]
        %v1995 = vld [vmem:[%s10 + $0x84] sm:$0xff]
        %v1996 = vld [vmem:[%s10 + $0x8c] sm:$0xf]
        %v1997 = vld [vmem:[%s10 + $0x90] sm:$0xff]
        %v1998 = vld [vmem:[%s10 + $0x98] sm:$0xf]
        %v1999 = vld [vmem:[%s10 + $0x9c] sm:$0xff]
        %v2000 = vld [vmem:[%s10 + $0xa4] sm:$0xf]
        %v2001 = vld [vmem:[%s10 + $0xa8] sm:$0xff]
        %v2002 = vld [vmem:[%s10 + $0xb0] sm:$0xf]
        %v2003 = vld [vmem:[%s10 + $0xb4] sm:$0xff]
        %v2004 = vld [vmem:[%s10 + $0xbc] sm:$0xf]
        %v2005 = vld [vmem:[%s11] sm:$0x7]
        %v2007 = vlaneseq
        %v2008 = vshrl.u32 %v2007, 7
        %v2009 = vsub.s32 0, %v2008
        %v2010 = vrot.slane %v2005, %v2009
        %v2011 = vlaneseq
        %v2012 = vshrl.u32 %v2011, 7
        %v2013 = vsub.s32 1, %v2012
        %v2014 = vrot.slane %v2005, %v2013
        %v2015 = vlaneseq
        %v2016 = vshrl.u32 %v2015, 7
        %v2017 = vsub.s32 2, %v2016
        %v2018 = vrot.slane %v2005, %v2017
        %v2054 = vunpack.c.l.b16 %v1973
        %v2055 = vunpack.c.h.b16 %v1973
        %v2056 = vunpack.c.l.b16 %v1974
        %v2057 = vunpack.c.l.b16 %v1975
        %v2058 = vunpack.c.h.b16 %v1975
        %v2059 = vunpack.c.l.b16 %v1976
        %v2060 = vunpack.c.l.b16 %v1977
        %v2061 = vunpack.c.h.b16 %v1977
        %v2062 = vunpack.c.l.b16 %v1978
        %v2063 = vunpack.c.l.b16 %v1979
        %v2064 = vunpack.c.h.b16 %v1979
        %v2065 = vunpack.c.l.b16 %v1980
        %v2066 = vunpack.c.l.b16 %v1981
        %v2067 = vunpack.c.h.b16 %v1981
        %v2068 = vunpack.c.l.b16 %v1982
        %v2069 = vunpack.c.l.b16 %v1983
        %v2070 = vunpack.c.h.b16 %v1983
        %v2071 = vunpack.c.l.b16 %v1984
        %v2072 = vunpack.c.l.b16 %v1985
        %v2073 = vunpack.c.h.b16 %v1985
        %v2074 = vunpack.c.l.b16 %v1986
        %v2075 = vunpack.c.l.b16 %v1987
        %v2076 = vunpack.c.h.b16 %v1987
        %v2077 = vunpack.c.l.b16 %v1988
        %v2078 = vunpack.c.l.b16 %v1989
        %v2079 = vunpack.c.h.b16 %v1989
        %v2080 = vunpack.c.l.b16 %v1990
        %v2081 = vunpack.c.l.b16 %v1991
        %v2082 = vunpack.c.h.b16 %v1991
        %v2083 = vunpack.c.l.b16 %v1992
        %v2084 = vunpack.c.l.b16 %v1993
        %v2085 = vunpack.c.h.b16 %v1993
        %v2086 = vunpack.c.l.b16 %v1994
        %v2087 = vunpack.c.l.b16 %v1995
        %v2088 = vunpack.c.h.b16 %v1995
        %v2089 = vunpack.c.l.b16 %v1996
        %v2090 = vunpack.c.l.b16 %v1997
        %v2091 = vunpack.c.h.b16 %v1997
        %v2092 = vunpack.c.l.b16 %v1998
        %v2093 = vunpack.c.l.b16 %v1999
        %v2094 = vunpack.c.h.b16 %v1999
        %v2095 = vunpack.c.l.b16 %v2000
        %v2096 = vunpack.c.l.b16 %v2001
        %v2097 = vunpack.c.h.b16 %v2001
        %v2098 = vunpack.c.l.b16 %v2002
        %v2099 = vunpack.c.l.b16 %v2003
        %v2100 = vunpack.c.h.b16 %v2003
        %v2101 = vunpack.c.l.b16 %v2004
        %v2102 = vpack.c.b16 %v2057, %v2054
        %v2103 = vpack.c.b16 %v2058, %v2055
        %v2104 = vpack.c.b16 %v2059, %v2056
        %v2105 = vpack.c.b16 %v2063, %v2060
        %v2106 = vpack.c.b16 %v2064, %v2061
        %v2107 = vpack.c.b16 %v2065, %v2062
        %v2108 = vpack.c.b16 %v2069, %v2066
        %v2109 = vpack.c.b16 %v2070, %v2067
        %v2110 = vpack.c.b16 %v2071, %v2068
        %v2111 = vpack.c.b16 %v2075, %v2072
        %v2112 = vpack.c.b16 %v2076, %v2073
        %v2113 = vpack.c.b16 %v2077, %v2074
        %v2114 = vpack.c.b16 %v2081, %v2078
        %v2115 = vpack.c.b16 %v2082, %v2079
        %v2116 = vpack.c.b16 %v2083, %v2080
        %v2117 = vpack.c.b16 %v2087, %v2084
        %v2118 = vpack.c.b16 %v2088, %v2085
        %v2119 = vpack.c.b16 %v2089, %v2086
        %v2120 = vpack.c.b16 %v2093, %v2090
        %v2121 = vpack.c.b16 %v2094, %v2091
        %v2122 = vpack.c.b16 %v2095, %v2092
        %v2123 = vpack.c.b16 %v2099, %v2096
        %v2124 = vpack.c.b16 %v2100, %v2097
        %v2125 = vpack.c.b16 %v2101, %v2098
        %2150 = vmatprep.subr.bf16.mxu0 %v2103
        %2151 = vmatpush1.bf16.msra.mxu0 %v2102
        %2152 = vmatprep.subr.bf16.mxu0 %v2106
        %2153 = vmatpush1.bf16.msra.mxu0 %v2105
        %2154 = vmatprep.subr.bf16.mxu0 %v2109
        %2155 = vmatpush1.bf16.msra.mxu0 %v2108
        %2156 = vmatprep.subr.bf16.mxu0 %v2112
        %2157 = vmatpush1.bf16.msra.mxu0 %v2111
        %2158 = vmatprep.subr.bf16.mxu0 %v2115
        %2159 = vmatpush1.bf16.msra.mxu0 %v2114
        %2160 = vmatprep.subr.bf16.mxu0 %v2118
        %2161 = vmatpush1.bf16.msra.mxu0 %v2117
        %2162 = vmatprep.subr.bf16.mxu0 %v2121
        %2163 = vmatpush1.bf16.msra.mxu0 %v2120
        %2164 = vmatprep.subr.bf16.mxu0 %v2124
        %2165 = vmatpush1.bf16.msra.mxu0 %v2123
        %2166 = vmatprep.subr.bf16.mxu0 0
        %2167 = vmatpush1.bf16.msra.mxu0 0
        %2168 = vmatprep.subr.bf16.mxu0 0
        %2169 = vmatpush1.bf16.msra.mxu0 0
        %2170 = vmatprep.subr.bf16.mxu0 0
        %2171 = vmatpush1.bf16.msra.mxu0 0
        %2172 = vmatprep.subr.bf16.mxu0 0
        %2173 = vmatpush1.bf16.msra.mxu0 0
        %2174 = vmatprep.subr.bf16.mxu0 0
        %2175 = vmatpush1.bf16.msra.mxu0 0
        %2176 = vmatprep.subr.bf16.mxu0 0
        %2177 = vmatpush1.bf16.msra.mxu0 0
        %2178 = vmatprep.subr.bf16.mxu0 0
        %2179 = vmatpush1.bf16.msra.mxu0 0
        %2180 = vmatprep.subr.bf16.mxu0 0
        %2181 = vmatpush1.bf16.msra.mxu0 0
        %2182 = vmatprep.mubr.bf16.mxu0 0
        %2183 = vmatmul.mubr.bf16.gmra.mrb[0].mxu0 %v1969
        %v2184 = vpop.f32.mrb[0].mxu0
        %v2185 = vadd.f32 %v2010, %v2184
        %v2186 = vpop.f32.mrb[0].mxu0
        %v2187 = vadd.f32 %v2014, %v2186
        %v2188 = vpop.f32.mrb[0].mxu0
        %v2189 = vadd.f32 %v2010, %v2188
        %v2190 = vpop.f32.mrb[0].mxu0
        %v2191 = vadd.f32 %v2014, %v2190
        %2192 = vmatprep.mubr.bf16.mxu0 0
        %2193 = vmatmul.mubr.bf16.gmra.mrb[0].mxu0 %v1970
        %v2194 = vpop.f32.mrb[0].mxu0
        %v2195 = vadd.f32 %v2010, %v2194
        %v2196 = vpop.f32.mrb[0].mxu0
        %v2197 = vadd.f32 %v2014, %v2196
        %v2198 = vpop.f32.mrb[0].mxu0
        %v2199 = vadd.f32 %v2010, %v2198
        %v2200 = vpop.f32.mrb[0].mxu0
        %v2201 = vadd.f32 %v2014, %v2200
        %2202 = vmatprep.mubr.bf16.mxu0 0
        %2203 = vmatmul.mubr.bf16.gmra.mrb[0].mxu0 %v1971
        %v2204 = vpop.f32.mrb[0].mxu0
        %v2205 = vadd.f32 %v2010, %v2204
        %v2206 = vpop.f32.mrb[0].mxu0
        %v2207 = vadd.f32 %v2014, %v2206
        %v2208 = vpop.f32.mrb[0].mxu0
        %v2209 = vadd.f32 %v2010, %v2208
        %v2210 = vpop.f32.mrb[0].mxu0
        %v2211 = vadd.f32 %v2014, %v2210
        %2212 = vmatprep.mubr.bf16.mxu0 0
        %2213 = vmatmul.mubr.bf16.gmra.mrb[0].mxu0 %v1972
        %v2214 = vpop.f32.mrb[0].mxu0
        %v2215 = vadd.f32 %v2010, %v2214
        %v2216 = vpop.f32.mrb[0].mxu0
        %v2217 = vadd.f32 %v2014, %v2216
        %v2218 = vpop.f32.mrb[0].mxu0
        %v2219 = vadd.f32 %v2010, %v2218
        %v2220 = vpop.f32.mrb[0].mxu0
        %v2221 = vadd.f32 %v2014, %v2220
        %2222 = vdwg.mxu0
        %2223 = vmatprep.subr.bf16.mxu0 0
        %2224 = vmatpush1.bf16.msra.mxu0 %v2104
        %2225 = vmatprep.subr.bf16.mxu0 0
        %2226 = vmatpush1.bf16.msra.mxu0 %v2107
        %2227 = vmatprep.subr.bf16.mxu0 0
        %2228 = vmatpush1.bf16.msra.mxu0 %v2110
        %2229 = vmatprep.subr.bf16.mxu0 0
        %2230 = vmatpush1.bf16.msra.mxu0 %v2113
        %2231 = vmatprep.subr.bf16.mxu0 0
        %2232 = vmatpush1.bf16.msra.mxu0 %v2116
        %2233 = vmatprep.subr.bf16.mxu0 0
        %2234 = vmatpush1.bf16.msra.mxu0 %v2119
        %2235 = vmatprep.subr.bf16.mxu0 0
        %2236 = vmatpush1.bf16.msra.mxu0 %v2122
        %2237 = vmatprep.subr.bf16.mxu0 0
        %2238 = vmatpush1.bf16.msra.mxu0 %v2125
        %2239 = vmatprep.subr.bf16.mxu0 0
        %2240 = vmatpush1.bf16.msra.mxu0 0
        %2241 = vmatprep.subr.bf16.mxu0 0
        %2242 = vmatpush1.bf16.msra.mxu0 0
        %2243 = vmatprep.subr.bf16.mxu0 0
        %2244 = vmatpush1.bf16.msra.mxu0 0
        %2245 = vmatprep.subr.bf16.mxu0 0
        %2246 = vmatpush1.bf16.msra.mxu0 0
        %2247 = vmatprep.subr.bf16.mxu0 0
        %2248 = vmatpush1.bf16.msra.mxu0 0
        %2249 = vmatprep.subr.bf16.mxu0 0
        %2250 = vmatpush1.bf16.msra.mxu0 0
        %2251 = vmatprep.subr.bf16.mxu0 0
        %2252 = vmatpush1.bf16.msra.mxu0 0
        %2253 = vmatprep.subr.bf16.mxu0 0
        %2254 = vmatpush1.bf16.msra.mxu0 0
        %2255 = vmatprep.mubr.bf16.mxu0 0
        %2256 = vmatmul.mubr.bf16.gmra.mrb[0].mxu0 %v1969
        %v2257 = vpop.f32.mrb[0].mxu0
        %v2258 = vadd.f32 %v2018, %v2257
        %v2259 = vpop.f32.mrb[0].mxu0
        %v2260 = vpop.f32.mrb[0].mxu0
        %v2261 = vadd.f32 %v2018, %v2260
        %v2262 = vpop.f32.mrb[0].mxu0
        %2263 = vmatprep.mubr.bf16.mxu0 0
        %2264 = vmatmul.mubr.bf16.gmra.mrb[0].mxu0 %v1970
        %v2265 = vpop.f32.mrb[0].mxu0
        %v2266 = vadd.f32 %v2018, %v2265
        %v2267 = vpop.f32.mrb[0].mxu0
        %v2268 = vpop.f32.mrb[0].mxu0
        %v2269 = vadd.f32 %v2018, %v2268
        %v2270 = vpop.f32.mrb[0].mxu0
        %2271 = vmatprep.mubr.bf16.mxu0 0
        %2272 = vmatmul.mubr.bf16.gmra.mrb[0].mxu0 %v1971
        %v2273 = vpop.f32.mrb[0].mxu0
        %v2274 = vadd.f32 %v2018, %v2273
        %v2275 = vpop.f32.mrb[0].mxu0
        %v2276 = vpop.f32.mrb[0].mxu0
        %v2277 = vadd.f32 %v2018, %v2276
        %v2278 = vpop.f32.mrb[0].mxu0
        %2279 = vmatprep.mubr.bf16.mxu0 0
        %2280 = vmatmul.mubr.bf16.gmra.mrb[0].mxu0 %v1972
        %v2281 = vpop.f32.mrb[0].mxu0
        %v2282 = vadd.f32 %v2018, %v2281
        %v2283 = vpop.f32.mrb[0].mxu0
        %v2284 = vpop.f32.mrb[0].mxu0
        %v2285 = vadd.f32 %v2018, %v2284
        %v2286 = vpop.f32.mrb[0].mxu0
        %2287 = vdwg.mxu0
        %v2288 = vmul.f32 %v2185, %v2185
        %v2289 = vmul.f32 %v2189, %v2189
        %v2290 = vmul.f32 %v2195, %v2195
        %v2291 = vmul.f32 %v2199, %v2199
        %v2292 = vmul.f32 %v2205, %v2205
        %v2293 = vmul.f32 %v2209, %v2209
        %v2294 = vmul.f32 %v2215, %v2215
        %v2295 = vmul.f32 %v2219, %v2219
        %v2296 = vadd.f32 %v2288, %v2289
        %v2297 = vadd.f32 %v2296, %v2290
        %v2298 = vadd.f32 %v2297, %v2291
        %v2299 = vadd.f32 %v2298, %v2292
        %v2300 = vadd.f32 %v2299, %v2293
        %v2301 = vadd.f32 %v2300, %v2294
        %v2302 = vadd.f32 %v2301, %v2295
        %v2303 = vrot.slane %v2302, 4
        %v2304 = vadd.f32 %v2302, %v2303
        %v2305 = vrot.slane %v2304, 2
        %v2306 = vadd.f32 %v2304, %v2305
        %v2307 = vrot.slane %v2306, 1
        %v2308 = vadd.f32 %v2306, %v2307
        %v2309 = vadd.f32 %v2308, 1e-12
        %v2310 = vrsqrt.pop %v2309
        %v2311 = vmul.f32 %v2185, %v2310
        %v2312 = vmul.f32 %v2189, %v2310
        %v2313 = vmul.f32 %v2195, %v2310
        %v2314 = vmul.f32 %v2199, %v2310
        %v2315 = vmul.f32 %v2205, %v2310
        %v2316 = vmul.f32 %v2209, %v2310
        %v2317 = vmul.f32 %v2215, %v2310
        %v2318 = vmul.f32 %v2219, %v2310
        %v2319 = vmul.f32 %v2187, %v2187
        %v2320 = vmul.f32 %v2191, %v2191
        %v2321 = vmul.f32 %v2197, %v2197
        %v2322 = vmul.f32 %v2201, %v2201
        %v2323 = vmul.f32 %v2207, %v2207
        %v2324 = vmul.f32 %v2211, %v2211
        %v2325 = vmul.f32 %v2217, %v2217
        %v2326 = vmul.f32 %v2221, %v2221
        %v2327 = vadd.f32 %v2319, %v2320
        %v2328 = vadd.f32 %v2327, %v2321
        %v2329 = vadd.f32 %v2328, %v2322
        %v2330 = vadd.f32 %v2329, %v2323
        %v2331 = vadd.f32 %v2330, %v2324
        %v2332 = vadd.f32 %v2331, %v2325
        %v2333 = vadd.f32 %v2332, %v2326
        %v2334 = vrot.slane %v2333, 4
        %v2335 = vadd.f32 %v2333, %v2334
        %v2336 = vrot.slane %v2335, 2
        %v2337 = vadd.f32 %v2335, %v2336
        %v2338 = vrot.slane %v2337, 1
        %v2339 = vadd.f32 %v2337, %v2338
        %v2340 = vadd.f32 %v2339, 1e-12
        %v2341 = vrsqrt.pop %v2340
        %v2342 = vmul.f32 %v2187, %v2341
        %v2343 = vmul.f32 %v2191, %v2341
        %v2344 = vmul.f32 %v2197, %v2341
        %v2345 = vmul.f32 %v2201, %v2341
        %v2346 = vmul.f32 %v2207, %v2341
        %v2347 = vmul.f32 %v2211, %v2341
        %v2348 = vmul.f32 %v2217, %v2341
        %v2349 = vmul.f32 %v2221, %v2341
        %v2350 = vpack.c.bf16 %v2312, %v2311
        %v2351 = vpack.c.bf16 %v2314, %v2313
        %v2352 = vpack.c.bf16 %v2316, %v2315
        %v2353 = vpack.c.bf16 %v2318, %v2317
        %v2354 = vpack.c.bf16 %v2343, %v2342
        %v2355 = vpack.c.bf16 %v2345, %v2344
        %v2356 = vpack.c.bf16 %v2347, %v2346
        %v2357 = vpack.c.bf16 %v2349, %v2348
        %2358 = vxpose.xlu0.c.b16.start [1/8] %v2350, 128
        %2359 = vxpose.xlu0.c.b16.cont [2/8] %v2351, 128
        %2360 = vxpose.xlu0.c.b16.cont [3/8] %v2352, 128
        %2361 = vxpose.xlu0.c.b16.cont [4/8] %v2353, 128
        %2362 = vxpose.xlu0.c.b16.cont [5/8] 0, 128
        %2363 = vxpose.xlu0.c.b16.cont [6/8] 0, 128
        %2364 = vxpose.xlu0.c.b16.cont [7/8] 0, 128
        %2365 = vxpose.xlu0.c.b16.end [8/8] 0, 128
        %v2366 = vpop.trf.xlu0
        %v2367 = vpop.trf.xlu0
        %v2368 = vpop.trf.xlu0
        %v2369 = vpop.trf.xlu0
        %v2370 = vpop.trf.xlu0
        %v2371 = vpop.trf.xlu0
        %v2372 = vpop.trf.xlu0
        %v2373 = vpop.trf.xlu0
        %v2375 = vsel %vm659, %v2366, 0
        %v2378 = vsel %vm659, %v2367, 0
        %v2381 = vsel %vm659, %v2368, 0
        %v2384 = vsel %vm659, %v2369, 0
        %v2387 = vsel %vm659, %v2370, 0
        %v2390 = vsel %vm659, %v2371, 0
        %v2393 = vsel %vm659, %v2372, 0
        %v2396 = vsel %vm659, %v2373, 0
        %2398 = vmatprep.subr.bf16.mxu0 0
        %2399 = vmatpush1.bf16.msra.mxu0 %v2354
        %2400 = vmatprep.subr.bf16.mxu0 0
        %2401 = vmatpush1.bf16.msra.mxu0 %v2355
        %2402 = vmatprep.subr.bf16.mxu0 0
        %2403 = vmatpush1.bf16.msra.mxu0 %v2356
        %2404 = vmatprep.subr.bf16.mxu0 0
        %2405 = vmatpush1.bf16.msra.mxu0 %v2357
        %2406 = vmatprep.subr.bf16.mxu0 0
        %2407 = vmatpush1.bf16.msra.mxu0 0
        %2408 = vmatprep.subr.bf16.mxu0 0
        %2409 = vmatpush1.bf16.msra.mxu0 0
        %2410 = vmatprep.subr.bf16.mxu0 0
        %2411 = vmatpush1.bf16.msra.mxu0 0
        %2412 = vmatprep.subr.bf16.mxu0 0
        %2413 = vmatpush1.bf16.msra.mxu0 0
        %2414 = vmatprep.subr.bf16.mxu0 0
        %2415 = vmatpush1.bf16.msra.mxu0 0
        %2416 = vmatprep.subr.bf16.mxu0 0
        %2417 = vmatpush1.bf16.msra.mxu0 0
        %2418 = vmatprep.subr.bf16.mxu0 0
        %2419 = vmatpush1.bf16.msra.mxu0 0
        %2420 = vmatprep.subr.bf16.mxu0 0
        %2421 = vmatpush1.bf16.msra.mxu0 0
        %2422 = vmatprep.subr.bf16.mxu0 0
        %2423 = vmatpush1.bf16.msra.mxu0 0
        %2424 = vmatprep.subr.bf16.mxu0 0
        %2425 = vmatpush1.bf16.msra.mxu0 0
        %2426 = vmatprep.subr.bf16.mxu0 0
        %2427 = vmatpush1.bf16.msra.mxu0 0
        %2428 = vmatprep.subr.bf16.mxu0 0
        %2429 = vmatpush1.bf16.msra.mxu0 0
        %2430 = vmatprep.mubr.bf16.mxu0 0
        %2431 = vmatmul.mubr.bf16.gmra.mrb[0].mxu0 %v2375
        %v2432 = vpop.f32.mrb[0].mxu0
        %v2433 = vadd.f32 0.0, %v2432
        %v2434 = vpop.f32.mrb[0].mxu0
        %v2435 = vpop.f32.mrb[0].mxu0
        %v2436 = vadd.f32 0.0, %v2435
        %v2437 = vpop.f32.mrb[0].mxu0
        %2438 = vmatprep.mubr.bf16.mxu0 0
        %2439 = vmatmul.mubr.bf16.gmra.mrb[0].mxu0 %v2378
        %v2440 = vpop.f32.mrb[0].mxu0
        %v2441 = vadd.f32 0.0, %v2440
        %v2442 = vpop.f32.mrb[0].mxu0
        %v2443 = vpop.f32.mrb[0].mxu0
        %v2444 = vadd.f32 0.0, %v2443
        %v2445 = vpop.f32.mrb[0].mxu0
        %2446 = vmatprep.mubr.bf16.mxu0 0
        %2447 = vmatmul.mubr.bf16.gmra.mrb[0].mxu0 %v2381
        %v2448 = vpop.f32.mrb[0].mxu0
        %v2449 = vadd.f32 0.0, %v2448
        %v2450 = vpop.f32.mrb[0].mxu0
        %v2451 = vpop.f32.mrb[0].mxu0
        %v2452 = vadd.f32 0.0, %v2451
        %v2453 = vpop.f32.mrb[0].mxu0
        %2454 = vmatprep.mubr.bf16.mxu0 0
        %2455 = vmatmul.mubr.bf16.gmra.mrb[0].mxu0 %v2384
        %v2456 = vpop.f32.mrb[0].mxu0
        %v2457 = vadd.f32 0.0, %v2456
        %v2458 = vpop.f32.mrb[0].mxu0
        %v2459 = vpop.f32.mrb[0].mxu0
        %v2460 = vadd.f32 0.0, %v2459
        %v2461 = vpop.f32.mrb[0].mxu0
        %2462 = vmatprep.mubr.bf16.mxu0 0
        %2463 = vmatmul.mubr.bf16.gmra.mrb[0].mxu0 %v2387
        %v2464 = vpop.f32.mrb[0].mxu0
        %v2465 = vadd.f32 0.0, %v2464
        %v2466 = vpop.f32.mrb[0].mxu0
        %v2467 = vpop.f32.mrb[0].mxu0
        %v2468 = vadd.f32 0.0, %v2467
        %v2469 = vpop.f32.mrb[0].mxu0
        %2470 = vmatprep.mubr.bf16.mxu0 0
        %2471 = vmatmul.mubr.bf16.gmra.mrb[0].mxu0 %v2390
        %v2472 = vpop.f32.mrb[0].mxu0
        %v2473 = vadd.f32 0.0, %v2472
        %v2474 = vpop.f32.mrb[0].mxu0
        %v2475 = vpop.f32.mrb[0].mxu0
        %v2476 = vadd.f32 0.0, %v2475
        %v2477 = vpop.f32.mrb[0].mxu0
        %2478 = vmatprep.mubr.bf16.mxu0 0
        %2479 = vmatmul.mubr.bf16.gmra.mrb[0].mxu0 %v2393
        %v2480 = vpop.f32.mrb[0].mxu0
        %v2481 = vadd.f32 0.0, %v2480
        %v2482 = vpop.f32.mrb[0].mxu0
        %v2483 = vpop.f32.mrb[0].mxu0
        %v2484 = vadd.f32 0.0, %v2483
        %v2485 = vpop.f32.mrb[0].mxu0
        %2486 = vmatprep.mubr.bf16.mxu0 0
        %2487 = vmatmul.mubr.bf16.gmra.mrb[0].mxu0 %v2396
        %v2488 = vpop.f32.mrb[0].mxu0
        %v2489 = vadd.f32 0.0, %v2488
        %v2490 = vpop.f32.mrb[0].mxu0
        %v2491 = vpop.f32.mrb[0].mxu0
        %v2492 = vadd.f32 0.0, %v2491
        %v2493 = vpop.f32.mrb[0].mxu0
        %2494 = vdwg.mxu0
        %s2495 = sld [smem:[#allocation2]]
        %v2496 = vstv %s2495
        %v2497 = vmul.f32 %v2433, %v2496
        %v2498 = vmul.f32 %v2436, %v2496
        %v2499 = vmul.f32 %v2441, %v2496
        %v2500 = vmul.f32 %v2444, %v2496
        %v2501 = vmul.f32 %v2449, %v2496
        %v2502 = vmul.f32 %v2452, %v2496
        %v2503 = vmul.f32 %v2457, %v2496
        %v2504 = vmul.f32 %v2460, %v2496
        %v2505 = vmul.f32 %v2465, %v2496
        %v2506 = vmul.f32 %v2468, %v2496
        %v2507 = vmul.f32 %v2473, %v2496
        %v2508 = vmul.f32 %v2476, %v2496
        %v2509 = vmul.f32 %v2481, %v2496
        %v2510 = vmul.f32 %v2484, %v2496
        %v2511 = vmul.f32 %v2489, %v2496
        %v2512 = vmul.f32 %v2492, %v2496
        %2513 = vmax.xlane.f32.xlu0 %v2497
        %v2514 = vpop.xlane.xlu0 %2513
        %2515 = vmax.xlane.f32.xlu0 %v2498
        %v2516 = vpop.xlane.xlu0 %2515
        %2517 = vmax.xlane.f32.xlu0 %v2499
        %v2518 = vpop.xlane.xlu0 %2517
        %2519 = vmax.xlane.f32.xlu0 %v2500
        %v2520 = vpop.xlane.xlu0 %2519
        %2521 = vmax.xlane.f32.xlu0 %v2501
        %v2522 = vpop.xlane.xlu0 %2521
        %2523 = vmax.xlane.f32.xlu0 %v2502
        %v2524 = vpop.xlane.xlu0 %2523
        %2525 = vmax.xlane.f32.xlu0 %v2503
        %v2526 = vpop.xlane.xlu0 %2525
        %2527 = vmax.xlane.f32.xlu0 %v2504
        %v2528 = vpop.xlane.xlu0 %2527
        %2529 = vmax.xlane.f32.xlu0 %v2505
        %v2530 = vpop.xlane.xlu0 %2529
        %2531 = vmax.xlane.f32.xlu0 %v2506
        %v2532 = vpop.xlane.xlu0 %2531
        %2533 = vmax.xlane.f32.xlu0 %v2507
        %v2534 = vpop.xlane.xlu0 %2533
        %2535 = vmax.xlane.f32.xlu0 %v2508
        %v2536 = vpop.xlane.xlu0 %2535
        %2537 = vmax.xlane.f32.xlu0 %v2509
        %v2538 = vpop.xlane.xlu0 %2537
        %2539 = vmax.xlane.f32.xlu0 %v2510
        %v2540 = vpop.xlane.xlu0 %2539
        %2541 = vmax.xlane.f32.xlu0 %v2511
        %v2542 = vpop.xlane.xlu0 %2541
        %2543 = vmax.xlane.f32.xlu0 %v2512
        %v2544 = vpop.xlane.xlu0 %2543
        %v2545 = vsub.f32 %v2497, %v2514
        %v2546 = vsub.f32 %v2498, %v2516
        %v2547 = vsub.f32 %v2499, %v2518
        %v2548 = vsub.f32 %v2500, %v2520
        %v2549 = vsub.f32 %v2501, %v2522
        %v2550 = vsub.f32 %v2502, %v2524
        %v2551 = vsub.f32 %v2503, %v2526
        %v2552 = vsub.f32 %v2504, %v2528
        %v2553 = vsub.f32 %v2505, %v2530
        %v2554 = vsub.f32 %v2506, %v2532
        %v2555 = vsub.f32 %v2507, %v2534
        %v2556 = vsub.f32 %v2508, %v2536
        %v2557 = vsub.f32 %v2509, %v2538
        %v2558 = vsub.f32 %v2510, %v2540
        %v2559 = vsub.f32 %v2511, %v2542
        %v2560 = vsub.f32 %v2512, %v2544
        %v2561 = vmul.f32 %v2545, 1.442695
        %v2562 = vpow.pop %v2561
        %v2563 = vmul.f32 %v2546, 1.442695
        %v2564 = vpow.pop %v2563
        %v2565 = vmul.f32 %v2547, 1.442695
        %v2566 = vpow.pop %v2565
        %v2567 = vmul.f32 %v2548, 1.442695
        %v2568 = vpow.pop %v2567
        %v2569 = vmul.f32 %v2549, 1.442695
        %v2570 = vpow.pop %v2569
        %v2571 = vmul.f32 %v2550, 1.442695
        %v2572 = vpow.pop %v2571
        %v2573 = vmul.f32 %v2551, 1.442695
        %v2574 = vpow.pop %v2573
        %v2575 = vmul.f32 %v2552, 1.442695
        %v2576 = vpow.pop %v2575
        %v2577 = vmul.f32 %v2553, 1.442695
        %v2578 = vpow.pop %v2577
        %v2579 = vmul.f32 %v2554, 1.442695
        %v2580 = vpow.pop %v2579
        %v2581 = vmul.f32 %v2555, 1.442695
        %v2582 = vpow.pop %v2581
        %v2583 = vmul.f32 %v2556, 1.442695
        %v2584 = vpow.pop %v2583
        %v2585 = vmul.f32 %v2557, 1.442695
        %v2586 = vpow.pop %v2585
        %v2587 = vmul.f32 %v2558, 1.442695
        %v2588 = vpow.pop %v2587
        %v2589 = vmul.f32 %v2559, 1.442695
        %v2590 = vpow.pop %v2589
        %v2591 = vmul.f32 %v2560, 1.442695
        %v2592 = vpow.pop %v2591
        %2593 = vadd.xlane.f32.xlu0 %v2562
        %v2594 = vpop.xlane.xlu0 %2593
        %2595 = vadd.xlane.f32.xlu0 %v2564
        %v2596 = vpop.xlane.xlu0 %2595
        %2597 = vadd.xlane.f32.xlu0 %v2566
        %v2598 = vpop.xlane.xlu0 %2597
        %2599 = vadd.xlane.f32.xlu0 %v2568
        %v2600 = vpop.xlane.xlu0 %2599
        %2601 = vadd.xlane.f32.xlu0 %v2570
        %v2602 = vpop.xlane.xlu0 %2601
        %2603 = vadd.xlane.f32.xlu0 %v2572
        %v2604 = vpop.xlane.xlu0 %2603
        %2605 = vadd.xlane.f32.xlu0 %v2574
        %v2606 = vpop.xlane.xlu0 %2605
        %2607 = vadd.xlane.f32.xlu0 %v2576
        %v2608 = vpop.xlane.xlu0 %2607
        %2609 = vadd.xlane.f32.xlu0 %v2578
        %v2610 = vpop.xlane.xlu0 %2609
        %2611 = vadd.xlane.f32.xlu0 %v2580
        %v2612 = vpop.xlane.xlu0 %2611
        %2613 = vadd.xlane.f32.xlu0 %v2582
        %v2614 = vpop.xlane.xlu0 %2613
        %2615 = vadd.xlane.f32.xlu0 %v2584
        %v2616 = vpop.xlane.xlu0 %2615
        %2617 = vadd.xlane.f32.xlu0 %v2586
        %v2618 = vpop.xlane.xlu0 %2617
        %2619 = vadd.xlane.f32.xlu0 %v2588
        %v2620 = vpop.xlane.xlu0 %2619
        %2621 = vadd.xlane.f32.xlu0 %v2590
        %v2622 = vpop.xlane.xlu0 %2621
        %2623 = vadd.xlane.f32.xlu0 %v2592
        %v2624 = vpop.xlane.xlu0 %2623
        %v2625 = vrcp.pop %v2594
        %v2626 = vrcp.pop %v2596
        %v2627 = vrcp.pop %v2598
        %v2628 = vrcp.pop %v2600
        %v2629 = vrcp.pop %v2602
        %v2630 = vrcp.pop %v2604
        %v2631 = vrcp.pop %v2606
        %v2632 = vrcp.pop %v2608
        %v2633 = vrcp.pop %v2610
        %v2634 = vrcp.pop %v2612
        %v2635 = vrcp.pop %v2614
        %v2636 = vrcp.pop %v2616
        %v2637 = vrcp.pop %v2618
        %v2638 = vrcp.pop %v2620
        %v2639 = vrcp.pop %v2622
        %v2640 = vrcp.pop %v2624
        %v2641 = vmul.f32 %v2562, %v2625
        %v2642 = vmul.f32 %v2564, %v2626
        %v2643 = vmul.f32 %v2566, %v2627
        %v2644 = vmul.f32 %v2568, %v2628
        %v2645 = vmul.f32 %v2570, %v2629
        %v2646 = vmul.f32 %v2572, %v2630
        %v2647 = vmul.f32 %v2574, %v2631
        %v2648 = vmul.f32 %v2576, %v2632
        %v2649 = vmul.f32 %v2578, %v2633
        %v2650 = vmul.f32 %v2580, %v2634
        %v2651 = vmul.f32 %v2582, %v2635
        %v2652 = vmul.f32 %v2584, %v2636
        %v2653 = vmul.f32 %v2586, %v2637
        %v2654 = vmul.f32 %v2588, %v2638
        %v2655 = vmul.f32 %v2590, %v2639
        %v2656 = vmul.f32 %v2592, %v2640
        %v2657 = vpack.c.bf16 %v2261, %v2258
        %v2658 = vpack.c.bf16 %v2269, %v2266
        %v2659 = vpack.c.bf16 %v2277, %v2274
        %v2660 = vpack.c.bf16 %v2285, %v2282
        %v2661 = vpack.c.bf16 %v2642, %v2641
        %v2662 = vpack.c.bf16 %v2644, %v2643
        %v2663 = vpack.c.bf16 %v2646, %v2645
        %v2664 = vpack.c.bf16 %v2648, %v2647
        %v2665 = vpack.c.bf16 %v2650, %v2649
        %v2666 = vpack.c.bf16 %v2652, %v2651
        %v2667 = vpack.c.bf16 %v2654, %v2653
        %v2668 = vpack.c.bf16 %v2656, %v2655
        %2669 = vmatprep.subr.bf16.mxu0 0
        %2670 = vmatpush1.bf16.xpose.msra.mxu0 %v2661
        %2671 = vmatprep.subr.bf16.mxu0 0
        %2672 = vmatpush1.bf16.xpose.msra.mxu0 %v2662
        %2673 = vmatprep.subr.bf16.mxu0 0
        %2674 = vmatpush1.bf16.xpose.msra.mxu0 %v2663
        %2675 = vmatprep.subr.bf16.mxu0 0
        %2676 = vmatpush1.bf16.xpose.msra.mxu0 %v2664
        %2677 = vmatprep.subr.bf16.mxu0 0
        %2678 = vmatpush1.bf16.xpose.msra.mxu0 %v2665
        %2679 = vmatprep.subr.bf16.mxu0 0
        %2680 = vmatpush1.bf16.xpose.msra.mxu0 %v2666
        %2681 = vmatprep.subr.bf16.mxu0 0
        %2682 = vmatpush1.bf16.xpose.msra.mxu0 %v2667
        %2683 = vmatprep.subr.bf16.mxu0 0
        %2684 = vmatpush1.bf16.xpose.msra.mxu0 %v2668
        %2685 = vmatprep.subr.bf16.mxu0 0
        %2686 = vmatpush1.bf16.xpose.msra.mxu0 0
        %2687 = vmatprep.subr.bf16.mxu0 0
        %2688 = vmatpush1.bf16.xpose.msra.mxu0 0
        %2689 = vmatprep.subr.bf16.mxu0 0
        %2690 = vmatpush1.bf16.xpose.msra.mxu0 0
        %2691 = vmatprep.subr.bf16.mxu0 0
        %2692 = vmatpush1.bf16.xpose.msra.mxu0 0
        %2693 = vmatprep.subr.bf16.mxu0 0
        %2694 = vmatpush1.bf16.xpose.msra.mxu0 0
        %2695 = vmatprep.subr.bf16.mxu0 0
        %2696 = vmatpush1.bf16.xpose.msra.mxu0 0
        %2697 = vmatprep.subr.bf16.mxu0 0
        %2698 = vmatpush1.bf16.xpose.msra.mxu0 0
        %2699 = vmatprep.subr.bf16.mxu0 0
        %2700 = vmatpush1.bf16.xpose.msra.mxu0 0
        %2701 = vmatprep.mubr.bf16.mxu0 0
        %2702 = vmatmul.mubr.bf16.gmra.mrb[0].mxu0 %v2657
        %v2703 = vpop.f32.mrb[0].mxu0
        %v2704 = vadd.f32 0.0, %v2703
        %v2705 = vpop.f32.mrb[0].mxu0
        %v2706 = vpop.f32.mrb[0].mxu0
        %v2707 = vadd.f32 0.0, %v2706
        %v2708 = vpop.f32.mrb[0].mxu0
        %2709 = vmatprep.mubr.bf16.mxu0 0
        %2710 = vmatmul.mubr.bf16.gmra.mrb[0].mxu0 %v2658
        %v2711 = vpop.f32.mrb[0].mxu0
        %v2712 = vadd.f32 0.0, %v2711
        %v2713 = vpop.f32.mrb[0].mxu0
        %v2714 = vpop.f32.mrb[0].mxu0
        %v2715 = vadd.f32 0.0, %v2714
        %v2716 = vpop.f32.mrb[0].mxu0
        %2717 = vmatprep.mubr.bf16.mxu0 0
        %2718 = vmatmul.mubr.bf16.gmra.mrb[0].mxu0 %v2659
        %v2719 = vpop.f32.mrb[0].mxu0
        %v2720 = vadd.f32 0.0, %v2719
        %v2721 = vpop.f32.mrb[0].mxu0
        %v2722 = vpop.f32.mrb[0].mxu0
        %v2723 = vadd.f32 0.0, %v2722
        %v2724 = vpop.f32.mrb[0].mxu0
        %2725 = vmatprep.mubr.bf16.mxu0 0
        %2726 = vmatmul.mubr.bf16.gmra.mrb[0].mxu0 %v2660
        %v2727 = vpop.f32.mrb[0].mxu0
        %v2728 = vadd.f32 0.0, %v2727
        %v2729 = vpop.f32.mrb[0].mxu0
        %v2730 = vpop.f32.mrb[0].mxu0
        %v2731 = vadd.f32 0.0, %v2730
        %v2732 = vpop.f32.mrb[0].mxu0
        %2733 = vdwg.mxu0
        %v2734 = vpack.c.bf16 %v2707, %v2704
        %v2735 = vpack.c.bf16 %v2715, %v2712
        %v2736 = vpack.c.bf16 %v2723, %v2720
        %v2737 = vpack.c.bf16 %v2731, %v2728
        %v2738 = vld [vmem:[%s13] sm:$0xf]
        %v2739 = vld [vmem:[%s13 + $0x4] sm:$0xf]
        %v2740 = vld [vmem:[%s13 + $0x8] sm:$0xf]
        %v2741 = vld [vmem:[%s13 + $0xc] sm:$0xf]
        %v2742 = vld [vmem:[%s13 + $0x10] sm:$0xf]
        %v2743 = vld [vmem:[%s13 + $0x14] sm:$0xf]
        %v2744 = vld [vmem:[%s13 + $0x18] sm:$0xf]
        %v2745 = vld [vmem:[%s13 + $0x1c] sm:$0xf]
        %v2746 = vld [vmem:[%s13 + $0x20] sm:$0xf]
        %v2747 = vld [vmem:[%s13 + $0x24] sm:$0xf]
        %v2748 = vld [vmem:[%s13 + $0x28] sm:$0xf]
        %v2749 = vld [vmem:[%s13 + $0x2c] sm:$0xf]
        %v2750 = vld [vmem:[%s13 + $0x30] sm:$0xf]
        %v2751 = vld [vmem:[%s13 + $0x34] sm:$0xf]
        %v2752 = vld [vmem:[%s13 + $0x38] sm:$0xf]
        %v2753 = vld [vmem:[%s13 + $0x3c] sm:$0xf]
        %v2754 = vld [vmem:[%s14] sm:$0x1]
        %v2756 = vlaneseq
        %v2757 = vshrl.u32 %v2756, 7
        %v2758 = vsub.s32 0, %v2757
        %v2759 = vrot.slane %v2754, %v2758
        %v2777 = vunpack.c.l.b16 %v2738
        %v2778 = vunpack.c.l.b16 %v2739
        %v2779 = vunpack.c.l.b16 %v2740
        %v2780 = vunpack.c.l.b16 %v2741
        %v2781 = vunpack.c.l.b16 %v2742
        %v2782 = vunpack.c.l.b16 %v2743
        %v2783 = vunpack.c.l.b16 %v2744
        %v2784 = vunpack.c.l.b16 %v2745
        %v2785 = vunpack.c.l.b16 %v2746
        %v2786 = vunpack.c.l.b16 %v2747
        %v2787 = vunpack.c.l.b16 %v2748
        %v2788 = vunpack.c.l.b16 %v2749
        %v2789 = vunpack.c.l.b16 %v2750
        %v2790 = vunpack.c.l.b16 %v2751
        %v2791 = vunpack.c.l.b16 %v2752
        %v2792 = vunpack.c.l.b16 %v2753
        %v2793 = vpack.c.b16 %v2778, %v2777
        %v2794 = vpack.c.b16 %v2780, %v2779
        %v2795 = vpack.c.b16 %v2782, %v2781
        %v2796 = vpack.c.b16 %v2784, %v2783
        %v2797 = vpack.c.b16 %v2786, %v2785
        %v2798 = vpack.c.b16 %v2788, %v2787
        %v2799 = vpack.c.b16 %v2790, %v2789
        %v2800 = vpack.c.b16 %v2792, %v2791
        %2809 = vmatprep.subr.bf16.mxu0 0
        %2810 = vmatpush1.bf16.msra.mxu0 %v2793
        %2811 = vmatprep.subr.bf16.mxu0 0
        %2812 = vmatpush1.bf16.msra.mxu0 %v2794
        %2813 = vmatprep.subr.bf16.mxu0 0
        %2814 = vmatpush1.bf16.msra.mxu0 %v2795
        %2815 = vmatprep.subr.bf16.mxu0 0
        %2816 = vmatpush1.bf16.msra.mxu0 %v2796
        %2817 = vmatprep.subr.bf16.mxu0 0
        %2818 = vmatpush1.bf16.msra.mxu0 %v2797
        %2819 = vmatprep.subr.bf16.mxu0 0
        %2820 = vmatpush1.bf16.msra.mxu0 %v2798
        %2821 = vmatprep.subr.bf16.mxu0 0
        %2822 = vmatpush1.bf16.msra.mxu0 %v2799
        %2823 = vmatprep.subr.bf16.mxu0 0
        %2824 = vmatpush1.bf16.msra.mxu0 %v2800
        %2825 = vmatprep.subr.bf16.mxu0 0
        %2826 = vmatpush1.bf16.msra.mxu0 0
        %2827 = vmatprep.subr.bf16.mxu0 0
        %2828 = vmatpush1.bf16.msra.mxu0 0
        %2829 = vmatprep.subr.bf16.mxu0 0
        %2830 = vmatpush1.bf16.msra.mxu0 0
        %2831 = vmatprep.subr.bf16.mxu0 0
        %2832 = vmatpush1.bf16.msra.mxu0 0
        %2833 = vmatprep.subr.bf16.mxu0 0
        %2834 = vmatpush1.bf16.msra.mxu0 0
        %2835 = vmatprep.subr.bf16.mxu0 0
        %2836 = vmatpush1.bf16.msra.mxu0 0
        %2837 = vmatprep.subr.bf16.mxu0 0
        %2838 = vmatpush1.bf16.msra.mxu0 0
        %2839 = vmatprep.subr.bf16.mxu0 0
        %2840 = vmatpush1.bf16.msra.mxu0 0
        %2841 = vmatprep.mubr.bf16.mxu0 0
        %2842 = vmatmul.mubr.bf16.gmra.mrb[0].mxu0 %v2734
        %v2843 = vpop.f32.mrb[0].mxu0
        %v2844 = vadd.f32 %v2759, %v2843
        %v2845 = vpop.f32.mrb[0].mxu0
        %v2846 = vpop.f32.mrb[0].mxu0
        %v2847 = vadd.f32 %v2759, %v2846
        %v2848 = vpop.f32.mrb[0].mxu0
        %2849 = vmatprep.mubr.bf16.mxu0 0
        %2850 = vmatmul.mubr.bf16.gmra.mrb[0].mxu0 %v2735
        %v2851 = vpop.f32.mrb[0].mxu0
        %v2852 = vadd.f32 %v2759, %v2851
        %v2853 = vpop.f32.mrb[0].mxu0
        %v2854 = vpop.f32.mrb[0].mxu0
        %v2855 = vadd.f32 %v2759, %v2854
        %v2856 = vpop.f32.mrb[0].mxu0
        %2857 = vmatprep.mubr.bf16.mxu0 0
        %2858 = vmatmul.mubr.bf16.gmra.mrb[0].mxu0 %v2736
        %v2859 = vpop.f32.mrb[0].mxu0
        %v2860 = vadd.f32 %v2759, %v2859
        %v2861 = vpop.f32.mrb[0].mxu0
        %v2862 = vpop.f32.mrb[0].mxu0
        %v2863 = vadd.f32 %v2759, %v2862
        %v2864 = vpop.f32.mrb[0].mxu0
        %2865 = vmatprep.mubr.bf16.mxu0 0
        %2866 = vmatmul.mubr.bf16.gmra.mrb[0].mxu0 %v2737
        %v2867 = vpop.f32.mrb[0].mxu0
        %v2868 = vadd.f32 %v2759, %v2867
        %v2869 = vpop.f32.mrb[0].mxu0
        %v2870 = vpop.f32.mrb[0].mxu0
        %v2871 = vadd.f32 %v2759, %v2870
        %v2872 = vpop.f32.mrb[0].mxu0
        %2873 = vdwg.mxu0
        %v2874 = vadd.f32 %v2844, %v1857
        %v2875 = vadd.f32 %v2847, %v1858
        %v2876 = vadd.f32 %v2852, %v1859
        %v2877 = vadd.f32 %v2855, %v1860
        %v2878 = vadd.f32 %v2860, %v1861
        %v2879 = vadd.f32 %v2863, %v1862
        %v2880 = vadd.f32 %v2868, %v1863
        %v2881 = vadd.f32 %v2871, %v1864
        %v2882 = vld [vmem:[%s15] sm:$0x1]
        %2883 = vadd.xlane.f32.xlu0 %v2874
        %v2884 = vpop.xlane.xlu0 %2883
        %2885 = vadd.xlane.f32.xlu0 %v2875
        %v2886 = vpop.xlane.xlu0 %2885
        %2887 = vadd.xlane.f32.xlu0 %v2876
        %v2888 = vpop.xlane.xlu0 %2887
        %2889 = vadd.xlane.f32.xlu0 %v2877
        %v2890 = vpop.xlane.xlu0 %2889
        %2891 = vadd.xlane.f32.xlu0 %v2878
        %v2892 = vpop.xlane.xlu0 %2891
        %2893 = vadd.xlane.f32.xlu0 %v2879
        %v2894 = vpop.xlane.xlu0 %2893
        %2895 = vadd.xlane.f32.xlu0 %v2880
        %v2896 = vpop.xlane.xlu0 %2895
        %2897 = vadd.xlane.f32.xlu0 %v2881
        %v2898 = vpop.xlane.xlu0 %2897
        %v2899 = vmul.f32 %v2884, %v1882
        %v2900 = vmul.f32 %v2886, %v1882
        %v2901 = vmul.f32 %v2888, %v1882
        %v2902 = vmul.f32 %v2890, %v1882
        %v2903 = vmul.f32 %v2892, %v1882
        %v2904 = vmul.f32 %v2894, %v1882
        %v2905 = vmul.f32 %v2896, %v1882
        %v2906 = vmul.f32 %v2898, %v1882
        %v2907 = vsub.f32 %v2874, %v2899
        %v2908 = vsub.f32 %v2875, %v2900
        %v2909 = vsub.f32 %v2876, %v2901
        %v2910 = vsub.f32 %v2877, %v2902
        %v2911 = vsub.f32 %v2878, %v2903
        %v2912 = vsub.f32 %v2879, %v2904
        %v2913 = vsub.f32 %v2880, %v2905
        %v2914 = vsub.f32 %v2881, %v2906
        %v2915 = vmul.f32 %v2907, %v2907
        %v2916 = vmul.f32 %v2908, %v2908
        %v2917 = vmul.f32 %v2909, %v2909
        %v2918 = vmul.f32 %v2910, %v2910
        %v2919 = vmul.f32 %v2911, %v2911
        %v2920 = vmul.f32 %v2912, %v2912
        %v2921 = vmul.f32 %v2913, %v2913
        %v2922 = vmul.f32 %v2914, %v2914
        %2923 = vadd.xlane.f32.xlu0 %v2915
        %v2924 = vpop.xlane.xlu0 %2923
        %2925 = vadd.xlane.f32.xlu0 %v2916
        %v2926 = vpop.xlane.xlu0 %2925
        %2927 = vadd.xlane.f32.xlu0 %v2917
        %v2928 = vpop.xlane.xlu0 %2927
        %2929 = vadd.xlane.f32.xlu0 %v2918
        %v2930 = vpop.xlane.xlu0 %2929
        %2931 = vadd.xlane.f32.xlu0 %v2919
        %v2932 = vpop.xlane.xlu0 %2931
        %2933 = vadd.xlane.f32.xlu0 %v2920
        %v2934 = vpop.xlane.xlu0 %2933
        %2935 = vadd.xlane.f32.xlu0 %v2921
        %v2936 = vpop.xlane.xlu0 %2935
        %2937 = vadd.xlane.f32.xlu0 %v2922
        %v2938 = vpop.xlane.xlu0 %2937
        %v2939 = vmul.f32 %v2924, %v1882
        %v2940 = vmul.f32 %v2926, %v1882
        %v2941 = vmul.f32 %v2928, %v1882
        %v2942 = vmul.f32 %v2930, %v1882
        %v2943 = vmul.f32 %v2932, %v1882
        %v2944 = vmul.f32 %v2934, %v1882
        %v2945 = vmul.f32 %v2936, %v1882
        %v2946 = vmul.f32 %v2938, %v1882
        %v2947 = vadd.f32 %v2939, 1e-05
        %v2948 = vadd.f32 %v2940, 1e-05
        %v2949 = vadd.f32 %v2941, 1e-05
        %v2950 = vadd.f32 %v2942, 1e-05
        %v2951 = vadd.f32 %v2943, 1e-05
        %v2952 = vadd.f32 %v2944, 1e-05
        %v2953 = vadd.f32 %v2945, 1e-05
        %v2954 = vadd.f32 %v2946, 1e-05
        %v2955 = vrsqrt.pop %v2947
        %v2956 = vrsqrt.pop %v2948
        %v2957 = vrsqrt.pop %v2949
        %v2958 = vrsqrt.pop %v2950
        %v2959 = vrsqrt.pop %v2951
        %v2960 = vrsqrt.pop %v2952
        %v2961 = vrsqrt.pop %v2953
        %v2962 = vrsqrt.pop %v2954
        %v2963 = vmul.f32 %v2874, %v2955
        %v2964 = vmul.f32 %v2875, %v2956
        %v2965 = vmul.f32 %v2876, %v2957
        %v2966 = vmul.f32 %v2877, %v2958
        %v2967 = vmul.f32 %v2878, %v2959
        %v2968 = vmul.f32 %v2879, %v2960
        %v2969 = vmul.f32 %v2880, %v2961
        %v2970 = vmul.f32 %v2881, %v2962
        %v2972 = vlaneseq
        %v2973 = vshrl.u32 %v2972, 7
        %v2974 = vsub.s32 0, %v2973
        %v2975 = vrot.slane %v2882, %v2974
        %v2977 = vmul.f32 %v2963, %v2975
        %v2978 = vmul.f32 %v2964, %v2975
        %v2979 = vmul.f32 %v2965, %v2975
        %v2980 = vmul.f32 %v2966, %v2975
        %v2981 = vmul.f32 %v2967, %v2975
        %v2982 = vmul.f32 %v2968, %v2975
        %v2983 = vmul.f32 %v2969, %v2975
        %v2984 = vmul.f32 %v2970, %v2975
        %v2985 = vpack.c.bf16 %v2978, %v2977
        %v2986 = vpack.c.bf16 %v2980, %v2979
        %v2987 = vpack.c.bf16 %v2982, %v2981
        %v2988 = vpack.c.bf16 %v2984, %v2983
        %v2989 = vld [vmem:[%s16] sm:$0xf]
        %v2990 = vld [vmem:[%s16 + $0x4] sm:$0xf]
        %v2991 = vld [vmem:[%s16 + $0x8] sm:$0xf]
        %v2992 = vld [vmem:[%s16 + $0xc] sm:$0xf]
        %v2993 = vld [vmem:[%s16 + $0x10] sm:$0xf]
        %v2994 = vld [vmem:[%s16 + $0x14] sm:$0xf]
        %v2995 = vld [vmem:[%s16 + $0x18] sm:$0xf]
        %v2996 = vld [vmem:[%s16 + $0x1c] sm:$0xf]
        %v2997 = vld [vmem:[%s16 + $0x20] sm:$0xf]
        %v2998 = vld [vmem:[%s16 + $0x24] sm:$0xf]
        %v2999 = vld [vmem:[%s16 + $0x28] sm:$0xf]
        %v3000 = vld [vmem:[%s16 + $0x2c] sm:$0xf]
        %v3001 = vld [vmem:[%s16 + $0x30] sm:$0xf]
        %v3002 = vld [vmem:[%s16 + $0x34] sm:$0xf]
        %v3003 = vld [vmem:[%s16 + $0x38] sm:$0xf]
        %v3004 = vld [vmem:[%s16 + $0x3c] sm:$0xf]
        %v3005 = vld [vmem:[%s17] sm:$0x1]
        %v3007 = vlaneseq
        %v3008 = vshrl.u32 %v3007, 7
        %v3009 = vsub.s32 0, %v3008
        %v3010 = vrot.slane %v3005, %v3009
        %v3028 = vunpack.c.l.b16 %v2989
        %v3029 = vunpack.c.l.b16 %v2990
        %v3030 = vunpack.c.l.b16 %v2991
        %v3031 = vunpack.c.l.b16 %v2992
        %v3032 = vunpack.c.l.b16 %v2993
        %v3033 = vunpack.c.l.b16 %v2994
        %v3034 = vunpack.c.l.b16 %v2995
        %v3035 = vunpack.c.l.b16 %v2996
        %v3036 = vunpack.c.l.b16 %v2997
        %v3037 = vunpack.c.l.b16 %v2998
        %v3038 = vunpack.c.l.b16 %v2999
        %v3039 = vunpack.c.l.b16 %v3000
        %v3040 = vunpack.c.l.b16 %v3001
        %v3041 = vunpack.c.l.b16 %v3002
        %v3042 = vunpack.c.l.b16 %v3003
        %v3043 = vunpack.c.l.b16 %v3004
        %v3044 = vpack.c.b16 %v3029, %v3028
        %v3045 = vpack.c.b16 %v3031, %v3030
        %v3046 = vpack.c.b16 %v3033, %v3032
        %v3047 = vpack.c.b16 %v3035, %v3034
        %v3048 = vpack.c.b16 %v3037, %v3036
        %v3049 = vpack.c.b16 %v3039, %v3038
        %v3050 = vpack.c.b16 %v3041, %v3040
        %v3051 = vpack.c.b16 %v3043, %v3042
        %3060 = vmatprep.subr.bf16.mxu0 0
        %3061 = vmatpush1.bf16.msra.mxu0 %v3044
        %3062 = vmatprep.subr.bf16.mxu0 0
        %3063 = vmatpush1.bf16.msra.mxu0 %v3045
        %3064 = vmatprep.subr.bf16.mxu0 0
        %3065 = vmatpush1.bf16.msra.mxu0 %v3046
        %3066 = vmatprep.subr.bf16.mxu0 0
        %3067 = vmatpush1.bf16.msra.mxu0 %v3047
        %3068 = vmatprep.subr.bf16.mxu0 0
        %3069 = vmatpush1.bf16.msra.mxu0 %v3048
        %3070 = vmatprep.subr.bf16.mxu0 0
        %3071 = vmatpush1.bf16.msra.mxu0 %v3049
        %3072 = vmatprep.subr.bf16.mxu0 0
        %3073 = vmatpush1.bf16.msra.mxu0 %v3050
        %3074 = vmatprep.subr.bf16.mxu0 0
        %3075 = vmatpush1.bf16.msra.mxu0 %v3051
        %3076 = vmatprep.subr.bf16.mxu0 0
        %3077 = vmatpush1.bf16.msra.mxu0 0
        %3078 = vmatprep.subr.bf16.mxu0 0
        %3079 = vmatpush1.bf16.msra.mxu0 0
        %3080 = vmatprep.subr.bf16.mxu0 0
        %3081 = vmatpush1.bf16.msra.mxu0 0
        %3082 = vmatprep.subr.bf16.mxu0 0
        %3083 = vmatpush1.bf16.msra.mxu0 0
        %3084 = vmatprep.subr.bf16.mxu0 0
        %3085 = vmatpush1.bf16.msra.mxu0 0
        %3086 = vmatprep.subr.bf16.mxu0 0
        %3087 = vmatpush1.bf16.msra.mxu0 0
        %3088 = vmatprep.subr.bf16.mxu0 0
        %3089 = vmatpush1.bf16.msra.mxu0 0
        %3090 = vmatprep.subr.bf16.mxu0 0
        %3091 = vmatpush1.bf16.msra.mxu0 0
        %3092 = vmatprep.mubr.bf16.mxu0 0
        %3093 = vmatmul.mubr.bf16.gmra.mrb[0].mxu0 %v2985
        %v3094 = vpop.f32.mrb[0].mxu0
        %v3095 = vadd.f32 %v3010, %v3094
        %v3096 = vpop.f32.mrb[0].mxu0
        %v3097 = vpop.f32.mrb[0].mxu0
        %v3098 = vadd.f32 %v3010, %v3097
        %v3099 = vpop.f32.mrb[0].mxu0
        %3100 = vmatprep.mubr.bf16.mxu0 0
        %3101 = vmatmul.mubr.bf16.gmra.mrb[0].mxu0 %v2986
        %v3102 = vpop.f32.mrb[0].mxu0
        %v3103 = vadd.f32 %v3010, %v3102
        %v3104 = vpop.f32.mrb[0].mxu0
        %v3105 = vpop.f32.mrb[0].mxu0
        %v3106 = vadd.f32 %v3010, %v3105
        %v3107 = vpop.f32.mrb[0].mxu0
        %3108 = vmatprep.mubr.bf16.mxu0 0
        %3109 = vmatmul.mubr.bf16.gmra.mrb[0].mxu0 %v2987
        %v3110 = vpop.f32.mrb[0].mxu0
        %v3111 = vadd.f32 %v3010, %v3110
        %v3112 = vpop.f32.mrb[0].mxu0
        %v3113 = vpop.f32.mrb[0].mxu0
        %v3114 = vadd.f32 %v3010, %v3113
        %v3115 = vpop.f32.mrb[0].mxu0
        %3116 = vmatprep.mubr.bf16.mxu0 0
        %3117 = vmatmul.mubr.bf16.gmra.mrb[0].mxu0 %v2988
        %v3118 = vpop.f32.mrb[0].mxu0
        %v3119 = vadd.f32 %v3010, %v3118
        %v3120 = vpop.f32.mrb[0].mxu0
        %v3121 = vpop.f32.mrb[0].mxu0
        %v3122 = vadd.f32 %v3010, %v3121
        %v3123 = vpop.f32.mrb[0].mxu0
        %3124 = vdwg.mxu0
        %v3125 = vmax.f32 %v3095, 0.0
        %v3126 = vmax.f32 %v3098, 0.0
        %v3127 = vmax.f32 %v3103, 0.0
        %v3128 = vmax.f32 %v3106, 0.0
        %v3129 = vmax.f32 %v3111, 0.0
        %v3130 = vmax.f32 %v3114, 0.0
        %v3131 = vmax.f32 %v3119, 0.0
        %v3132 = vmax.f32 %v3122, 0.0
        %v3133 = vpack.c.bf16 %v3126, %v3125
        %v3134 = vpack.c.bf16 %v3128, %v3127
        %v3135 = vpack.c.bf16 %v3130, %v3129
        %v3136 = vpack.c.bf16 %v3132, %v3131
        %v3137 = vld [vmem:[%s18] sm:$0xf]
        %v3138 = vld [vmem:[%s18 + $0x4] sm:$0xf]
        %v3139 = vld [vmem:[%s18 + $0x8] sm:$0xf]
        %v3140 = vld [vmem:[%s18 + $0xc] sm:$0xf]
        %v3141 = vld [vmem:[%s18 + $0x10] sm:$0xf]
        %v3142 = vld [vmem:[%s18 + $0x14] sm:$0xf]
        %v3143 = vld [vmem:[%s18 + $0x18] sm:$0xf]
        %v3144 = vld [vmem:[%s18 + $0x1c] sm:$0xf]
        %v3145 = vld [vmem:[%s18 + $0x20] sm:$0xf]
        %v3146 = vld [vmem:[%s18 + $0x24] sm:$0xf]
        %v3147 = vld [vmem:[%s18 + $0x28] sm:$0xf]
        %v3148 = vld [vmem:[%s18 + $0x2c] sm:$0xf]
        %v3149 = vld [vmem:[%s18 + $0x30] sm:$0xf]
        %v3150 = vld [vmem:[%s18 + $0x34] sm:$0xf]
        %v3151 = vld [vmem:[%s18 + $0x38] sm:$0xf]
        %v3152 = vld [vmem:[%s18 + $0x3c] sm:$0xf]
        %v3153 = vld [vmem:[%s19] sm:$0x1]
        %v3155 = vlaneseq
        %v3156 = vshrl.u32 %v3155, 7
        %v3157 = vsub.s32 0, %v3156
        %v3158 = vrot.slane %v3153, %v3157
        %v3176 = vunpack.c.l.b16 %v3137
        %v3177 = vunpack.c.l.b16 %v3138
        %v3178 = vunpack.c.l.b16 %v3139
        %v3179 = vunpack.c.l.b16 %v3140
        %v3180 = vunpack.c.l.b16 %v3141
        %v3181 = vunpack.c.l.b16 %v3142
        %v3182 = vunpack.c.l.b16 %v3143
        %v3183 = vunpack.c.l.b16 %v3144
        %v3184 = vunpack.c.l.b16 %v3145
        %v3185 = vunpack.c.l.b16 %v3146
        %v3186 = vunpack.c.l.b16 %v3147
        %v3187 = vunpack.c.l.b16 %v3148
        %v3188 = vunpack.c.l.b16 %v3149
        %v3189 = vunpack.c.l.b16 %v3150
        %v3190 = vunpack.c.l.b16 %v3151
        %v3191 = vunpack.c.l.b16 %v3152
        %v3192 = vpack.c.b16 %v3177, %v3176
        %v3193 = vpack.c.b16 %v3179, %v3178
        %v3194 = vpack.c.b16 %v3181, %v3180
        %v3195 = vpack.c.b16 %v3183, %v3182
        %v3196 = vpack.c.b16 %v3185, %v3184
        %v3197 = vpack.c.b16 %v3187, %v3186
        %v3198 = vpack.c.b16 %v3189, %v3188
        %v3199 = vpack.c.b16 %v3191, %v3190
        %3208 = vmatprep.subr.bf16.mxu0 0
        %3209 = vmatpush1.bf16.msra.mxu0 %v3192
        %3210 = vmatprep.subr.bf16.mxu0 0
        %3211 = vmatpush1.bf16.msra.mxu0 %v3193
        %3212 = vmatprep.subr.bf16.mxu0 0
        %3213 = vmatpush1.bf16.msra.mxu0 %v3194
        %3214 = vmatprep.subr.bf16.mxu0 0
        %3215 = vmatpush1.bf16.msra.mxu0 %v3195
        %3216 = vmatprep.subr.bf16.mxu0 0
        %3217 = vmatpush1.bf16.msra.mxu0 %v3196
        %3218 = vmatprep.subr.bf16.mxu0 0
        %3219 = vmatpush1.bf16.msra.mxu0 %v3197
        %3220 = vmatprep.subr.bf16.mxu0 0
        %3221 = vmatpush1.bf16.msra.mxu0 %v3198
        %3222 = vmatprep.subr.bf16.mxu0 0
        %3223 = vmatpush1.bf16.msra.mxu0 %v3199
        %3224 = vmatprep.subr.bf16.mxu0 0
        %3225 = vmatpush1.bf16.msra.mxu0 0
        %3226 = vmatprep.subr.bf16.mxu0 0
        %3227 = vmatpush1.bf16.msra.mxu0 0
        %3228 = vmatprep.subr.bf16.mxu0 0
        %3229 = vmatpush1.bf16.msra.mxu0 0
        %3230 = vmatprep.subr.bf16.mxu0 0
        %3231 = vmatpush1.bf16.msra.mxu0 0
        %3232 = vmatprep.subr.bf16.mxu0 0
        %3233 = vmatpush1.bf16.msra.mxu0 0
        %3234 = vmatprep.subr.bf16.mxu0 0
        %3235 = vmatpush1.bf16.msra.mxu0 0
        %3236 = vmatprep.subr.bf16.mxu0 0
        %3237 = vmatpush1.bf16.msra.mxu0 0
        %3238 = vmatprep.subr.bf16.mxu0 0
        %3239 = vmatpush1.bf16.msra.mxu0 0
        %3240 = vmatprep.mubr.bf16.mxu0 0
        %3241 = vmatmul.mubr.bf16.gmra.mrb[0].mxu0 %v3133
        %v3242 = vpop.f32.mrb[0].mxu0
        %v3243 = vadd.f32 %v3158, %v3242
        %v3244 = vpop.f32.mrb[0].mxu0
        %v3245 = vpop.f32.mrb[0].mxu0
        %v3246 = vadd.f32 %v3158, %v3245
        %v3247 = vpop.f32.mrb[0].mxu0
        %3248 = vmatprep.mubr.bf16.mxu0 0
        %3249 = vmatmul.mubr.bf16.gmra.mrb[0].mxu0 %v3134
        %v3250 = vpop.f32.mrb[0].mxu0
        %v3251 = vadd.f32 %v3158, %v3250
        %v3252 = vpop.f32.mrb[0].mxu0
        %v3253 = vpop.f32.mrb[0].mxu0
        %v3254 = vadd.f32 %v3158, %v3253
        %v3255 = vpop.f32.mrb[0].mxu0
        %3256 = vmatprep.mubr.bf16.mxu0 0
        %3257 = vmatmul.mubr.bf16.gmra.mrb[0].mxu0 %v3135
        %v3258 = vpop.f32.mrb[0].mxu0
        %v3259 = vadd.f32 %v3158, %v3258
        %v3260 = vpop.f32.mrb[0].mxu0
        %v3261 = vpop.f32.mrb[0].mxu0
        %v3262 = vadd.f32 %v3158, %v3261
        %v3263 = vpop.f32.mrb[0].mxu0
        %3264 = vmatprep.mubr.bf16.mxu0 0
        %3265 = vmatmul.mubr.bf16.gmra.mrb[0].mxu0 %v3136
        %v3266 = vpop.f32.mrb[0].mxu0
        %v3267 = vadd.f32 %v3158, %v3266
        %v3268 = vpop.f32.mrb[0].mxu0
        %v3269 = vpop.f32.mrb[0].mxu0
        %v3270 = vadd.f32 %v3158, %v3269
        %v3271 = vpop.f32.mrb[0].mxu0
        %3272 = vdwg.mxu0
        %v3273 = vadd.f32 %v3243, %v2874
        %v3274 = vadd.f32 %v3246, %v2875
        %v3275 = vadd.f32 %v3251, %v2876
        %v3276 = vadd.f32 %v3254, %v2877
        %v3277 = vadd.f32 %v3259, %v2878
        %v3278 = vadd.f32 %v3262, %v2879
        %v3279 = vadd.f32 %v3267, %v2880
        %v3280 = vadd.f32 %v3270, %v2881
        %3281 = vst [vmem:[%s638] sm:$0xff] %v3273
        %3282 = vst [vmem:[%s638 + $0x8] sm:$0xff] %v3274
        %3283 = vst [vmem:[%s638 + $0x10] sm:$0xff] %v3275
        %3284 = vst [vmem:[%s638 + $0x18] sm:$0xff] %v3276
        %3285 = vst [vmem:[%s638 + $0x20] sm:$0xff] %v3277
        %3286 = vst [vmem:[%s638 + $0x28] sm:$0xff] %v3278
        %3287 = vst [vmem:[%s638 + $0x30] sm:$0xff] %v3279
        %3288 = vst [vmem:[%s638 + $0x38] sm:$0xff] %v3280
        %s3289 = sand.u32 %s473, 1
        %s3290 = scalar_lea.sflag [#allocation4], %s3289
        %s3291 = sand.u32 %s473, 1
        %s3292 = smul.addr %s3291, 64
        %s3293 = scalar_lea.vmem [#allocation3], %s3292
        // Predicated region
        $region101: #{fcb_forward.1} parent=99 // pred_check
          %p3294 = pneg %p483
        $region102: #{fcb_forward.1} parent=99 // pred_check_branch
          %3296 = sbr.rel (%p3294) target = $region104
        $region103: #{fcb_forward.1} parent=99 // pred_region
          %s3298 = ssub.s32 1024, 1024
          %3299 = vsyncadd %s3290, %s3298
          %s3300 = smul.addr %s35, 8
          %s3301 = smul.addr %s3300, 128
          %s3302 = scalar_lea.hbm %s20, %s3301
          %s3303 = sshll.u32 %s3293, 4
          %s3304 = int_to_ptr.vmem [resolvable:$true] %s3303
          %3309 = dma.vmem_to_hbm [thread:$0]  %s3304, 1024, %s3302, %s3290, 128, 128, 8
        $region104: #{fcb_forward.1} parent=99 // pred_fallthru
          _
      $region100: #{fcb_forward.1} parent=5 // pred_fallthru
        _
      %p3310 = scmp.le.s32.totalorder 2, %s30
      // Predicated region
      $region105: #{fcb_forward.1} parent=5 // pred_check
        %p3311 = pneg %p3310
      $region106: #{fcb_forward.1} parent=5 // pred_check_branch
        %3313 = sbr.rel (%p3311) target = $region108
      $region107: #{fcb_forward.1} parent=5 // pred_region
        %s3314 = ssub.s32 %s30, 2
        // Predicated region
        $region109: #{fcb_forward.1} parent=107 // pred_check
          %p3315 = pneg %p489
        $region110: #{fcb_forward.1} parent=107 // pred_check_branch
          %3317 = sbr.rel (%p3315) target = $region112
        $region111: #{fcb_forward.1} parent=107 // pred_region
          %s3318 = sand.u32 %s474, 1
          %s3319 = scalar_lea.sflag [#allocation4], %s3318
          %s3320 = sand.u32 %s474, 1
          %s3321 = smul.addr %s3320, 64
          %s3322 = scalar_lea.vmem [#allocation3], %s3321
          %3323 = dma.done %s3319, 1024
        $region112: #{fcb_forward.1} parent=107 // pred_fallthru
          _
      $region108: #{fcb_forward.1} parent=5 // pred_fallthru
        _
    $region6: #{fcb_forward.1} parent=1 // loop_footer
      %s34 = sadd.s32 1, %s30
    $region7: #{fcb_forward.1} parent=1 // loop_footer_branch
      %29 = sbr.rel target = $region3
    $region8: #{fcb_forward.1} parent=1 // loop_exit
      _
    %3324 = vsyncpa [#allocation4], 1
    %s3325 = scalar_lea.sflag [#allocation4], 1
    %3326 = vsyncpa %s3325, 1

</llo_original>
